<compile_context>
chip_gen: v5e
topology: v5e:2x2
jax: 0.10.0
libtpu: 0.0.40
codegen_flags: <defaults>
</compile_context>

<pallas_src>
import math

import jax
import jax.numpy as jnp
import numpy as np
from jax.experimental import pallas as pl
from jax.experimental.pallas import tpu as pltpu


def _layer_norm(t, gamma, beta, eps=1e-5):
    # PyTorch LayerNorm: biased variance over the last dim, eps inside sqrt.
    mu = jnp.mean(t, axis=-1, keepdims=True)
    var = jnp.mean((t - mu) ** 2, axis=-1, keepdims=True)
    return (t - mu) * jax.lax.rsqrt(var + eps) * gamma + beta


def _make_encoder_block_kernel(num_heads, compute_dtype):
    def kernel(vl_ref,                       # (BB, 1, 1) int32 valid lens
               x_ref,                        # (BB, S, H)
               wq_ref, wk_ref, wv_ref, wo_ref,   # (H, H) each (Wq pre-scaled)
               g1_ref, beta1_ref,            # (1, H) LayerNorm 1
               w1_ref, b1_ref,               # (H, F), (1, F)  FFN dense1
               w2_ref, b2_ref,               # (F, H), (1, H)  FFN dense2
               g2_ref, beta2_ref,            # (1, H) LayerNorm 2
               o_ref,                        # (BB, S, H)
               concat_ref):                  # (BB*S, H) VMEM scratch (head outputs)
        BB, S, H = x_ref.shape
        dh = H // num_heads

        xin = x_ref[...]
        x32 = xin.astype(jnp.float32).reshape(BB * S, H)     # residual / LN path
        xc = xin.astype(compute_dtype).reshape(BB * S, H)    # MXU input path

        # --- QKV projections (use_bias=False); 1/sqrt(dh) folded into Wq ---
        q = jnp.dot(xc, wq_ref[...], preferred_element_type=jnp.float32)
        k = jnp.dot(xc, wk_ref[...], preferred_element_type=jnp.float32)
        v = jnp.dot(xc, wv_ref[...], preferred_element_type=jnp.float32)

        # --- key-validity mask: one vectorized compare shared by all heads ---
        key_pos = jax.lax.broadcasted_iota(jnp.int32, (1, 1, S), 2)   # (1,1,S)
        bias = jnp.where(key_pos < vl_ref[...],
                         jnp.float32(0.0), jnp.float32(-1e6))         # (BB,1,S)

        q3 = q.reshape(BB, S, H).astype(compute_dtype)
        k3 = k.reshape(BB, S, H).astype(compute_dtype)
        v3 = v.reshape(BB, S, H).astype(compute_dtype)

        # --- per-head scaled dot-product attention; head outputs written to a
        #     VMEM scratch at static lane offsets (no lane concatenation) ---
        for h in range(num_heads):
            sl = slice(h * dh, (h + 1) * dh)
            s = jnp.einsum('bqd,bkd->bqk', q3[:, :, sl], k3[:, :, sl],
                           preferred_element_type=jnp.float32)
            s = s + bias
            s = s - jnp.max(s, axis=-1, keepdims=True)
            p = jnp.exp(s)
            p = p * pl.reciprocal(jnp.sum(p, axis=-1, keepdims=True), approx=True)
            # TODO(synk): attention dropout skipped (identity / eval-mode semantics).
            oh = jnp.einsum('bqk,bkd->bqd', p.astype(compute_dtype), v3[:, :, sl],
                            preferred_element_type=jnp.float32)       # (BB,S,dh)
            concat_ref[:, sl] = oh.reshape(BB * S, dh).astype(concat_ref.dtype)

        attn_out = jnp.dot(concat_ref[...], wo_ref[...],
                           preferred_element_type=jnp.float32)

        # --- AddNorm 1 (dropout = identity) ---
        y = _layer_norm(attn_out + x32, g1_ref[...], beta1_ref[...])

        # --- Position-wise FFN ---
        h1 = jnp.maximum(
            jnp.dot(y.astype(compute_dtype), w1_ref[...],
                    preferred_element_type=jnp.float32) + b1_ref[...], 0.0)
        f = jnp.dot(h1.astype(compute_dtype), w2_ref[...],
                    preferred_element_type=jnp.float32) + b2_ref[...]

        # --- AddNorm 2 ---
        out = _layer_norm(f + y, g2_ref[...], beta2_ref[...])
        o_ref[...] = out.reshape(BB, S, H).astype(o_ref.dtype)

    return kernel


def _pick_block_b(batch, seq, target_rows=1024, min_steps=4):
    """Pick batches-per-grid-step BB.

    Prefers BB*seq up to ~target_rows (big, lane-/MXU-friendly M and large DMA
    tiles) while keeping >= min_steps grid steps for software pipelining and an
    even step count (v7x: 'parallel' axis shards over the 2 TensorCores).
    Falls back gracefully for tiny batches.
    """
    divisors = [d for d in range(1, batch + 1) if batch % d == 0]

    def feasible(bb, need_steps, need_even):
        nb = batch // bb
        if bb > 1 and bb * seq > target_rows:
            return False
        if nb < need_steps:
            return False
        if need_even and nb % 2 != 0:
            return False
        return True

    for need_steps, need_even in ((min_steps, True), (min_steps, False),
                                  (2, True), (2, False), (1, False)):
        cands = [d for d in divisors if feasible(d, need_steps, need_even)]
        if cands:
            return max(cands)
    return 1


def prepare_params(params, num_heads, compute_dtype=jnp.bfloat16):
    """Cast/scale weights ONCE (call outside the per-step wrapper and reuse).

    * Matmul weights -> compute_dtype (bf16 default: MXU-native on v5e/v6e/v7x,
      halves resident weight VMEM).  Accumulation stays f32 in the kernel.
    * 1/sqrt(dh) softmax scale folded into Wq (Wq only feeds the scores).
    * LayerNorm params / FFN biases stay f32.
    """
    H = params['wq'].shape[0]
    dh = H // num_heads
    scale = jnp.float32(1.0 / math.sqrt(dh))
    f32 = jnp.float32
    return {
        'wq': (params['wq'].astype(f32) * scale).astype(compute_dtype),
        'wk': params['wk'].astype(compute_dtype),
        'wv': params['wv'].astype(compute_dtype),
        'wo': params['wo'].astype(compute_dtype),
        'w1': params['w1'].astype(compute_dtype),
        'w2': params['w2'].astype(compute_dtype),
        'g1': params['g1'].astype(f32), 'beta1': params['beta1'].astype(f32),
        'b1': params['b1'].astype(f32), 'b2': params['b2'].astype(f32),
        'g2': params['g2'].astype(f32), 'beta2': params['beta2'].astype(f32),
    }


def encoder_block_pallas(x, valid_lens, prepared, num_heads):
    """x: (B, S, H) float, valid_lens: (B,) int, prepared: prepare_params(...)."""
    B, S, H = x.shape
    F = prepared['w1'].shape[1]
    assert H % num_heads == 0
    compute_dtype = prepared['wq'].dtype

    BB = _pick_block_b(B, S)
    nb = B // BB

    vl3 = valid_lens.astype(jnp.int32).reshape(B, 1, 1)
    kernel = _make_encoder_block_kernel(num_heads, compute_dtype)

    # --- explicit VMEM budget (floor 32 MiB, cap 64 MiB: safe on v5e/v6e/v7x) ---
    w_item = jnp.dtype(compute_dtype).itemsize
    x_item = jnp.dtype(x.dtype).itemsize
    weight_bytes = (4 * H * H + 2 * H * F) * w_item
    io_bytes = 2 * 2 * BB * S * H * x_item                     # double-buffered x + o tiles
    inter_bytes = (BB * S * (4 * H + F) * 4                    # q,k,v,h1,y intermediates
                   + 2 * BB * S * S * 4                        # scores / probs
                   + BB * S * H * w_item)                      # concat scratch
    est = int((2 * weight_bytes + io_bytes + inter_bytes) * 1.5)
    vmem_limit = min(64 * 1024 * 1024, max(32 * 1024 * 1024, est))

    # --- advisory cost estimate for XLA scheduling around the custom call ---
    flops = 8 * B * S * H * H + 4 * B * S * S * H + 4 * B * S * H * F
    transcendentals = B * num_heads * S * S + 2 * B * S
    bytes_accessed = 2 * B * S * H * x_item + weight_bytes + (6 * H + F) * 4 + B * 4
    cost = pl.CostEstimate(flops=flops, transcendentals=transcendentals,
                           bytes_accessed=bytes_accessed)

    def run(weight_mode):
        def inv_spec(shape):
            # Grid-invariant block (weights / norm params): constant index map.
            if weight_mode is None:
                return pl.BlockSpec(shape, lambda b: (0, 0))
            return pl.BlockSpec(shape, lambda b: (0, 0), pipeline_mode=weight_mode)

        in_specs = [
            pl.BlockSpec((BB, 1, 1), lambda b: (b, 0, 0)),     # valid_lens
            pl.BlockSpec((BB, S, H), lambda b: (b, 0, 0)),     # x (BB batches/step)
            inv_spec((H, H)), inv_spec((H, H)),                # Wq, Wk
            inv_spec((H, H)), inv_spec((H, H)),                # Wv, Wo
            inv_spec((1, H)), inv_spec((1, H)),                # ln1 gamma, beta
            inv_spec((H, F)), inv_spec((1, F)),                # ffn W1, b1
            inv_spec((F, H)), inv_spec((1, H)),                # ffn W2, b2
            inv_spec((1, H)), inv_spec((1, H)),                # ln2 gamma, beta
        ]
        out_spec = pl.BlockSpec((BB, S, H), lambda b: (b, 0, 0))

        grid_spec = pltpu.PrefetchScalarGridSpec(
            num_scalar_prefetch=0,
            grid=(nb,),
            in_specs=in_specs,
            out_specs=out_spec,
            scratch_shapes=[pltpu.VMEM((BB * S, H), compute_dtype)],
        )

        fn = pl.pallas_call(
            kernel,
            out_shape=jax.ShapeDtypeStruct((B, S, H), x.dtype),
            grid_spec=grid_spec,
            compiler_params=pltpu.CompilerParams(
                dimension_semantics=("parallel",),     # v7x: shard batch blocks over 2 TCs
                vmem_limit_bytes=vmem_limit),
            cost_estimate=cost,
        )
        return fn(vl3, x,
                  prepared['wq'], prepared['wk'], prepared['wv'], prepared['wo'],
                  prepared['g1'], prepared['beta1'],
                  prepared['w1'], prepared['b1'],
                  prepared['w2'], prepared['b2'],
                  prepared['g2'], prepared['beta2'])

    try:
        # Single-buffer the grid-invariant weights (they are fetched once); halves
        # their resident VMEM footprint — the v7x (64 MiB) enabler at real H/F.
        return run(pl.Buffered(1))
    except Exception:
        # Fallback: some builds don't honor pipeline_mode on this path; default
        # double-buffering is still correct (just uses more VMEM).
        return run(None)


def encoder_block_ref(x, valid_lens, params, num_heads):
    """Pure-JAX reference mirroring the PyTorch forward (eval mode, f32)."""
    B, S, H = x.shape
    dh = H // num_heads
    q = x @ params['wq']
    k = x @ params['wk']
    v = x @ params['wv']

    def split(t):  # (B, S, H) -> (B, nh, S, dh)
        return t.reshape(B, S, num_heads, dh).transpose(0, 2, 1, 3)

    qh, kh, vh = split(q), split(k), split(v)
    scores = jnp.einsum('bhqd,bhkd->bhqk', qh, kh) / math.sqrt(dh)
    key_ids = jnp.arange(S)[None, None, None, :]
    mask = key_ids < valid_lens[:, None, None, None]
    scores = jnp.where(mask, scores, -1e6)
    p = jax.nn.softmax(scores, axis=-1)
    attn = jnp.einsum('bhqk,bhkd->bhqd', p, vh)
    concat = attn.transpose(0, 2, 1, 3).reshape(B, S, H)
    attn_out = concat @ params['wo']

    y = _layer_norm(attn_out + x, params['g1'], params['beta1'])
    f = jnp.maximum(y @ params['w1'] + params['b1'], 0.0) @ params['w2'] + params['b2']
    return _layer_norm(f + y, params['g2'], params['beta2'])


def init_params(key, H, F):
    ks = jax.random.split(key, 8)
    scale = 0.1
    return {
        'wq': scale * jax.random.normal(ks[0], (H, H), jnp.float32),
        'wk': scale * jax.random.normal(ks[1], (H, H), jnp.float32),
        'wv': scale * jax.random.normal(ks[2], (H, H), jnp.float32),
        'wo': scale * jax.random.normal(ks[3], (H, H), jnp.float32),
        'g1': jnp.ones((1, H), jnp.float32),
        'beta1': jnp.zeros((1, H), jnp.float32),
        'w1': scale * jax.random.normal(ks[4], (H, F), jnp.float32),
        'b1': scale * jax.random.normal(ks[5], (1, F), jnp.float32),
        'w2': scale * jax.random.normal(ks[6], (F, H), jnp.float32),
        'b2': scale * jax.random.normal(ks[7], (1, H), jnp.float32),
        'g2': jnp.ones((1, H), jnp.float32),
        'beta2': jnp.zeros((1, H), jnp.float32),
    }


if __name__ == "__main__":
    # Small shapes consistent with the module: batch=2, seq=8, hidden=32,
    # heads=4, ffn_hidden=64, norm_shape=[32], valid_lens=[3,2].
    B, S, H, NH, F = 2, 8, 32, 4, 64
    key = jax.random.PRNGKey(0)
    kx, kp = jax.random.split(key)
    x = jax.random.normal(kx, (B, S, H), jnp.float32)
    valid_lens = jnp.array([3, 2], dtype=jnp.int32)
    params = init_params(kp, H, F)

    ref = encoder_block_ref(x, valid_lens, params, NH)

    # Default path: bf16 MXU inputs (all TPU generations), f32 accumulate /
    # LayerNorm / softmax.  Weights cast+scaled ONCE and reused.
    prep_bf16 = prepare_params(params, NH, jnp.bfloat16)
    out_bf16 = jax.block_until_ready(encoder_block_pallas(x, valid_lens, prep_bf16, NH))
    np.testing.assert_allclose(np.asarray(out_bf16), np.asarray(ref),
                               rtol=5e-2, atol=5e-2)

    # Full-f32 matmul path (tight tolerance; only the approximate softmax
    # reciprocal differs from the reference).
    prep_f32 = prepare_params(params, NH, jnp.float32)
    out_f32 = jax.block_until_ready(encoder_block_pallas(x, valid_lens, prep_f32, NH))
    np.testing.assert_allclose(np.asarray(out_f32), np.asarray(ref),
                               rtol=5e-3, atol=5e-3)

    print("KERNEL_OK")
</pallas_src>

<mosaic_0001>
module attributes {stable_mosaic.version = 11 : i64} {
  func.func @kernel(%arg0: i32, %arg1: memref<1x1x1xi32, #tpu.memory_space<vmem>>, %arg2: memref<1x8x32xf32, #tpu.memory_space<vmem>>, %arg3: memref<32x32xbf16, #tpu.memory_space<vmem>>, %arg4: memref<32x32xbf16, #tpu.memory_space<vmem>>, %arg5: memref<32x32xbf16, #tpu.memory_space<vmem>>, %arg6: memref<32x32xbf16, #tpu.memory_space<vmem>>, %arg7: memref<1x32xf32, #tpu.memory_space<vmem>>, %arg8: memref<1x32xf32, #tpu.memory_space<vmem>>, %arg9: memref<32x64xbf16, #tpu.memory_space<vmem>>, %arg10: memref<1x64xf32, #tpu.memory_space<vmem>>, %arg11: memref<64x32xbf16, #tpu.memory_space<vmem>>, %arg12: memref<1x32xf32, #tpu.memory_space<vmem>>, %arg13: memref<1x32xf32, #tpu.memory_space<vmem>>, %arg14: memref<1x32xf32, #tpu.memory_space<vmem>>, %arg15: memref<1x8x32xf32, #tpu.memory_space<vmem>>, %arg16: memref<8x32xbf16, #tpu.memory_space<vmem>>) attributes {dimension_semantics = [#tpu.dimension_semantics<parallel>], iteration_bounds = array<i64: 2>, scalar_prefetch = 0 : i64, scratch_operands = 1 : i64, tpu.core_type = #tpu.core_type<tc>, window_params = [{transform_indices = @transform_0, window_bounds = array<i64: 1, 1, 1>}, {transform_indices = @transform_1, window_bounds = array<i64: 1, 8, 32>}, {pipeline_mode = #tpu.pipeline_mode<synchronous>, transform_indices = @transform_2, window_bounds = array<i64: 32, 32>}, {pipeline_mode = #tpu.pipeline_mode<synchronous>, transform_indices = @transform_3, window_bounds = array<i64: 32, 32>}, {pipeline_mode = #tpu.pipeline_mode<synchronous>, transform_indices = @transform_4, window_bounds = array<i64: 32, 32>}, {pipeline_mode = #tpu.pipeline_mode<synchronous>, transform_indices = @transform_5, window_bounds = array<i64: 32, 32>}, {pipeline_mode = #tpu.pipeline_mode<synchronous>, transform_indices = @transform_6, window_bounds = array<i64: 1, 32>}, {pipeline_mode = #tpu.pipeline_mode<synchronous>, transform_indices = @transform_7, window_bounds = array<i64: 1, 32>}, {pipeline_mode = #tpu.pipeline_mode<synchronous>, transform_indices = @transform_8, window_bounds = array<i64: 32, 64>}, {pipeline_mode = #tpu.pipeline_mode<synchronous>, transform_indices = @transform_9, window_bounds = array<i64: 1, 64>}, {pipeline_mode = #tpu.pipeline_mode<synchronous>, transform_indices = @transform_10, window_bounds = array<i64: 64, 32>}, {pipeline_mode = #tpu.pipeline_mode<synchronous>, transform_indices = @transform_11, window_bounds = array<i64: 1, 32>}, {pipeline_mode = #tpu.pipeline_mode<synchronous>, transform_indices = @transform_12, window_bounds = array<i64: 1, 32>}, {pipeline_mode = #tpu.pipeline_mode<synchronous>, transform_indices = @transform_13, window_bounds = array<i64: 1, 32>}, {transform_indices = @transform_14, window_bounds = array<i64: 1, 8, 32>}]} {
    %c0 = arith.constant 0 : index
    %c0_0 = arith.constant 0 : index
    %c0_1 = arith.constant 0 : index
    %0 = vector.load %arg2[%c0, %c0_0, %c0_1] : memref<1x8x32xf32, #tpu.memory_space<vmem>>, vector<1x8x32xf32>
    %1 = vector.shape_cast %0 : vector<1x8x32xf32> to vector<8x32xf32>
    %2 = arith.truncf %0 : vector<1x8x32xf32> to vector<1x8x32xbf16>
    %3 = vector.shape_cast %2 : vector<1x8x32xbf16> to vector<8x32xbf16>
    %c0_2 = arith.constant 0 : index
    %c0_3 = arith.constant 0 : index
    %4 = vector.load %arg3[%c0_2, %c0_3] : memref<32x32xbf16, #tpu.memory_space<vmem>>, vector<32x32xbf16>
    %cst = arith.constant dense<0.000000e+00> : vector<8x32xf32>
    %5 = tpu.matmul %3, %4, %cst {dimension_numbers = #tpu.dot_dimension_numbers<[1], [0], [0], [1], [0, 0, 1, 1], [], []>} : vector<8x32xbf16>, vector<32x32xbf16>, vector<8x32xf32> -> vector<8x32xf32>
    %c0_4 = arith.constant 0 : index
    %c0_5 = arith.constant 0 : index
    %6 = vector.load %arg4[%c0_4, %c0_5] : memref<32x32xbf16, #tpu.memory_space<vmem>>, vector<32x32xbf16>
    %cst_6 = arith.constant dense<0.000000e+00> : vector<8x32xf32>
    %7 = tpu.matmul %3, %6, %cst_6 {dimension_numbers = #tpu.dot_dimension_numbers<[1], [0], [0], [1], [0, 0, 1, 1], [], []>} : vector<8x32xbf16>, vector<32x32xbf16>, vector<8x32xf32> -> vector<8x32xf32>
    %c0_7 = arith.constant 0 : index
    %c0_8 = arith.constant 0 : index
    %8 = vector.load %arg5[%c0_7, %c0_8] : memref<32x32xbf16, #tpu.memory_space<vmem>>, vector<32x32xbf16>
    %cst_9 = arith.constant dense<0.000000e+00> : vector<8x32xf32>
    %9 = tpu.matmul %3, %8, %cst_9 {dimension_numbers = #tpu.dot_dimension_numbers<[1], [0], [0], [1], [0, 0, 1, 1], [], []>} : vector<8x32xbf16>, vector<32x32xbf16>, vector<8x32xf32> -> vector<8x32xf32>
    %10 = tpu.iota {dimensions = array<i32: 2>} : vector<1x1x8xi32>
    %c0_10 = arith.constant 0 : index
    %c0_11 = arith.constant 0 : index
    %c0_12 = arith.constant 0 : index
    %11 = vector.load %arg1[%c0_10, %c0_11, %c0_12] : memref<1x1x1xi32, #tpu.memory_space<vmem>>, vector<1x1x1xi32>
    %12 = vector.broadcast %11 : vector<1x1x1xi32> to vector<1x1x8xi32>
    %13 = arith.cmpi slt, %10, %12 : vector<1x1x8xi32>
    %cst_13 = arith.constant 0.000000e+00 : f32
    %cst_14 = arith.constant -1.000000e+06 : f32
    %14 = vector.broadcast %cst_13 : f32 to vector<1x1x8xf32>
    %15 = vector.broadcast %cst_14 : f32 to vector<1x1x8xf32>
    %16 = arith.select %13, %14, %15 : vector<1x1x8xi1>, vector<1x1x8xf32>
    %17 = vector.shape_cast %5 : vector<8x32xf32> to vector<1x8x32xf32>
    %18 = arith.truncf %17 : vector<1x8x32xf32> to vector<1x8x32xbf16>
    %19 = vector.shape_cast %7 : vector<8x32xf32> to vector<1x8x32xf32>
    %20 = arith.truncf %19 : vector<1x8x32xf32> to vector<1x8x32xbf16>
    %21 = vector.shape_cast %9 : vector<8x32xf32> to vector<1x8x32xf32>
    %22 = arith.truncf %21 : vector<1x8x32xf32> to vector<1x8x32xbf16>
    %23 = vector.extract_strided_slice %18 {offsets = [0, 0, 0], sizes = [1, 8, 8], strides = [1, 1, 1]} : vector<1x8x32xbf16> to vector<1x8x8xbf16>
    %24 = vector.extract_strided_slice %20 {offsets = [0, 0, 0], sizes = [1, 8, 8], strides = [1, 1, 1]} : vector<1x8x32xbf16> to vector<1x8x8xbf16>
    "tpu.trace_start"() <{level = 10 : i32, message = "bqd,bkd->bqk"}> : () -> ()
    %cst_15 = arith.constant dense<0.000000e+00> : vector<1x8x8xf32>
    %25 = tpu.matmul %23, %24, %cst_15 {dimension_numbers = #tpu.dot_dimension_numbers<[2], [2], [1], [1], [0, 0, 0, 1, 1, 1], [0], [0]>} : vector<1x8x8xbf16>, vector<1x8x8xbf16>, vector<1x8x8xf32> -> vector<1x8x8xf32>
    "tpu.trace_stop"() : () -> ()
    %26 = vector.broadcast %16 : vector<1x1x8xf32> to vector<1x8x8xf32>
    %27 = arith.addf %25, %26 : vector<1x8x8xf32>
    %cst_16 = arith.constant dense<0xFF800000> : vector<1x8xf32>
    %28 = vector.multi_reduction <maximumf>, %27, %cst_16 [2] : vector<1x8x8xf32> to vector<1x8xf32>
    %29 = vector.shape_cast %28 : vector<1x8xf32> to vector<1x8x1xf32>
    %30 = vector.broadcast %29 : vector<1x8x1xf32> to vector<1x8x8xf32>
    %31 = arith.subf %27, %30 : vector<1x8x8xf32>
    %32 = math.exp %31 : vector<1x8x8xf32>
    %cst_17 = arith.constant dense<0.000000e+00> : vector<1x8xf32>
    %33 = vector.multi_reduction <add>, %32, %cst_17 [2] : vector<1x8x8xf32> to vector<1x8xf32>
    %34 = vector.shape_cast %33 : vector<1x8xf32> to vector<1x8x1xf32>
    %35 = tpu.reciprocal %34 {approx = true} : vector<1x8x1xf32> -> vector<1x8x1xf32>
    %36 = vector.broadcast %35 : vector<1x8x1xf32> to vector<1x8x8xf32>
    %37 = arith.mulf %32, %36 : vector<1x8x8xf32>
    %38 = arith.truncf %37 : vector<1x8x8xf32> to vector<1x8x8xbf16>
    %39 = vector.extract_strided_slice %22 {offsets = [0, 0, 0], sizes = [1, 8, 8], strides = [1, 1, 1]} : vector<1x8x32xbf16> to vector<1x8x8xbf16>
    "tpu.trace_start"() <{level = 10 : i32, message = "bqk,bkd->bqd"}> : () -> ()
    %cst_18 = arith.constant dense<0.000000e+00> : vector<1x8x8xf32>
    %40 = tpu.matmul %38, %39, %cst_18 {dimension_numbers = #tpu.dot_dimension_numbers<[2], [1], [1], [2], [0, 0, 0, 1, 1, 2], [0], [0]>} : vector<1x8x8xbf16>, vector<1x8x8xbf16>, vector<1x8x8xf32> -> vector<1x8x8xf32>
    "tpu.trace_stop"() : () -> ()
    %41 = vector.shape_cast %40 : vector<1x8x8xf32> to vector<8x8xf32>
    %42 = arith.truncf %41 : vector<8x8xf32> to vector<8x8xbf16>
    %c0_19 = arith.constant 0 : index
    %c0_20 = arith.constant 0 : index
    %43 = vector.load %arg16[%c0_19, %c0_20] : memref<8x32xbf16, #tpu.memory_space<vmem>>, vector<8x8xbf16>
    tpu.vector_store %arg16[%c0_19, %c0_20], %42 {strides = array<i32>} : memref<8x32xbf16, #tpu.memory_space<vmem>>, vector<8x8xbf16>,
    %44 = vector.extract_strided_slice %18 {offsets = [0, 0, 8], sizes = [1, 8, 8], strides = [1, 1, 1]} : vector<1x8x32xbf16> to vector<1x8x8xbf16>
    %45 = vector.extract_strided_slice %20 {offsets = [0, 0, 8], sizes = [1, 8, 8], strides = [1, 1, 1]} : vector<1x8x32xbf16> to vector<1x8x8xbf16>
    "tpu.trace_start"() <{level = 10 : i32, message = "bqd,bkd->bqk"}> : () -> ()
    %cst_21 = arith.constant dense<0.000000e+00> : vector<1x8x8xf32>
    %46 = tpu.matmul %44, %45, %cst_21 {dimension_numbers = #tpu.dot_dimension_numbers<[2], [2], [1], [1], [0, 0, 0, 1, 1, 1], [0], [0]>} : vector<1x8x8xbf16>, vector<1x8x8xbf16>, vector<1x8x8xf32> -> vector<1x8x8xf32>
    "tpu.trace_stop"() : () -> ()
    %47 = vector.broadcast %16 : vector<1x1x8xf32> to vector<1x8x8xf32>
    %48 = arith.addf %46, %47 : vector<1x8x8xf32>
    %cst_22 = arith.constant dense<0xFF800000> : vector<1x8xf32>
    %49 = vector.multi_reduction <maximumf>, %48, %cst_22 [2] : vector<1x8x8xf32> to vector<1x8xf32>
    %50 = vector.shape_cast %49 : vector<1x8xf32> to vector<1x8x1xf32>
    %51 = vector.broadcast %50 : vector<1x8x1xf32> to vector<1x8x8xf32>
    %52 = arith.subf %48, %51 : vector<1x8x8xf32>
    %53 = math.exp %52 : vector<1x8x8xf32>
    %cst_23 = arith.constant dense<0.000000e+00> : vector<1x8xf32>
    %54 = vector.multi_reduction <add>, %53, %cst_23 [2] : vector<1x8x8xf32> to vector<1x8xf32>
    %55 = vector.shape_cast %54 : vector<1x8xf32> to vector<1x8x1xf32>
    %56 = tpu.reciprocal %55 {approx = true} : vector<1x8x1xf32> -> vector<1x8x1xf32>
    %57 = vector.broadcast %56 : vector<1x8x1xf32> to vector<1x8x8xf32>
    %58 = arith.mulf %53, %57 : vector<1x8x8xf32>
    %59 = arith.truncf %58 : vector<1x8x8xf32> to vector<1x8x8xbf16>
    %60 = vector.extract_strided_slice %22 {offsets = [0, 0, 8], sizes = [1, 8, 8], strides = [1, 1, 1]} : vector<1x8x32xbf16> to vector<1x8x8xbf16>
    "tpu.trace_start"() <{level = 10 : i32, message = "bqk,bkd->bqd"}> : () -> ()
    %cst_24 = arith.constant dense<0.000000e+00> : vector<1x8x8xf32>
    %61 = tpu.matmul %59, %60, %cst_24 {dimension_numbers = #tpu.dot_dimension_numbers<[2], [1], [1], [2], [0, 0, 0, 1, 1, 2], [0], [0]>} : vector<1x8x8xbf16>, vector<1x8x8xbf16>, vector<1x8x8xf32> -> vector<1x8x8xf32>
    "tpu.trace_stop"() : () -> ()
    %62 = vector.shape_cast %61 : vector<1x8x8xf32> to vector<8x8xf32>
    %63 = arith.truncf %62 : vector<8x8xf32> to vector<8x8xbf16>
    %c0_25 = arith.constant 0 : index
    %c8 = arith.constant 8 : index
    %64 = vector.load %arg16[%c0_25, %c8] : memref<8x32xbf16, #tpu.memory_space<vmem>>, vector<8x8xbf16>
    tpu.vector_store %arg16[%c0_25, %c8], %63 {strides = array<i32>} : memref<8x32xbf16, #tpu.memory_space<vmem>>, vector<8x8xbf16>,
    %65 = vector.extract_strided_slice %18 {offsets = [0, 0, 16], sizes = [1, 8, 8], strides = [1, 1, 1]} : vector<1x8x32xbf16> to vector<1x8x8xbf16>
    %66 = vector.extract_strided_slice %20 {offsets = [0, 0, 16], sizes = [1, 8, 8], strides = [1, 1, 1]} : vector<1x8x32xbf16> to vector<1x8x8xbf16>
    "tpu.trace_start"() <{level = 10 : i32, message = "bqd,bkd->bqk"}> : () -> ()
    %cst_26 = arith.constant dense<0.000000e+00> : vector<1x8x8xf32>
    %67 = tpu.matmul %65, %66, %cst_26 {dimension_numbers = #tpu.dot_dimension_numbers<[2], [2], [1], [1], [0, 0, 0, 1, 1, 1], [0], [0]>} : vector<1x8x8xbf16>, vector<1x8x8xbf16>, vector<1x8x8xf32> -> vector<1x8x8xf32>
    "tpu.trace_stop"() : () -> ()
    %68 = vector.broadcast %16 : vector<1x1x8xf32> to vector<1x8x8xf32>
    %69 = arith.addf %67, %68 : vector<1x8x8xf32>
    %cst_27 = arith.constant dense<0xFF800000> : vector<1x8xf32>
    %70 = vector.multi_reduction <maximumf>, %69, %cst_27 [2] : vector<1x8x8xf32> to vector<1x8xf32>
    %71 = vector.shape_cast %70 : vector<1x8xf32> to vector<1x8x1xf32>
    %72 = vector.broadcast %71 : vector<1x8x1xf32> to vector<1x8x8xf32>
    %73 = arith.subf %69, %72 : vector<1x8x8xf32>
    %74 = math.exp %73 : vector<1x8x8xf32>
    %cst_28 = arith.constant dense<0.000000e+00> : vector<1x8xf32>
    %75 = vector.multi_reduction <add>, %74, %cst_28 [2] : vector<1x8x8xf32> to vector<1x8xf32>
    %76 = vector.shape_cast %75 : vector<1x8xf32> to vector<1x8x1xf32>
    %77 = tpu.reciprocal %76 {approx = true} : vector<1x8x1xf32> -> vector<1x8x1xf32>
    %78 = vector.broadcast %77 : vector<1x8x1xf32> to vector<1x8x8xf32>
    %79 = arith.mulf %74, %78 : vector<1x8x8xf32>
    %80 = arith.truncf %79 : vector<1x8x8xf32> to vector<1x8x8xbf16>
    %81 = vector.extract_strided_slice %22 {offsets = [0, 0, 16], sizes = [1, 8, 8], strides = [1, 1, 1]} : vector<1x8x32xbf16> to vector<1x8x8xbf16>
    "tpu.trace_start"() <{level = 10 : i32, message = "bqk,bkd->bqd"}> : () -> ()
    %cst_29 = arith.constant dense<0.000000e+00> : vector<1x8x8xf32>
    %82 = tpu.matmul %80, %81, %cst_29 {dimension_numbers = #tpu.dot_dimension_numbers<[2], [1], [1], [2], [0, 0, 0, 1, 1, 2], [0], [0]>} : vector<1x8x8xbf16>, vector<1x8x8xbf16>, vector<1x8x8xf32> -> vector<1x8x8xf32>
    "tpu.trace_stop"() : () -> ()
    %83 = vector.shape_cast %82 : vector<1x8x8xf32> to vector<8x8xf32>
    %84 = arith.truncf %83 : vector<8x8xf32> to vector<8x8xbf16>
    %c0_30 = arith.constant 0 : index
    %c16 = arith.constant 16 : index
    %85 = vector.load %arg16[%c0_30, %c16] : memref<8x32xbf16, #tpu.memory_space<vmem>>, vector<8x8xbf16>
    tpu.vector_store %arg16[%c0_30, %c16], %84 {strides = array<i32>} : memref<8x32xbf16, #tpu.memory_space<vmem>>, vector<8x8xbf16>,
    %86 = vector.extract_strided_slice %18 {offsets = [0, 0, 24], sizes = [1, 8, 8], strides = [1, 1, 1]} : vector<1x8x32xbf16> to vector<1x8x8xbf16>
    %87 = vector.extract_strided_slice %20 {offsets = [0, 0, 24], sizes = [1, 8, 8], strides = [1, 1, 1]} : vector<1x8x32xbf16> to vector<1x8x8xbf16>
    "tpu.trace_start"() <{level = 10 : i32, message = "bqd,bkd->bqk"}> : () -> ()
    %cst_31 = arith.constant dense<0.000000e+00> : vector<1x8x8xf32>
    %88 = tpu.matmul %86, %87, %cst_31 {dimension_numbers = #tpu.dot_dimension_numbers<[2], [2], [1], [1], [0, 0, 0, 1, 1, 1], [0], [0]>} : vector<1x8x8xbf16>, vector<1x8x8xbf16>, vector<1x8x8xf32> -> vector<1x8x8xf32>
    "tpu.trace_stop"() : () -> ()
    %89 = vector.broadcast %16 : vector<1x1x8xf32> to vector<1x8x8xf32>
    %90 = arith.addf %88, %89 : vector<1x8x8xf32>
    %cst_32 = arith.constant dense<0xFF800000> : vector<1x8xf32>
    %91 = vector.multi_reduction <maximumf>, %90, %cst_32 [2] : vector<1x8x8xf32> to vector<1x8xf32>
    %92 = vector.shape_cast %91 : vector<1x8xf32> to vector<1x8x1xf32>
    %93 = vector.broadcast %92 : vector<1x8x1xf32> to vector<1x8x8xf32>
    %94 = arith.subf %90, %93 : vector<1x8x8xf32>
    %95 = math.exp %94 : vector<1x8x8xf32>
    %cst_33 = arith.constant dense<0.000000e+00> : vector<1x8xf32>
    %96 = vector.multi_reduction <add>, %95, %cst_33 [2] : vector<1x8x8xf32> to vector<1x8xf32>
    %97 = vector.shape_cast %96 : vector<1x8xf32> to vector<1x8x1xf32>
    %98 = tpu.reciprocal %97 {approx = true} : vector<1x8x1xf32> -> vector<1x8x1xf32>
    %99 = vector.broadcast %98 : vector<1x8x1xf32> to vector<1x8x8xf32>
    %100 = arith.mulf %95, %99 : vector<1x8x8xf32>
    %101 = arith.truncf %100 : vector<1x8x8xf32> to vector<1x8x8xbf16>
    %102 = vector.extract_strided_slice %22 {offsets = [0, 0, 24], sizes = [1, 8, 8], strides = [1, 1, 1]} : vector<1x8x32xbf16> to vector<1x8x8xbf16>
    "tpu.trace_start"() <{level = 10 : i32, message = "bqk,bkd->bqd"}> : () -> ()
    %cst_34 = arith.constant dense<0.000000e+00> : vector<1x8x8xf32>
    %103 = tpu.matmul %101, %102, %cst_34 {dimension_numbers = #tpu.dot_dimension_numbers<[2], [1], [1], [2], [0, 0, 0, 1, 1, 2], [0], [0]>} : vector<1x8x8xbf16>, vector<1x8x8xbf16>, vector<1x8x8xf32> -> vector<1x8x8xf32>
    "tpu.trace_stop"() : () -> ()
    %104 = vector.shape_cast %103 : vector<1x8x8xf32> to vector<8x8xf32>
    %105 = arith.truncf %104 : vector<8x8xf32> to vector<8x8xbf16>
    %c0_35 = arith.constant 0 : index
    %c24 = arith.constant 24 : index
    %106 = vector.load %arg16[%c0_35, %c24] : memref<8x32xbf16, #tpu.memory_space<vmem>>, vector<8x8xbf16>
    tpu.vector_store %arg16[%c0_35, %c24], %105 {strides = array<i32>} : memref<8x32xbf16, #tpu.memory_space<vmem>>, vector<8x8xbf16>,
    %c0_36 = arith.constant 0 : index
    %c0_37 = arith.constant 0 : index
    %107 = vector.load %arg16[%c0_36, %c0_37] : memref<8x32xbf16, #tpu.memory_space<vmem>>, vector<8x32xbf16>
    %c0_38 = arith.constant 0 : index
    %c0_39 = arith.constant 0 : index
    %108 = vector.load %arg6[%c0_38, %c0_39] : memref<32x32xbf16, #tpu.memory_space<vmem>>, vector<32x32xbf16>
    %cst_40 = arith.constant dense<0.000000e+00> : vector<8x32xf32>
    %109 = tpu.matmul %107, %108, %cst_40 {dimension_numbers = #tpu.dot_dimension_numbers<[1], [0], [0], [1], [0, 0, 1, 1], [], []>} : vector<8x32xbf16>, vector<32x32xbf16>, vector<8x32xf32> -> vector<8x32xf32>
    %110 = arith.addf %109, %1 : vector<8x32xf32>
    %c0_41 = arith.constant 0 : index
    %c0_42 = arith.constant 0 : index
    %111 = vector.load %arg7[%c0_41, %c0_42] : memref<1x32xf32, #tpu.memory_space<vmem>>, vector<1x32xf32>
    %c0_43 = arith.constant 0 : index
    %c0_44 = arith.constant 0 : index
    %112 = vector.load %arg8[%c0_43, %c0_44] : memref<1x32xf32, #tpu.memory_space<vmem>>, vector<1x32xf32>
    %cst_45 = arith.constant dense<0.000000e+00> : vector<8xf32>
    %113 = vector.multi_reduction <add>, %110, %cst_45 [1] : vector<8x32xf32> to vector<8xf32>
    %114 = vector.shape_cast %113 : vector<8xf32> to vector<8x1xf32>
    %cst_46 = arith.constant 3.200000e+01 : f32
    %115 = vector.broadcast %cst_46 : f32 to vector<8x1xf32>
    %116 = arith.divf %114, %115 : vector<8x1xf32>
    %117 = vector.broadcast %116 : vector<8x1xf32> to vector<8x32xf32>
    %118 = arith.subf %110, %117 : vector<8x32xf32>
    %119 = arith.mulf %118, %118 : vector<8x32xf32>
    %cst_47 = arith.constant dense<0.000000e+00> : vector<8xf32>
    %120 = vector.multi_reduction <add>, %119, %cst_47 [1] : vector<8x32xf32> to vector<8xf32>
    %121 = vector.shape_cast %120 : vector<8xf32> to vector<8x1xf32>
    %cst_48 = arith.constant 3.200000e+01 : f32
    %122 = vector.broadcast %cst_48 : f32 to vector<8x1xf32>
    %123 = arith.divf %121, %122 : vector<8x1xf32>
    %124 = vector.broadcast %116 : vector<8x1xf32> to vector<8x32xf32>
    %125 = arith.subf %110, %124 : vector<8x32xf32>
    %cst_49 = arith.constant 9.99999974E-6 : f32
    %126 = vector.broadcast %cst_49 : f32 to vector<8x1xf32>
    %127 = arith.addf %123, %126 : vector<8x1xf32>
    %128 = math.rsqrt %127 : vector<8x1xf32>
    %129 = vector.broadcast %128 : vector<8x1xf32> to vector<8x32xf32>
    %130 = arith.mulf %125, %129 : vector<8x32xf32>
    %131 = vector.broadcast %111 : vector<1x32xf32> to vector<8x32xf32>
    %132 = arith.mulf %130, %131 : vector<8x32xf32>
    %133 = vector.broadcast %112 : vector<1x32xf32> to vector<8x32xf32>
    %134 = arith.addf %132, %133 : vector<8x32xf32>
    %135 = arith.truncf %134 : vector<8x32xf32> to vector<8x32xbf16>
    %c0_50 = arith.constant 0 : index
    %c0_51 = arith.constant 0 : index
    %136 = vector.load %arg9[%c0_50, %c0_51] : memref<32x64xbf16, #tpu.memory_space<vmem>>, vector<32x64xbf16>
    %cst_52 = arith.constant dense<0.000000e+00> : vector<8x64xf32>
    %137 = tpu.matmul %135, %136, %cst_52 {dimension_numbers = #tpu.dot_dimension_numbers<[1], [0], [0], [1], [0, 0, 1, 1], [], []>} : vector<8x32xbf16>, vector<32x64xbf16>, vector<8x64xf32> -> vector<8x64xf32>
    %c0_53 = arith.constant 0 : index
    %c0_54 = arith.constant 0 : index
    %138 = vector.load %arg10[%c0_53, %c0_54] : memref<1x64xf32, #tpu.memory_space<vmem>>, vector<1x64xf32>
    %139 = vector.broadcast %138 : vector<1x64xf32> to vector<8x64xf32>
    %140 = arith.addf %137, %139 : vector<8x64xf32>
    %cst_55 = arith.constant 0.000000e+00 : f32
    %141 = vector.broadcast %cst_55 : f32 to vector<8x64xf32>
    %142 = arith.maximumf %140, %141 : vector<8x64xf32>
    %143 = arith.truncf %142 : vector<8x64xf32> to vector<8x64xbf16>
    %c0_56 = arith.constant 0 : index
    %c0_57 = arith.constant 0 : index
    %144 = vector.load %arg11[%c0_56, %c0_57] : memref<64x32xbf16, #tpu.memory_space<vmem>>, vector<64x32xbf16>
    %cst_58 = arith.constant dense<0.000000e+00> : vector<8x32xf32>
    %145 = tpu.matmul %143, %144, %cst_58 {dimension_numbers = #tpu.dot_dimension_numbers<[1], [0], [0], [1], [0, 0, 1, 1], [], []>} : vector<8x64xbf16>, vector<64x32xbf16>, vector<8x32xf32> -> vector<8x32xf32>
    %c0_59 = arith.constant 0 : index
    %c0_60 = arith.constant 0 : index
    %146 = vector.load %arg12[%c0_59, %c0_60] : memref<1x32xf32, #tpu.memory_space<vmem>>, vector<1x32xf32>
    %147 = vector.broadcast %146 : vector<1x32xf32> to vector<8x32xf32>
    %148 = arith.addf %145, %147 : vector<8x32xf32>
    %149 = arith.addf %148, %134 : vector<8x32xf32>
    %c0_61 = arith.constant 0 : index
    %c0_62 = arith.constant 0 : index
    %150 = vector.load %arg13[%c0_61, %c0_62] : memref<1x32xf32, #tpu.memory_space<vmem>>, vector<1x32xf32>
    %c0_63 = arith.constant 0 : index
    %c0_64 = arith.constant 0 : index
    %151 = vector.load %arg14[%c0_63, %c0_64] : memref<1x32xf32, #tpu.memory_space<vmem>>, vector<1x32xf32>
    %cst_65 = arith.constant dense<0.000000e+00> : vector<8xf32>
    %152 = vector.multi_reduction <add>, %149, %cst_65 [1] : vector<8x32xf32> to vector<8xf32>
    %153 = vector.shape_cast %152 : vector<8xf32> to vector<8x1xf32>
    %cst_66 = arith.constant 3.200000e+01 : f32
    %154 = vector.broadcast %cst_66 : f32 to vector<8x1xf32>
    %155 = arith.divf %153, %154 : vector<8x1xf32>
    %156 = vector.broadcast %155 : vector<8x1xf32> to vector<8x32xf32>
    %157 = arith.subf %149, %156 : vector<8x32xf32>
    %158 = arith.mulf %157, %157 : vector<8x32xf32>
    %cst_67 = arith.constant dense<0.000000e+00> : vector<8xf32>
    %159 = vector.multi_reduction <add>, %158, %cst_67 [1] : vector<8x32xf32> to vector<8xf32>
    %160 = vector.shape_cast %159 : vector<8xf32> to vector<8x1xf32>
    %cst_68 = arith.constant 3.200000e+01 : f32
    %161 = vector.broadcast %cst_68 : f32 to vector<8x1xf32>
    %162 = arith.divf %160, %161 : vector<8x1xf32>
    %163 = vector.broadcast %155 : vector<8x1xf32> to vector<8x32xf32>
    %164 = arith.subf %149, %163 : vector<8x32xf32>
    %cst_69 = arith.constant 9.99999974E-6 : f32
    %165 = vector.broadcast %cst_69 : f32 to vector<8x1xf32>
    %166 = arith.addf %162, %165 : vector<8x1xf32>
    %167 = math.rsqrt %166 : vector<8x1xf32>
    %168 = vector.broadcast %167 : vector<8x1xf32> to vector<8x32xf32>
    %169 = arith.mulf %164, %168 : vector<8x32xf32>
    %170 = vector.broadcast %150 : vector<1x32xf32> to vector<8x32xf32>
    %171 = arith.mulf %169, %170 : vector<8x32xf32>
    %172 = vector.broadcast %151 : vector<1x32xf32> to vector<8x32xf32>
    %173 = arith.addf %171, %172 : vector<8x32xf32>
    %174 = vector.shape_cast %173 : vector<8x32xf32> to vector<1x8x32xf32>
    %c0_70 = arith.constant 0 : index
    %c0_71 = arith.constant 0 : index
    %c0_72 = arith.constant 0 : index
    %175 = vector.load %arg15[%c0_70, %c0_71, %c0_72] : memref<1x8x32xf32, #tpu.memory_space<vmem>>, vector<1x8x32xf32>
    tpu.vector_store %arg15[%c0_70, %c0_71, %c0_72], %174 {strides = array<i32>} : memref<1x8x32xf32, #tpu.memory_space<vmem>>, vector<1x8x32xf32>,
    return
  }
  func.func @transform_0(%arg0: i32) -> (i32, i32, i32) {
    %c0_i32 = arith.constant 0 : i32
    %c0_i32_0 = arith.constant 0 : i32
    %c0_i32_1 = arith.constant 0 : i32
    return %arg0, %c0_i32, %c0_i32_0 : i32, i32, i32
  }
  func.func @transform_1(%arg0: i32) -> (i32, i32, i32) {
    %c0_i32 = arith.constant 0 : i32
    %c0_i32_0 = arith.constant 0 : i32
    %c0_i32_1 = arith.constant 0 : i32
    return %arg0, %c0_i32, %c0_i32_0 : i32, i32, i32
  }
  func.func @transform_2(%arg0: i32) -> (i32, i32) {
    %c0_i32 = arith.constant 0 : i32
    %c0_i32_0 = arith.constant 0 : i32
    %c0_i32_1 = arith.constant 0 : i32
    return %c0_i32, %c0_i32_0 : i32, i32
  }
  func.func @transform_3(%arg0: i32) -> (i32, i32) {
    %c0_i32 = arith.constant 0 : i32
    %c0_i32_0 = arith.constant 0 : i32
    %c0_i32_1 = arith.constant 0 : i32
    return %c0_i32, %c0_i32_0 : i32, i32
  }
  func.func @transform_4(%arg0: i32) -> (i32, i32) {
    %c0_i32 = arith.constant 0 : i32
    %c0_i32_0 = arith.constant 0 : i32
    %c0_i32_1 = arith.constant 0 : i32
    return %c0_i32, %c0_i32_0 : i32, i32
  }
  func.func @transform_5(%arg0: i32) -> (i32, i32) {
    %c0_i32 = arith.constant 0 : i32
    %c0_i32_0 = arith.constant 0 : i32
    %c0_i32_1 = arith.constant 0 : i32
    return %c0_i32, %c0_i32_0 : i32, i32
  }
  func.func @transform_6(%arg0: i32) -> (i32, i32) {
    %c0_i32 = arith.constant 0 : i32
    %c0_i32_0 = arith.constant 0 : i32
    %c0_i32_1 = arith.constant 0 : i32
    return %c0_i32, %c0_i32_0 : i32, i32
  }
  func.func @transform_7(%arg0: i32) -> (i32, i32) {
    %c0_i32 = arith.constant 0 : i32
    %c0_i32_0 = arith.constant 0 : i32
    %c0_i32_1 = arith.constant 0 : i32
    return %c0_i32, %c0_i32_0 : i32, i32
  }
  func.func @transform_8(%arg0: i32) -> (i32, i32) {
    %c0_i32 = arith.constant 0 : i32
    %c0_i32_0 = arith.constant 0 : i32
    %c0_i32_1 = arith.constant 0 : i32
    return %c0_i32, %c0_i32_0 : i32, i32
  }
  func.func @transform_9(%arg0: i32) -> (i32, i32) {
    %c0_i32 = arith.constant 0 : i32
    %c0_i32_0 = arith.constant 0 : i32
    %c0_i32_1 = arith.constant 0 : i32
    return %c0_i32, %c0_i32_0 : i32, i32
  }
  func.func @transform_10(%arg0: i32) -> (i32, i32) {
    %c0_i32 = arith.constant 0 : i32
    %c0_i32_0 = arith.constant 0 : i32
    %c0_i32_1 = arith.constant 0 : i32
    return %c0_i32, %c0_i32_0 : i32, i32
  }
  func.func @transform_11(%arg0: i32) -> (i32, i32) {
    %c0_i32 = arith.constant 0 : i32
    %c0_i32_0 = arith.constant 0 : i32
    %c0_i32_1 = arith.constant 0 : i32
    return %c0_i32, %c0_i32_0 : i32, i32
  }
  func.func @transform_12(%arg0: i32) -> (i32, i32) {
    %c0_i32 = arith.constant 0 : i32
    %c0_i32_0 = arith.constant 0 : i32
    %c0_i32_1 = arith.constant 0 : i32
    return %c0_i32, %c0_i32_0 : i32, i32
  }
  func.func @transform_13(%arg0: i32) -> (i32, i32) {
    %c0_i32 = arith.constant 0 : i32
    %c0_i32_0 = arith.constant 0 : i32
    %c0_i32_1 = arith.constant 0 : i32
    return %c0_i32, %c0_i32_0 : i32, i32
  }
  func.func @transform_14(%arg0: i32) -> (i32, i32, i32) {
    %c0_i32 = arith.constant 0 : i32
    %c0_i32_0 = arith.constant 0 : i32
    %c0_i32_1 = arith.constant 0 : i32
    return %arg0, %c0_i32, %c0_i32_0 : i32, i32, i32
  }
}

module attributes {stable_mosaic.version = 11 : i64} {
  func.func @kernel(%arg0: i32, %arg1: memref<1x1x1xi32, #tpu.memory_space<vmem>>, %arg2: memref<1x8x32xf32, #tpu.memory_space<vmem>>, %arg3: memref<32x32xbf16, #tpu.memory_space<vmem>>, %arg4: memref<32x32xbf16, #tpu.memory_space<vmem>>, %arg5: memref<32x32xbf16, #tpu.memory_space<vmem>>, %arg6: memref<32x32xbf16, #tpu.memory_space<vmem>>, %arg7: memref<1x32xf32, #tpu.memory_space<vmem>>, %arg8: memref<1x32xf32, #tpu.memory_space<vmem>>, %arg9: memref<32x64xbf16, #tpu.memory_space<vmem>>, %arg10: memref<1x64xf32, #tpu.memory_space<vmem>>, %arg11: memref<64x32xbf16, #tpu.memory_space<vmem>>, %arg12: memref<1x32xf32, #tpu.memory_space<vmem>>, %arg13: memref<1x32xf32, #tpu.memory_space<vmem>>, %arg14: memref<1x32xf32, #tpu.memory_space<vmem>>, %arg15: memref<1x8x32xf32, #tpu.memory_space<vmem>>, %arg16: memref<8x32xbf16, #tpu.memory_space<vmem>>) attributes {dimension_semantics = [#tpu.dimension_semantics<parallel>], iteration_bounds = array<i64: 2>, scalar_prefetch = 0 : i64, scratch_operands = 1 : i64, tpu.core_type = #tpu.core_type<tc>, window_params = [{transform_indices = @transform_0, window_bounds = array<i64: 1, 1, 1>}, {transform_indices = @transform_1, window_bounds = array<i64: 1, 8, 32>}, {pipeline_mode = #tpu.pipeline_mode<synchronous>, transform_indices = @transform_2, window_bounds = array<i64: 32, 32>}, {pipeline_mode = #tpu.pipeline_mode<synchronous>, transform_indices = @transform_3, window_bounds = array<i64: 32, 32>}, {pipeline_mode = #tpu.pipeline_mode<synchronous>, transform_indices = @transform_4, window_bounds = array<i64: 32, 32>}, {pipeline_mode = #tpu.pipeline_mode<synchronous>, transform_indices = @transform_5, window_bounds = array<i64: 32, 32>}, {pipeline_mode = #tpu.pipeline_mode<synchronous>, transform_indices = @transform_6, window_bounds = array<i64: 1, 32>}, {pipeline_mode = #tpu.pipeline_mode<synchronous>, transform_indices = @transform_7, window_bounds = array<i64: 1, 32>}, {pipeline_mode = #tpu.pipeline_mode<synchronous>, transform_indices = @transform_8, window_bounds = array<i64: 32, 64>}, {pipeline_mode = #tpu.pipeline_mode<synchronous>, transform_indices = @transform_9, window_bounds = array<i64: 1, 64>}, {pipeline_mode = #tpu.pipeline_mode<synchronous>, transform_indices = @transform_10, window_bounds = array<i64: 64, 32>}, {pipeline_mode = #tpu.pipeline_mode<synchronous>, transform_indices = @transform_11, window_bounds = array<i64: 1, 32>}, {pipeline_mode = #tpu.pipeline_mode<synchronous>, transform_indices = @transform_12, window_bounds = array<i64: 1, 32>}, {pipeline_mode = #tpu.pipeline_mode<synchronous>, transform_indices = @transform_13, window_bounds = array<i64: 1, 32>}, {transform_indices = @transform_14, window_bounds = array<i64: 1, 8, 32>}]} {
    %c0 = arith.constant 0 : index
    %c0_0 = arith.constant 0 : index
    %c0_1 = arith.constant 0 : index
    %0 = vector.load %arg2[%c0, %c0_0, %c0_1] : memref<1x8x32xf32, #tpu.memory_space<vmem>>, vector<1x8x32xf32>
    %1 = vector.shape_cast %0 : vector<1x8x32xf32> to vector<8x32xf32>
    %2 = arith.truncf %0 : vector<1x8x32xf32> to vector<1x8x32xbf16>
    %3 = vector.shape_cast %2 : vector<1x8x32xbf16> to vector<8x32xbf16>
    %c0_2 = arith.constant 0 : index
    %c0_3 = arith.constant 0 : index
    %4 = vector.load %arg3[%c0_2, %c0_3] : memref<32x32xbf16, #tpu.memory_space<vmem>>, vector<32x32xbf16>
    %cst = arith.constant dense<0.000000e+00> : vector<8x32xf32>
    %5 = tpu.matmul %3, %4, %cst {dimension_numbers = #tpu.dot_dimension_numbers<[1], [0], [0], [1], [0, 0, 1, 1], [], []>} : vector<8x32xbf16>, vector<32x32xbf16>, vector<8x32xf32> -> vector<8x32xf32>
    %c0_4 = arith.constant 0 : index
    %c0_5 = arith.constant 0 : index
    %6 = vector.load %arg4[%c0_4, %c0_5] : memref<32x32xbf16, #tpu.memory_space<vmem>>, vector<32x32xbf16>
    %cst_6 = arith.constant dense<0.000000e+00> : vector<8x32xf32>
    %7 = tpu.matmul %3, %6, %cst_6 {dimension_numbers = #tpu.dot_dimension_numbers<[1], [0], [0], [1], [0, 0, 1, 1], [], []>} : vector<8x32xbf16>, vector<32x32xbf16>, vector<8x32xf32> -> vector<8x32xf32>
    %c0_7 = arith.constant 0 : index
    %c0_8 = arith.constant 0 : index
    %8 = vector.load %arg5[%c0_7, %c0_8] : memref<32x32xbf16, #tpu.memory_space<vmem>>, vector<32x32xbf16>
    %cst_9 = arith.constant dense<0.000000e+00> : vector<8x32xf32>
    %9 = tpu.matmul %3, %8, %cst_9 {dimension_numbers = #tpu.dot_dimension_numbers<[1], [0], [0], [1], [0, 0, 1, 1], [], []>} : vector<8x32xbf16>, vector<32x32xbf16>, vector<8x32xf32> -> vector<8x32xf32>
    %10 = tpu.iota {dimensions = array<i32: 2>} : vector<1x1x8xi32>
    %c0_10 = arith.constant 0 : index
    %c0_11 = arith.constant 0 : index
    %c0_12 = arith.constant 0 : index
    %11 = vector.load %arg1[%c0_10, %c0_11, %c0_12] : memref<1x1x1xi32, #tpu.memory_space<vmem>>, vector<1x1x1xi32>
    %12 = vector.broadcast %11 : vector<1x1x1xi32> to vector<1x1x8xi32>
    %13 = arith.cmpi slt, %10, %12 : vector<1x1x8xi32>
    %cst_13 = arith.constant 0.000000e+00 : f32
    %cst_14 = arith.constant -1.000000e+06 : f32
    %14 = vector.broadcast %cst_13 : f32 to vector<1x1x8xf32>
    %15 = vector.broadcast %cst_14 : f32 to vector<1x1x8xf32>
    %16 = arith.select %13, %14, %15 : vector<1x1x8xi1>, vector<1x1x8xf32>
    %17 = vector.shape_cast %5 : vector<8x32xf32> to vector<1x8x32xf32>
    %18 = arith.truncf %17 : vector<1x8x32xf32> to vector<1x8x32xbf16>
    %19 = vector.shape_cast %7 : vector<8x32xf32> to vector<1x8x32xf32>
    %20 = arith.truncf %19 : vector<1x8x32xf32> to vector<1x8x32xbf16>
    %21 = vector.shape_cast %9 : vector<8x32xf32> to vector<1x8x32xf32>
    %22 = arith.truncf %21 : vector<1x8x32xf32> to vector<1x8x32xbf16>
    %23 = vector.extract_strided_slice %18 {offsets = [0, 0, 0], sizes = [1, 8, 8], strides = [1, 1, 1]} : vector<1x8x32xbf16> to vector<1x8x8xbf16>
    %24 = vector.extract_strided_slice %20 {offsets = [0, 0, 0], sizes = [1, 8, 8], strides = [1, 1, 1]} : vector<1x8x32xbf16> to vector<1x8x8xbf16>
    "tpu.trace_start"() <{level = 10 : i32, message = "bqd,bkd->bqk"}> : () -> ()
    %cst_15 = arith.constant dense<0.000000e+00> : vector<1x8x8xf32>
    %25 = tpu.matmul %23, %24, %cst_15 {dimension_numbers = #tpu.dot_dimension_numbers<[2], [2], [1], [1], [0, 0, 0, 1, 1, 1], [0], [0]>} : vector<1x8x8xbf16>, vector<1x8x8xbf16>, vector<1x8x8xf32> -> vector<1x8x8xf32>
    "tpu.trace_stop"() : () -> ()
    %26 = vector.broadcast %16 : vector<1x1x8xf32> to vector<1x8x8xf32>
    %27 = arith.addf %25, %26 : vector<1x8x8xf32>
    %cst_16 = arith.constant dense<0xFF800000> : vector<1x8xf32>
    %28 = vector.multi_reduction <maximumf>, %27, %cst_16 [2] : vector<1x8x8xf32> to vector<1x8xf32>
    %29 = vector.shape_cast %28 : vector<1x8xf32> to vector<1x8x1xf32>
    %30 = vector.broadcast %29 : vector<1x8x1xf32> to vector<1x8x8xf32>
    %31 = arith.subf %27, %30 : vector<1x8x8xf32>
    %32 = math.exp %31 : vector<1x8x8xf32>
    %cst_17 = arith.constant dense<0.000000e+00> : vector<1x8xf32>
    %33 = vector.multi_reduction <add>, %32, %cst_17 [2] : vector<1x8x8xf32> to vector<1x8xf32>
    %34 = vector.shape_cast %33 : vector<1x8xf32> to vector<1x8x1xf32>
    %35 = tpu.reciprocal %34 {approx = true} : vector<1x8x1xf32> -> vector<1x8x1xf32>
    %36 = vector.broadcast %35 : vector<1x8x1xf32> to vector<1x8x8xf32>
    %37 = arith.mulf %32, %36 : vector<1x8x8xf32>
    %38 = arith.truncf %37 : vector<1x8x8xf32> to vector<1x8x8xbf16>
    %39 = vector.extract_strided_slice %22 {offsets = [0, 0, 0], sizes = [1, 8, 8], strides = [1, 1, 1]} : vector<1x8x32xbf16> to vector<1x8x8xbf16>
    "tpu.trace_start"() <{level = 10 : i32, message = "bqk,bkd->bqd"}> : () -> ()
    %cst_18 = arith.constant dense<0.000000e+00> : vector<1x8x8xf32>
    %40 = tpu.matmul %38, %39, %cst_18 {dimension_numbers = #tpu.dot_dimension_numbers<[2], [1], [1], [2], [0, 0, 0, 1, 1, 2], [0], [0]>} : vector<1x8x8xbf16>, vector<1x8x8xbf16>, vector<1x8x8xf32> -> vector<1x8x8xf32>
    "tpu.trace_stop"() : () -> ()
    %41 = vector.shape_cast %40 : vector<1x8x8xf32> to vector<8x8xf32>
    %42 = arith.truncf %41 : vector<8x8xf32> to vector<8x8xbf16>
    %c0_19 = arith.constant 0 : index
    %c0_20 = arith.constant 0 : index
    %43 = vector.load %arg16[%c0_19, %c0_20] : memref<8x32xbf16, #tpu.memory_space<vmem>>, vector<8x8xbf16>
    tpu.vector_store %arg16[%c0_19, %c0_20], %42 {strides = array<i32>} : memref<8x32xbf16, #tpu.memory_space<vmem>>, vector<8x8xbf16>,
    %44 = vector.extract_strided_slice %18 {offsets = [0, 0, 8], sizes = [1, 8, 8], strides = [1, 1, 1]} : vector<1x8x32xbf16> to vector<1x8x8xbf16>
    %45 = vector.extract_strided_slice %20 {offsets = [0, 0, 8], sizes = [1, 8, 8], strides = [1, 1, 1]} : vector<1x8x32xbf16> to vector<1x8x8xbf16>
    "tpu.trace_start"() <{level = 10 : i32, message = "bqd,bkd->bqk"}> : () -> ()
    %cst_21 = arith.constant dense<0.000000e+00> : vector<1x8x8xf32>
    %46 = tpu.matmul %44, %45, %cst_21 {dimension_numbers = #tpu.dot_dimension_numbers<[2], [2], [1], [1], [0, 0, 0, 1, 1, 1], [0], [0]>} : vector<1x8x8xbf16>, vector<1x8x8xbf16>, vector<1x8x8xf32> -> vector<1x8x8xf32>
    "tpu.trace_stop"() : () -> ()
    %47 = vector.broadcast %16 : vector<1x1x8xf32> to vector<1x8x8xf32>
    %48 = arith.addf %46, %47 : vector<1x8x8xf32>
    %cst_22 = arith.constant dense<0xFF800000> : vector<1x8xf32>
    %49 = vector.multi_reduction <maximumf>, %48, %cst_22 [2] : vector<1x8x8xf32> to vector<1x8xf32>
    %50 = vector.shape_cast %49 : vector<1x8xf32> to vector<1x8x1xf32>
    %51 = vector.broadcast %50 : vector<1x8x1xf32> to vector<1x8x8xf32>
    %52 = arith.subf %48, %51 : vector<1x8x8xf32>
    %53 = math.exp %52 : vector<1x8x8xf32>
    %cst_23 = arith.constant dense<0.000000e+00> : vector<1x8xf32>
    %54 = vector.multi_reduction <add>, %53, %cst_23 [2] : vector<1x8x8xf32> to vector<1x8xf32>
    %55 = vector.shape_cast %54 : vector<1x8xf32> to vector<1x8x1xf32>
    %56 = tpu.reciprocal %55 {approx = true} : vector<1x8x1xf32> -> vector<1x8x1xf32>
    %57 = vector.broadcast %56 : vector<1x8x1xf32> to vector<1x8x8xf32>
    %58 = arith.mulf %53, %57 : vector<1x8x8xf32>
    %59 = arith.truncf %58 : vector<1x8x8xf32> to vector<1x8x8xbf16>
    %60 = vector.extract_strided_slice %22 {offsets = [0, 0, 8], sizes = [1, 8, 8], strides = [1, 1, 1]} : vector<1x8x32xbf16> to vector<1x8x8xbf16>
    "tpu.trace_start"() <{level = 10 : i32, message = "bqk,bkd->bqd"}> : () -> ()
    %cst_24 = arith.constant dense<0.000000e+00> : vector<1x8x8xf32>
    %61 = tpu.matmul %59, %60, %cst_24 {dimension_numbers = #tpu.dot_dimension_numbers<[2], [1], [1], [2], [0, 0, 0, 1, 1, 2], [0], [0]>} : vector<1x8x8xbf16>, vector<1x8x8xbf16>, vector<1x8x8xf32> -> vector<1x8x8xf32>
    "tpu.trace_stop"() : () -> ()
    %62 = vector.shape_cast %61 : vector<1x8x8xf32> to vector<8x8xf32>
    %63 = arith.truncf %62 : vector<8x8xf32> to vector<8x8xbf16>
    %c0_25 = arith.constant 0 : index
    %c8 = arith.constant 8 : index
    %64 = vector.load %arg16[%c0_25, %c8] : memref<8x32xbf16, #tpu.memory_space<vmem>>, vector<8x8xbf16>
    tpu.vector_store %arg16[%c0_25, %c8], %63 {strides = array<i32>} : memref<8x32xbf16, #tpu.memory_space<vmem>>, vector<8x8xbf16>,
    %65 = vector.extract_strided_slice %18 {offsets = [0, 0, 16], sizes = [1, 8, 8], strides = [1, 1, 1]} : vector<1x8x32xbf16> to vector<1x8x8xbf16>
    %66 = vector.extract_strided_slice %20 {offsets = [0, 0, 16], sizes = [1, 8, 8], strides = [1, 1, 1]} : vector<1x8x32xbf16> to vector<1x8x8xbf16>
    "tpu.trace_start"() <{level = 10 : i32, message = "bqd,bkd->bqk"}> : () -> ()
    %cst_26 = arith.constant dense<0.000000e+00> : vector<1x8x8xf32>
    %67 = tpu.matmul %65, %66, %cst_26 {dimension_numbers = #tpu.dot_dimension_numbers<[2], [2], [1], [1], [0, 0, 0, 1, 1, 1], [0], [0]>} : vector<1x8x8xbf16>, vector<1x8x8xbf16>, vector<1x8x8xf32> -> vector<1x8x8xf32>
    "tpu.trace_stop"() : () -> ()
    %68 = vector.broadcast %16 : vector<1x1x8xf32> to vector<1x8x8xf32>
    %69 = arith.addf %67, %68 : vector<1x8x8xf32>
    %cst_27 = arith.constant dense<0xFF800000> : vector<1x8xf32>
    %70 = vector.multi_reduction <maximumf>, %69, %cst_27 [2] : vector<1x8x8xf32> to vector<1x8xf32>
    %71 = vector.shape_cast %70 : vector<1x8xf32> to vector<1x8x1xf32>
    %72 = vector.broadcast %71 : vector<1x8x1xf32> to vector<1x8x8xf32>
    %73 = arith.subf %69, %72 : vector<1x8x8xf32>
    %74 = math.exp %73 : vector<1x8x8xf32>
    %cst_28 = arith.constant dense<0.000000e+00> : vector<1x8xf32>
    %75 = vector.multi_reduction <add>, %74, %cst_28 [2] : vector<1x8x8xf32> to vector<1x8xf32>
    %76 = vector.shape_cast %75 : vector<1x8xf32> to vector<1x8x1xf32>
    %77 = tpu.reciprocal %76 {approx = true} : vector<1x8x1xf32> -> vector<1x8x1xf32>
    %78 = vector.broadcast %77 : vector<1x8x1xf32> to vector<1x8x8xf32>
    %79 = arith.mulf %74, %78 : vector<1x8x8xf32>
    %80 = arith.truncf %79 : vector<1x8x8xf32> to vector<1x8x8xbf16>
    %81 = vector.extract_strided_slice %22 {offsets = [0, 0, 16], sizes = [1, 8, 8], strides = [1, 1, 1]} : vector<1x8x32xbf16> to vector<1x8x8xbf16>
    "tpu.trace_start"() <{level = 10 : i32, message = "bqk,bkd->bqd"}> : () -> ()
    %cst_29 = arith.constant dense<0.000000e+00> : vector<1x8x8xf32>
    %82 = tpu.matmul %80, %81, %cst_29 {dimension_numbers = #tpu.dot_dimension_numbers<[2], [1], [1], [2], [0, 0, 0, 1, 1, 2], [0], [0]>} : vector<1x8x8xbf16>, vector<1x8x8xbf16>, vector<1x8x8xf32> -> vector<1x8x8xf32>
    "tpu.trace_stop"() : () -> ()
    %83 = vector.shape_cast %82 : vector<1x8x8xf32> to vector<8x8xf32>
    %84 = arith.truncf %83 : vector<8x8xf32> to vector<8x8xbf16>
    %c0_30 = arith.constant 0 : index
    %c16 = arith.constant 16 : index
    %85 = vector.load %arg16[%c0_30, %c16] : memref<8x32xbf16, #tpu.memory_space<vmem>>, vector<8x8xbf16>
    tpu.vector_store %arg16[%c0_30, %c16], %84 {strides = array<i32>} : memref<8x32xbf16, #tpu.memory_space<vmem>>, vector<8x8xbf16>,
    %86 = vector.extract_strided_slice %18 {offsets = [0, 0, 24], sizes = [1, 8, 8], strides = [1, 1, 1]} : vector<1x8x32xbf16> to vector<1x8x8xbf16>
    %87 = vector.extract_strided_slice %20 {offsets = [0, 0, 24], sizes = [1, 8, 8], strides = [1, 1, 1]} : vector<1x8x32xbf16> to vector<1x8x8xbf16>
    "tpu.trace_start"() <{level = 10 : i32, message = "bqd,bkd->bqk"}> : () -> ()
    %cst_31 = arith.constant dense<0.000000e+00> : vector<1x8x8xf32>
    %88 = tpu.matmul %86, %87, %cst_31 {dimension_numbers = #tpu.dot_dimension_numbers<[2], [2], [1], [1], [0, 0, 0, 1, 1, 1], [0], [0]>} : vector<1x8x8xbf16>, vector<1x8x8xbf16>, vector<1x8x8xf32> -> vector<1x8x8xf32>
    "tpu.trace_stop"() : () -> ()
    %89 = vector.broadcast %16 : vector<1x1x8xf32> to vector<1x8x8xf32>
    %90 = arith.addf %88, %89 : vector<1x8x8xf32>
    %cst_32 = arith.constant dense<0xFF800000> : vector<1x8xf32>
    %91 = vector.multi_reduction <maximumf>, %90, %cst_32 [2] : vector<1x8x8xf32> to vector<1x8xf32>
    %92 = vector.shape_cast %91 : vector<1x8xf32> to vector<1x8x1xf32>
    %93 = vector.broadcast %92 : vector<1x8x1xf32> to vector<1x8x8xf32>
    %94 = arith.subf %90, %93 : vector<1x8x8xf32>
    %95 = math.exp %94 : vector<1x8x8xf32>
    %cst_33 = arith.constant dense<0.000000e+00> : vector<1x8xf32>
    %96 = vector.multi_reduction <add>, %95, %cst_33 [2] : vector<1x8x8xf32> to vector<1x8xf32>
    %97 = vector.shape_cast %96 : vector<1x8xf32> to vector<1x8x1xf32>
    %98 = tpu.reciprocal %97 {approx = true} : vector<1x8x1xf32> -> vector<1x8x1xf32>
    %99 = vector.broadcast %98 : vector<1x8x1xf32> to vector<1x8x8xf32>
    %100 = arith.mulf %95, %99 : vector<1x8x8xf32>
    %101 = arith.truncf %100 : vector<1x8x8xf32> to vector<1x8x8xbf16>
    %102 = vector.extract_strided_slice %22 {offsets = [0, 0, 24], sizes = [1, 8, 8], strides = [1, 1, 1]} : vector<1x8x32xbf16> to vector<1x8x8xbf16>
    "tpu.trace_start"() <{level = 10 : i32, message = "bqk,bkd->bqd"}> : () -> ()
    %cst_34 = arith.constant dense<0.000000e+00> : vector<1x8x8xf32>
    %103 = tpu.matmul %101, %102, %cst_34 {dimension_numbers = #tpu.dot_dimension_numbers<[2], [1], [1], [2], [0, 0, 0, 1, 1, 2], [0], [0]>} : vector<1x8x8xbf16>, vector<1x8x8xbf16>, vector<1x8x8xf32> -> vector<1x8x8xf32>
    "tpu.trace_stop"() : () -> ()
    %104 = vector.shape_cast %103 : vector<1x8x8xf32> to vector<8x8xf32>
    %105 = arith.truncf %104 : vector<8x8xf32> to vector<8x8xbf16>
    %c0_35 = arith.constant 0 : index
    %c24 = arith.constant 24 : index
    %106 = vector.load %arg16[%c0_35, %c24] : memref<8x32xbf16, #tpu.memory_space<vmem>>, vector<8x8xbf16>
    tpu.vector_store %arg16[%c0_35, %c24], %105 {strides = array<i32>} : memref<8x32xbf16, #tpu.memory_space<vmem>>, vector<8x8xbf16>,
    %c0_36 = arith.constant 0 : index
    %c0_37 = arith.constant 0 : index
    %107 = vector.load %arg16[%c0_36, %c0_37] : memref<8x32xbf16, #tpu.memory_space<vmem>>, vector<8x32xbf16>
    %c0_38 = arith.constant 0 : index
    %c0_39 = arith.constant 0 : index
    %108 = vector.load %arg6[%c0_38, %c0_39] : memref<32x32xbf16, #tpu.memory_space<vmem>>, vector<32x32xbf16>
    %cst_40 = arith.constant dense<0.000000e+00> : vector<8x32xf32>
    %109 = tpu.matmul %107, %108, %cst_40 {dimension_numbers = #tpu.dot_dimension_numbers<[1], [0], [0], [1], [0, 0, 1, 1], [], []>} : vector<8x32xbf16>, vector<32x32xbf16>, vector<8x32xf32> -> vector<8x32xf32>
    %110 = arith.addf %109, %1 : vector<8x32xf32>
    %c0_41 = arith.constant 0 : index
    %c0_42 = arith.constant 0 : index
    %111 = vector.load %arg7[%c0_41, %c0_42] : memref<1x32xf32, #tpu.memory_space<vmem>>, vector<1x32xf32>
    %c0_43 = arith.constant 0 : index
    %c0_44 = arith.constant 0 : index
    %112 = vector.load %arg8[%c0_43, %c0_44] : memref<1x32xf32, #tpu.memory_space<vmem>>, vector<1x32xf32>
    %cst_45 = arith.constant dense<0.000000e+00> : vector<8xf32>
    %113 = vector.multi_reduction <add>, %110, %cst_45 [1] : vector<8x32xf32> to vector<8xf32>
    %114 = vector.shape_cast %113 : vector<8xf32> to vector<8x1xf32>
    %cst_46 = arith.constant 3.200000e+01 : f32
    %115 = vector.broadcast %cst_46 : f32 to vector<8x1xf32>
    %116 = arith.divf %114, %115 : vector<8x1xf32>
    %117 = vector.broadcast %116 : vector<8x1xf32> to vector<8x32xf32>
    %118 = arith.subf %110, %117 : vector<8x32xf32>
    %119 = arith.mulf %118, %118 : vector<8x32xf32>
    %cst_47 = arith.constant dense<0.000000e+00> : vector<8xf32>
    %120 = vector.multi_reduction <add>, %119, %cst_47 [1] : vector<8x32xf32> to vector<8xf32>
    %121 = vector.shape_cast %120 : vector<8xf32> to vector<8x1xf32>
    %cst_48 = arith.constant 3.200000e+01 : f32
    %122 = vector.broadcast %cst_48 : f32 to vector<8x1xf32>
    %123 = arith.divf %121, %122 : vector<8x1xf32>
    %124 = vector.broadcast %116 : vector<8x1xf32> to vector<8x32xf32>
    %125 = arith.subf %110, %124 : vector<8x32xf32>
    %cst_49 = arith.constant 9.99999974E-6 : f32
    %126 = vector.broadcast %cst_49 : f32 to vector<8x1xf32>
    %127 = arith.addf %123, %126 : vector<8x1xf32>
    %128 = math.rsqrt %127 : vector<8x1xf32>
    %129 = vector.broadcast %128 : vector<8x1xf32> to vector<8x32xf32>
    %130 = arith.mulf %125, %129 : vector<8x32xf32>
    %131 = vector.broadcast %111 : vector<1x32xf32> to vector<8x32xf32>
    %132 = arith.mulf %130, %131 : vector<8x32xf32>
    %133 = vector.broadcast %112 : vector<1x32xf32> to vector<8x32xf32>
    %134 = arith.addf %132, %133 : vector<8x32xf32>
    %135 = arith.truncf %134 : vector<8x32xf32> to vector<8x32xbf16>
    %c0_50 = arith.constant 0 : index
    %c0_51 = arith.constant 0 : index
    %136 = vector.load %arg9[%c0_50, %c0_51] : memref<32x64xbf16, #tpu.memory_space<vmem>>, vector<32x64xbf16>
    %cst_52 = arith.constant dense<0.000000e+00> : vector<8x64xf32>
    %137 = tpu.matmul %135, %136, %cst_52 {dimension_numbers = #tpu.dot_dimension_numbers<[1], [0], [0], [1], [0, 0, 1, 1], [], []>} : vector<8x32xbf16>, vector<32x64xbf16>, vector<8x64xf32> -> vector<8x64xf32>
    %c0_53 = arith.constant 0 : index
    %c0_54 = arith.constant 0 : index
    %138 = vector.load %arg10[%c0_53, %c0_54] : memref<1x64xf32, #tpu.memory_space<vmem>>, vector<1x64xf32>
    %139 = vector.broadcast %138 : vector<1x64xf32> to vector<8x64xf32>
    %140 = arith.addf %137, %139 : vector<8x64xf32>
    %cst_55 = arith.constant 0.000000e+00 : f32
    %141 = vector.broadcast %cst_55 : f32 to vector<8x64xf32>
    %142 = arith.maximumf %140, %141 : vector<8x64xf32>
    %143 = arith.truncf %142 : vector<8x64xf32> to vector<8x64xbf16>
    %c0_56 = arith.constant 0 : index
    %c0_57 = arith.constant 0 : index
    %144 = vector.load %arg11[%c0_56, %c0_57] : memref<64x32xbf16, #tpu.memory_space<vmem>>, vector<64x32xbf16>
    %cst_58 = arith.constant dense<0.000000e+00> : vector<8x32xf32>
    %145 = tpu.matmul %143, %144, %cst_58 {dimension_numbers = #tpu.dot_dimension_numbers<[1], [0], [0], [1], [0, 0, 1, 1], [], []>} : vector<8x64xbf16>, vector<64x32xbf16>, vector<8x32xf32> -> vector<8x32xf32>
    %c0_59 = arith.constant 0 : index
    %c0_60 = arith.constant 0 : index
    %146 = vector.load %arg12[%c0_59, %c0_60] : memref<1x32xf32, #tpu.memory_space<vmem>>, vector<1x32xf32>
    %147 = vector.broadcast %146 : vector<1x32xf32> to vector<8x32xf32>
    %148 = arith.addf %145, %147 : vector<8x32xf32>
    %149 = arith.addf %148, %134 : vector<8x32xf32>
    %c0_61 = arith.constant 0 : index
    %c0_62 = arith.constant 0 : index
    %150 = vector.load %arg13[%c0_61, %c0_62] : memref<1x32xf32, #tpu.memory_space<vmem>>, vector<1x32xf32>
    %c0_63 = arith.constant 0 : index
    %c0_64 = arith.constant 0 : index
    %151 = vector.load %arg14[%c0_63, %c0_64] : memref<1x32xf32, #tpu.memory_space<vmem>>, vector<1x32xf32>
    %cst_65 = arith.constant dense<0.000000e+00> : vector<8xf32>
    %152 = vector.multi_reduction <add>, %149, %cst_65 [1] : vector<8x32xf32> to vector<8xf32>
    %153 = vector.shape_cast %152 : vector<8xf32> to vector<8x1xf32>
    %cst_66 = arith.constant 3.200000e+01 : f32
    %154 = vector.broadcast %cst_66 : f32 to vector<8x1xf32>
    %155 = arith.divf %153, %154 : vector<8x1xf32>
    %156 = vector.broadcast %155 : vector<8x1xf32> to vector<8x32xf32>
    %157 = arith.subf %149, %156 : vector<8x32xf32>
    %158 = arith.mulf %157, %157 : vector<8x32xf32>
    %cst_67 = arith.constant dense<0.000000e+00> : vector<8xf32>
    %159 = vector.multi_reduction <add>, %158, %cst_67 [1] : vector<8x32xf32> to vector<8xf32>
    %160 = vector.shape_cast %159 : vector<8xf32> to vector<8x1xf32>
    %cst_68 = arith.constant 3.200000e+01 : f32
    %161 = vector.broadcast %cst_68 : f32 to vector<8x1xf32>
    %162 = arith.divf %160, %161 : vector<8x1xf32>
    %163 = vector.broadcast %155 : vector<8x1xf32> to vector<8x32xf32>
    %164 = arith.subf %149, %163 : vector<8x32xf32>
    %cst_69 = arith.constant 9.99999974E-6 : f32
    %165 = vector.broadcast %cst_69 : f32 to vector<8x1xf32>
    %166 = arith.addf %162, %165 : vector<8x1xf32>
    %167 = math.rsqrt %166 : vector<8x1xf32>
    %168 = vector.broadcast %167 : vector<8x1xf32> to vector<8x32xf32>
    %169 = arith.mulf %164, %168 : vector<8x32xf32>
    %170 = vector.broadcast %150 : vector<1x32xf32> to vector<8x32xf32>
    %171 = arith.mulf %169, %170 : vector<8x32xf32>
    %172 = vector.broadcast %151 : vector<1x32xf32> to vector<8x32xf32>
    %173 = arith.addf %171, %172 : vector<8x32xf32>
    %174 = vector.shape_cast %173 : vector<8x32xf32> to vector<1x8x32xf32>
    %c0_70 = arith.constant 0 : index
    %c0_71 = arith.constant 0 : index
    %c0_72 = arith.constant 0 : index
    %175 = vector.load %arg15[%c0_70, %c0_71, %c0_72] : memref<1x8x32xf32, #tpu.memory_space<vmem>>, vector<1x8x32xf32>
    tpu.vector_store %arg15[%c0_70, %c0_71, %c0_72], %174 {strides = array<i32>} : memref<1x8x32xf32, #tpu.memory_space<vmem>>, vector<1x8x32xf32>,
    return
  }
  func.func @transform_0(%arg0: i32) -> (i32, i32, i32) {
    %c0_i32 = arith.constant 0 : i32
    %c0_i32_0 = arith.constant 0 : i32
    %c0_i32_1 = arith.constant 0 : i32
    return %arg0, %c0_i32, %c0_i32_0 : i32, i32, i32
  }
  func.func @transform_1(%arg0: i32) -> (i32, i32, i32) {
    %c0_i32 = arith.constant 0 : i32
    %c0_i32_0 = arith.constant 0 : i32
    %c0_i32_1 = arith.constant 0 : i32
    return %arg0, %c0_i32, %c0_i32_0 : i32, i32, i32
  }
  func.func @transform_2(%arg0: i32) -> (i32, i32) {
    %c0_i32 = arith.constant 0 : i32
    %c0_i32_0 = arith.constant 0 : i32
    %c0_i32_1 = arith.constant 0 : i32
    return %c0_i32, %c0_i32_0 : i32, i32
  }
  func.func @transform_3(%arg0: i32) -> (i32, i32) {
    %c0_i32 = arith.constant 0 : i32
    %c0_i32_0 = arith.constant 0 : i32
    %c0_i32_1 = arith.constant 0 : i32
    return %c0_i32, %c0_i32_0 : i32, i32
  }
  func.func @transform_4(%arg0: i32) -> (i32, i32) {
    %c0_i32 = arith.constant 0 : i32
    %c0_i32_0 = arith.constant 0 : i32
    %c0_i32_1 = arith.constant 0 : i32
    return %c0_i32, %c0_i32_0 : i32, i32
  }
  func.func @transform_5(%arg0: i32) -> (i32, i32) {
    %c0_i32 = arith.constant 0 : i32
    %c0_i32_0 = arith.constant 0 : i32
    %c0_i32_1 = arith.constant 0 : i32
    return %c0_i32, %c0_i32_0 : i32, i32
  }
  func.func @transform_6(%arg0: i32) -> (i32, i32) {
    %c0_i32 = arith.constant 0 : i32
    %c0_i32_0 = arith.constant 0 : i32
    %c0_i32_1 = arith.constant 0 : i32
    return %c0_i32, %c0_i32_0 : i32, i32
  }
  func.func @transform_7(%arg0: i32) -> (i32, i32) {
    %c0_i32 = arith.constant 0 : i32
    %c0_i32_0 = arith.constant 0 : i32
    %c0_i32_1 = arith.constant 0 : i32
    return %c0_i32, %c0_i32_0 : i32, i32
  }
  func.func @transform_8(%arg0: i32) -> (i32, i32) {
    %c0_i32 = arith.constant 0 : i32
    %c0_i32_0 = arith.constant 0 : i32
    %c0_i32_1 = arith.constant 0 : i32
    return %c0_i32, %c0_i32_0 : i32, i32
  }
  func.func @transform_9(%arg0: i32) -> (i32, i32) {
    %c0_i32 = arith.constant 0 : i32
    %c0_i32_0 = arith.constant 0 : i32
    %c0_i32_1 = arith.constant 0 : i32
    return %c0_i32, %c0_i32_0 : i32, i32
  }
  func.func @transform_10(%arg0: i32) -> (i32, i32) {
    %c0_i32 = arith.constant 0 : i32
    %c0_i32_0 = arith.constant 0 : i32
    %c0_i32_1 = arith.constant 0 : i32
    return %c0_i32, %c0_i32_0 : i32, i32
  }
  func.func @transform_11(%arg0: i32) -> (i32, i32) {
    %c0_i32 = arith.constant 0 : i32
    %c0_i32_0 = arith.constant 0 : i32
    %c0_i32_1 = arith.constant 0 : i32
    return %c0_i32, %c0_i32_0 : i32, i32
  }
  func.func @transform_12(%arg0: i32) -> (i32, i32) {
    %c0_i32 = arith.constant 0 : i32
    %c0_i32_0 = arith.constant 0 : i32
    %c0_i32_1 = arith.constant 0 : i32
    return %c0_i32, %c0_i32_0 : i32, i32
  }
  func.func @transform_13(%arg0: i32) -> (i32, i32) {
    %c0_i32 = arith.constant 0 : i32
    %c0_i32_0 = arith.constant 0 : i32
    %c0_i32_1 = arith.constant 0 : i32
    return %c0_i32, %c0_i32_0 : i32, i32
  }
  func.func @transform_14(%arg0: i32) -> (i32, i32, i32) {
    %c0_i32 = arith.constant 0 : i32
    %c0_i32_0 = arith.constant 0 : i32
    %c0_i32_1 = arith.constant 0 : i32
    return %arg0, %c0_i32, %c0_i32_0 : i32, i32, i32
  }
}

</mosaic_0001>

<llo_original>
// kernel: tpu_custom_call.1
$region0: #{tpu_custom_call.1}
  #allocation0 [shape = 'u32[]', space=smem, size = 0x4, offset = 0x4, fixed_abs, tag = 'smem constant byte address 0x4 - core index']
  #allocation1 [shape = 'u32[72,128]{1,0:T(1,128)}', space=vmem, size = 0x9000, scoped, tag = 'internal scratch']
  #allocation2 [shape = 'bf16[8,32]{1,0:T(8,128)(2,1)}', space=vmem, size = 0x800, scoped, tag = 'scratch operand']
  %s0 = inlined_call_operand.vmem [shape: s32[2,1,1], index: 0, kind: input, shape index: {}]
  %s1 = inlined_call_operand.vmem [shape: f32[2,8,32], index: 1, kind: input, shape index: {}]
  %s2 = inlined_call_operand.vmem [shape: bf16[32,32], index: 2, kind: input, shape index: {}]
  %s3 = inlined_call_operand.vmem [shape: bf16[32,32], index: 3, kind: input, shape index: {}]
  %s4 = inlined_call_operand.hbm [shape: bf16[32,32], index: 4, kind: input, shape index: {}]
  %s5 = inlined_call_operand.hbm [shape: bf16[32,32], index: 5, kind: input, shape index: {}]
  %s6 = inlined_call_operand.vmem [shape: f32[1,32], index: 6, kind: input, shape index: {}]
  %s7 = inlined_call_operand.vmem [shape: f32[1,32], index: 7, kind: input, shape index: {}]
  %s8 = inlined_call_operand.hbm [shape: bf16[32,64], index: 8, kind: input, shape index: {}]
  %s9 = inlined_call_operand.vmem [shape: f32[1,64], index: 9, kind: input, shape index: {}]
  %s10 = inlined_call_operand.vmem [shape: bf16[64,32], index: 10, kind: input, shape index: {}]
  %s11 = inlined_call_operand.vmem [shape: f32[1,32], index: 11, kind: input, shape index: {}]
  %s12 = inlined_call_operand.vmem [shape: f32[1,32], index: 12, kind: input, shape index: {}]
  %s13 = inlined_call_operand.vmem [shape: f32[1,32], index: 13, kind: input, shape index: {}]
  %s14 = inlined_call_operand.hbm [shape: f32[2,8,32], index: 14, kind: output, shape index: {}]
  %s15 = sld [smem:[#allocation0]]
  $region101: #{tpu_custom_call.1} parent=0
    _
  %s17 = ssub.s32 1, %s15
  %s18 = scalar_select 0, %s17, %s15
  $region1: #{tpu_custom_call.1} parent=0
    #allocation3 [shape = 'u8[8192]{0}', space=vmem, size = 0x2000, scoped, tag = 'input window, operand 4, single buffered']
    #allocation4 [shape = 's32[2]{0}', space=sflag, size = 0x8, scoped, tag = 'scoped memory for tpu_custom_call.1']
    #allocation5 [shape = 's32[2]{0}', space=sflag, size = 0x8, scoped, tag = 'scoped memory for tpu_custom_call.1']
    #allocation6 [shape = 'u8[8192]{0}', space=vmem, size = 0x2000, scoped, tag = 'input window, operand 5, single buffered']
    #allocation7 [shape = 's32[1]{0}', space=sflag, size = 0x4, scoped, tag = 'scoped memory for tpu_custom_call.1']
    #allocation8 [shape = 'u8[8192]{0}', space=vmem, size = 0x2000, scoped, tag = 'input window, operand 8, single buffered']
    #allocation9 [shape = 'u8[8192]{0}', space=vmem, size = 0x2000, scoped, tag = 'output window, operand 0']
    %19 = vsyncpa [#allocation4], 0
    %20 = vsyncpa [#allocation7], 0
    %21 = vsyncpa [#allocation5], 0
    %s22 = scalar_lea.sflag [#allocation5], 1
    %23 = vsyncpa %s22, 0
    loop: start=0, step=1, limit=4
    $region2: #{tpu_custom_call.1} parent=1 // loop_pre_header
      _
    $region3: #{tpu_custom_call.1} parent=1 // loop_header
      %s25 = sphi 0, %s29
      %p26 = scmp.ge.s32.totalorder %s25, 4
      %s35 = sphi 0, %s37
      %s38 = sphi 0, %s35
      %s39 = sphi 0, %s38
      %s55 = sphi 0, %s39
      %s61 = sphi 0, %s63
      %s64 = sphi 0, %s61
      %s65 = sphi 0, %s64
      %s81 = sphi 0, %s65
      %s85 = sphi 0, %s85
      %s87 = sphi 0, %s85
      %s88 = sphi 0, %s87
      %s102 = sphi 0, %s88
      %s106 = sphi 0, %s106
      %s108 = sphi 0, %s106
      %s109 = sphi 0, %s108
      %s123 = sphi 0, %s109
      %s127 = sphi 0, %s127
      %s129 = sphi 0, %s127
      %s130 = sphi 0, %s129
      %s144 = sphi 0, %s130
      %s148 = sphi 0, %s148
      %s150 = sphi 0, %s148
      %s151 = sphi 0, %s150
      %s165 = sphi 0, %s151
      %s169 = sphi 0, %s169
      %s171 = sphi 0, %s169
      %s172 = sphi 0, %s171
      %s186 = sphi 0, %s172
      %s190 = sphi 0, %s190
      %s192 = sphi 0, %s190
      %s193 = sphi 0, %s192
      %s207 = sphi 0, %s193
      %s211 = sphi 0, %s211
      %s213 = sphi 0, %s211
      %s214 = sphi 0, %s213
      %s228 = sphi 0, %s214
      %s232 = sphi 0, %s232
      %s234 = sphi 0, %s232
      %s235 = sphi 0, %s234
      %s249 = sphi 0, %s235
      %s253 = sphi 0, %s253
      %s255 = sphi 0, %s253
      %s256 = sphi 0, %s255
      %s270 = sphi 0, %s256
      %s274 = sphi 0, %s274
      %s276 = sphi 0, %s274
      %s277 = sphi 0, %s276
      %s291 = sphi 0, %s277
      %s295 = sphi 0, %s295
      %s297 = sphi 0, %s295
      %s298 = sphi 0, %s297
      %s312 = sphi 0, %s298
      %s316 = sphi 0, %s316
      %s318 = sphi 0, %s316
      %s319 = sphi 0, %s318
      %s333 = sphi 0, %s319
      %s339 = sphi 0, %s341
      %s342 = sphi 0, %s339
      %s343 = sphi 0, %s342
      %s359 = sphi 0, %s343
    $region4: #{tpu_custom_call.1} parent=1 // loop_header_branch
      %28 = sbr.rel (%p26) target = $region8
    $region5: #{tpu_custom_call.1} parent=1 // loop_body
      %s30 = ssub.s32 %s25, 1
      %s31 = ssub.s32 %s25, 2
      %s32 = sadd.s32 %s25, 1
      %s33 = ssub.s32 %s25, %s32
      %p34 = scmp.eq.s32.totalorder %s33, 0
      %s36 = sadd.s32 %s35, 1
      %s37 = scalar_select %p34, %s35, %s36
      %p40 = pneg %p34
      %p41 = scmp.eq.s32.totalorder %s25, 1
      %p42 = por %p40, %p41
      %p43 = scmp.ne.s32.totalorder %s35, %s38
      %p44 = scmp.eq.s32.totalorder %s25, 0
      %p45 = por %p43, %p44
      %p46 = scmp.ne.s32.totalorder %s35, %s38
      %p47 = scmp.eq.s32.totalorder %s30, 1
      %p48 = por %p46, %p47
      %p49 = scmp.ne.s32.totalorder %s38, %s39
      %p50 = scmp.eq.s32.totalorder %s30, 0
      %p51 = por %p49, %p50
      %p52 = scmp.ne.s32.totalorder %s38, %s39
      %p53 = scmp.eq.s32.totalorder %s31, 1
      %p54 = por %p52, %p53
      %p56 = scmp.ne.s32.totalorder %s39, %s55
      %p57 = scmp.eq.s32.totalorder %s31, 0
      %p58 = por %p56, %p57
      %s59 = ssub.s32 %s25, %s32
      %p60 = scmp.eq.s32.totalorder %s59, 0
      %s62 = sadd.s32 %s61, 1
      %s63 = scalar_select %p60, %s61, %s62
      %p66 = pneg %p60
      %p67 = scmp.eq.s32.totalorder %s25, 1
      %p68 = por %p66, %p67
      %p69 = scmp.ne.s32.totalorder %s61, %s64
      %p70 = scmp.eq.s32.totalorder %s25, 0
      %p71 = por %p69, %p70
      %p72 = scmp.ne.s32.totalorder %s61, %s64
      %p73 = scmp.eq.s32.totalorder %s30, 1
      %p74 = por %p72, %p73
      %p75 = scmp.ne.s32.totalorder %s64, %s65
      %p76 = scmp.eq.s32.totalorder %s30, 0
      %p77 = por %p75, %p76
      %p78 = scmp.ne.s32.totalorder %s64, %s65
      %p79 = scmp.eq.s32.totalorder %s31, 1
      %p80 = por %p78, %p79
      %p82 = scmp.ne.s32.totalorder %s65, %s81
      %p83 = scmp.eq.s32.totalorder %s31, 0
      %p84 = por %p82, %p83
      %s86 = sadd.s32 %s85, 1
      %p89 = scmp.eq.s32.totalorder %s25, 1
      %p90 = scmp.ne.s32.totalorder %s85, %s87
      %p91 = scmp.eq.s32.totalorder %s25, 0
      %p92 = por %p90, %p91
      %p93 = scmp.ne.s32.totalorder %s85, %s87
      %p94 = scmp.eq.s32.totalorder %s30, 1
      %p95 = por %p93, %p94
      %p96 = scmp.ne.s32.totalorder %s87, %s88
      %p97 = scmp.eq.s32.totalorder %s30, 0
      %p98 = por %p96, %p97
      %p99 = scmp.ne.s32.totalorder %s87, %s88
      %p100 = scmp.eq.s32.totalorder %s31, 1
      %p101 = por %p99, %p100
      %p103 = scmp.ne.s32.totalorder %s88, %s102
      %p104 = scmp.eq.s32.totalorder %s31, 0
      %p105 = por %p103, %p104
      %s107 = sadd.s32 %s106, 1
      %p110 = scmp.eq.s32.totalorder %s25, 1
      %p111 = scmp.ne.s32.totalorder %s106, %s108
      %p112 = scmp.eq.s32.totalorder %s25, 0
      %p113 = por %p111, %p112
      %p114 = scmp.ne.s32.totalorder %s106, %s108
      %p115 = scmp.eq.s32.totalorder %s30, 1
      %p116 = por %p114, %p115
      %p117 = scmp.ne.s32.totalorder %s108, %s109
      %p118 = scmp.eq.s32.totalorder %s30, 0
      %p119 = por %p117, %p118
      %p120 = scmp.ne.s32.totalorder %s108, %s109
      %p121 = scmp.eq.s32.totalorder %s31, 1
      %p122 = por %p120, %p121
      %p124 = scmp.ne.s32.totalorder %s109, %s123
      %p125 = scmp.eq.s32.totalorder %s31, 0
      %p126 = por %p124, %p125
      %s128 = sadd.s32 %s127, 1
      %p131 = scmp.eq.s32.totalorder %s25, 1
      %p132 = scmp.ne.s32.totalorder %s127, %s129
      %p133 = scmp.eq.s32.totalorder %s25, 0
      %p134 = por %p132, %p133
      %p135 = scmp.ne.s32.totalorder %s127, %s129
      %p136 = scmp.eq.s32.totalorder %s30, 1
      %p137 = por %p135, %p136
      %p138 = scmp.ne.s32.totalorder %s129, %s130
      %p139 = scmp.eq.s32.totalorder %s30, 0
      %p140 = por %p138, %p139
      %p141 = scmp.ne.s32.totalorder %s129, %s130
      %p142 = scmp.eq.s32.totalorder %s31, 1
      %p143 = por %p141, %p142
      %p145 = scmp.ne.s32.totalorder %s130, %s144
      %p146 = scmp.eq.s32.totalorder %s31, 0
      %p147 = por %p145, %p146
      %s149 = sadd.s32 %s148, 1
      %p152 = scmp.eq.s32.totalorder %s25, 1
      %p153 = scmp.ne.s32.totalorder %s148, %s150
      %p154 = scmp.eq.s32.totalorder %s25, 0
      %p155 = por %p153, %p154
      %p156 = scmp.ne.s32.totalorder %s148, %s150
      %p157 = scmp.eq.s32.totalorder %s30, 1
      %p158 = por %p156, %p157
      %p159 = scmp.ne.s32.totalorder %s150, %s151
      %p160 = scmp.eq.s32.totalorder %s30, 0
      %p161 = por %p159, %p160
      %p162 = scmp.ne.s32.totalorder %s150, %s151
      %p163 = scmp.eq.s32.totalorder %s31, 1
      %p164 = por %p162, %p163
      %p166 = scmp.ne.s32.totalorder %s151, %s165
      %p167 = scmp.eq.s32.totalorder %s31, 0
      %p168 = por %p166, %p167
      %s170 = sadd.s32 %s169, 1
      %p173 = scmp.eq.s32.totalorder %s25, 1
      %p174 = scmp.ne.s32.totalorder %s169, %s171
      %p175 = scmp.eq.s32.totalorder %s25, 0
      %p176 = por %p174, %p175
      %p177 = scmp.ne.s32.totalorder %s169, %s171
      %p178 = scmp.eq.s32.totalorder %s30, 1
      %p179 = por %p177, %p178
      %p180 = scmp.ne.s32.totalorder %s171, %s172
      %p181 = scmp.eq.s32.totalorder %s30, 0
      %p182 = por %p180, %p181
      %p183 = scmp.ne.s32.totalorder %s171, %s172
      %p184 = scmp.eq.s32.totalorder %s31, 1
      %p185 = por %p183, %p184
      %p187 = scmp.ne.s32.totalorder %s172, %s186
      %p188 = scmp.eq.s32.totalorder %s31, 0
      %p189 = por %p187, %p188
      %s191 = sadd.s32 %s190, 1
      %p194 = scmp.eq.s32.totalorder %s25, 1
      %p195 = scmp.ne.s32.totalorder %s190, %s192
      %p196 = scmp.eq.s32.totalorder %s25, 0
      %p197 = por %p195, %p196
      %p198 = scmp.ne.s32.totalorder %s190, %s192
      %p199 = scmp.eq.s32.totalorder %s30, 1
      %p200 = por %p198, %p199
      %p201 = scmp.ne.s32.totalorder %s192, %s193
      %p202 = scmp.eq.s32.totalorder %s30, 0
      %p203 = por %p201, %p202
      %p204 = scmp.ne.s32.totalorder %s192, %s193
      %p205 = scmp.eq.s32.totalorder %s31, 1
      %p206 = por %p204, %p205
      %p208 = scmp.ne.s32.totalorder %s193, %s207
      %p209 = scmp.eq.s32.totalorder %s31, 0
      %p210 = por %p208, %p209
      %s212 = sadd.s32 %s211, 1
      %p215 = scmp.eq.s32.totalorder %s25, 1
      %p216 = scmp.ne.s32.totalorder %s211, %s213
      %p217 = scmp.eq.s32.totalorder %s25, 0
      %p218 = por %p216, %p217
      %p219 = scmp.ne.s32.totalorder %s211, %s213
      %p220 = scmp.eq.s32.totalorder %s30, 1
      %p221 = por %p219, %p220
      %p222 = scmp.ne.s32.totalorder %s213, %s214
      %p223 = scmp.eq.s32.totalorder %s30, 0
      %p224 = por %p222, %p223
      %p225 = scmp.ne.s32.totalorder %s213, %s214
      %p226 = scmp.eq.s32.totalorder %s31, 1
      %p227 = por %p225, %p226
      %p229 = scmp.ne.s32.totalorder %s214, %s228
      %p230 = scmp.eq.s32.totalorder %s31, 0
      %p231 = por %p229, %p230
      %s233 = sadd.s32 %s232, 1
      %p236 = scmp.eq.s32.totalorder %s25, 1
      %p237 = scmp.ne.s32.totalorder %s232, %s234
      %p238 = scmp.eq.s32.totalorder %s25, 0
      %p239 = por %p237, %p238
      %p240 = scmp.ne.s32.totalorder %s232, %s234
      %p241 = scmp.eq.s32.totalorder %s30, 1
      %p242 = por %p240, %p241
      %p243 = scmp.ne.s32.totalorder %s234, %s235
      %p244 = scmp.eq.s32.totalorder %s30, 0
      %p245 = por %p243, %p244
      %p246 = scmp.ne.s32.totalorder %s234, %s235
      %p247 = scmp.eq.s32.totalorder %s31, 1
      %p248 = por %p246, %p247
      %p250 = scmp.ne.s32.totalorder %s235, %s249
      %p251 = scmp.eq.s32.totalorder %s31, 0
      %p252 = por %p250, %p251
      %s254 = sadd.s32 %s253, 1
      %p257 = scmp.eq.s32.totalorder %s25, 1
      %p258 = scmp.ne.s32.totalorder %s253, %s255
      %p259 = scmp.eq.s32.totalorder %s25, 0
      %p260 = por %p258, %p259
      %p261 = scmp.ne.s32.totalorder %s253, %s255
      %p262 = scmp.eq.s32.totalorder %s30, 1
      %p263 = por %p261, %p262
      %p264 = scmp.ne.s32.totalorder %s255, %s256
      %p265 = scmp.eq.s32.totalorder %s30, 0
      %p266 = por %p264, %p265
      %p267 = scmp.ne.s32.totalorder %s255, %s256
      %p268 = scmp.eq.s32.totalorder %s31, 1
      %p269 = por %p267, %p268
      %p271 = scmp.ne.s32.totalorder %s256, %s270
      %p272 = scmp.eq.s32.totalorder %s31, 0
      %p273 = por %p271, %p272
      %s275 = sadd.s32 %s274, 1
      %p278 = scmp.eq.s32.totalorder %s25, 1
      %p279 = scmp.ne.s32.totalorder %s274, %s276
      %p280 = scmp.eq.s32.totalorder %s25, 0
      %p281 = por %p279, %p280
      %p282 = scmp.ne.s32.totalorder %s274, %s276
      %p283 = scmp.eq.s32.totalorder %s30, 1
      %p284 = por %p282, %p283
      %p285 = scmp.ne.s32.totalorder %s276, %s277
      %p286 = scmp.eq.s32.totalorder %s30, 0
      %p287 = por %p285, %p286
      %p288 = scmp.ne.s32.totalorder %s276, %s277
      %p289 = scmp.eq.s32.totalorder %s31, 1
      %p290 = por %p288, %p289
      %p292 = scmp.ne.s32.totalorder %s277, %s291
      %p293 = scmp.eq.s32.totalorder %s31, 0
      %p294 = por %p292, %p293
      %s296 = sadd.s32 %s295, 1
      %p299 = scmp.eq.s32.totalorder %s25, 1
      %p300 = scmp.ne.s32.totalorder %s295, %s297
      %p301 = scmp.eq.s32.totalorder %s25, 0
      %p302 = por %p300, %p301
      %p303 = scmp.ne.s32.totalorder %s295, %s297
      %p304 = scmp.eq.s32.totalorder %s30, 1
      %p305 = por %p303, %p304
      %p306 = scmp.ne.s32.totalorder %s297, %s298
      %p307 = scmp.eq.s32.totalorder %s30, 0
      %p308 = por %p306, %p307
      %p309 = scmp.ne.s32.totalorder %s297, %s298
      %p310 = scmp.eq.s32.totalorder %s31, 1
      %p311 = por %p309, %p310
      %p313 = scmp.ne.s32.totalorder %s298, %s312
      %p314 = scmp.eq.s32.totalorder %s31, 0
      %p315 = por %p313, %p314
      %s317 = sadd.s32 %s316, 1
      %p320 = scmp.eq.s32.totalorder %s25, 1
      %p321 = scmp.ne.s32.totalorder %s316, %s318
      %p322 = scmp.eq.s32.totalorder %s25, 0
      %p323 = por %p321, %p322
      %p324 = scmp.ne.s32.totalorder %s316, %s318
      %p325 = scmp.eq.s32.totalorder %s30, 1
      %p326 = por %p324, %p325
      %p327 = scmp.ne.s32.totalorder %s318, %s319
      %p328 = scmp.eq.s32.totalorder %s30, 0
      %p329 = por %p327, %p328
      %p330 = scmp.ne.s32.totalorder %s318, %s319
      %p331 = scmp.eq.s32.totalorder %s31, 1
      %p332 = por %p330, %p331
      %p334 = scmp.ne.s32.totalorder %s319, %s333
      %p335 = scmp.eq.s32.totalorder %s31, 0
      %p336 = por %p334, %p335
      %s337 = ssub.s32 %s25, %s32
      %p338 = scmp.eq.s32.totalorder %s337, 0
      %s340 = sadd.s32 %s339, 1
      %s341 = scalar_select %p338, %s339, %s340
      %p344 = pneg %p338
      %p345 = scmp.eq.s32.totalorder %s25, 1
      %p346 = por %p344, %p345
      %p347 = scmp.ne.s32.totalorder %s339, %s342
      %p348 = scmp.eq.s32.totalorder %s25, 0
      %p349 = por %p347, %p348
      %p350 = scmp.ne.s32.totalorder %s339, %s342
      %p351 = scmp.eq.s32.totalorder %s30, 1
      %p352 = por %p350, %p351
      %p353 = scmp.ne.s32.totalorder %s342, %s343
      %p354 = scmp.eq.s32.totalorder %s30, 0
      %p355 = por %p353, %p354
      %p356 = scmp.ne.s32.totalorder %s342, %s343
      %p357 = scmp.eq.s32.totalorder %s31, 1
      %p358 = por %p356, %p357
      %p360 = scmp.ne.s32.totalorder %s343, %s359
      %p361 = scmp.eq.s32.totalorder %s31, 0
      %p362 = por %p360, %p361
      %p363 = scmp.le.s32.totalorder 1, %s25
      %p364 = scmp.lt.s32.totalorder %s25, 3
      %p365 = pnand %p363, %p364
      %p366 = pneg %p365
      // Predicated region
      $region9: #{tpu_custom_call.1} parent=5 // pred_check
        _
      $region10: #{tpu_custom_call.1} parent=5 // pred_check_branch
        %368 = sbr.rel (%p365) target = $region12
      $region11: #{tpu_custom_call.1} parent=5 // pred_region
        %s369 = ssub.s32 %s25, 1
        // Predicated region
        $region13: #{tpu_custom_call.1} parent=11 // pred_check
          %p370 = pneg %p98
        $region14: #{tpu_custom_call.1} parent=11 // pred_check_branch
          %372 = sbr.rel (%p370) target = $region16
        $region15: #{tpu_custom_call.1} parent=11 // pred_region
          _
        $region16: #{tpu_custom_call.1} parent=11 // pred_fallthru
          _
        // Predicated region
        $region17: #{tpu_custom_call.1} parent=11 // pred_check
          %p373 = pneg %p119
        $region18: #{tpu_custom_call.1} parent=11 // pred_check_branch
          %375 = sbr.rel (%p373) target = $region20
        $region19: #{tpu_custom_call.1} parent=11 // pred_region
          _
        $region20: #{tpu_custom_call.1} parent=11 // pred_fallthru
          _
        // Predicated region
        $region21: #{tpu_custom_call.1} parent=11 // pred_check
          %p376 = pneg %p140
        $region22: #{tpu_custom_call.1} parent=11 // pred_check_branch
          %378 = sbr.rel (%p376) target = $region24
        $region23: #{tpu_custom_call.1} parent=11 // pred_region
          %380 = vsyncadd [#allocation4], 0
          %s381 = sshll.u32 %s4, 4
          %s382 = int_to_ptr.hbm [resolvable:$true] %s381
          %s383 = sshll.u32 [#allocation3], 4
          %s384 = int_to_ptr.vmem [resolvable:$true] %s383
          %389 = dma.hbm_to_vmem [thread:$0]  %s382, 256, %s384, [#allocation4], 64, 64, 4
        $region24: #{tpu_custom_call.1} parent=11 // pred_fallthru
          _
        // Predicated region
        $region25: #{tpu_custom_call.1} parent=11 // pred_check
          %p390 = pneg %p161
        $region26: #{tpu_custom_call.1} parent=11 // pred_check_branch
          %392 = sbr.rel (%p390) target = $region28
        $region27: #{tpu_custom_call.1} parent=11 // pred_region
          %394 = vsyncadd [#allocation7], 0
          %s395 = sshll.u32 %s5, 4
          %s396 = int_to_ptr.hbm [resolvable:$true] %s395
          %s397 = sshll.u32 [#allocation6], 4
          %s398 = int_to_ptr.vmem [resolvable:$true] %s397
          %403 = dma.hbm_to_vmem [thread:$0]  %s396, 256, %s398, [#allocation7], 64, 64, 4
        $region28: #{tpu_custom_call.1} parent=11 // pred_fallthru
          _
        // Predicated region
        $region29: #{tpu_custom_call.1} parent=11 // pred_check
          %p404 = pneg %p182
        $region30: #{tpu_custom_call.1} parent=11 // pred_check_branch
          %406 = sbr.rel (%p404) target = $region32
        $region31: #{tpu_custom_call.1} parent=11 // pred_region
          _
        $region32: #{tpu_custom_call.1} parent=11 // pred_fallthru
          _
        // Predicated region
        $region33: #{tpu_custom_call.1} parent=11 // pred_check
          %p407 = pneg %p203
        $region34: #{tpu_custom_call.1} parent=11 // pred_check_branch
          %409 = sbr.rel (%p407) target = $region36
        $region35: #{tpu_custom_call.1} parent=11 // pred_region
          _
        $region36: #{tpu_custom_call.1} parent=11 // pred_fallthru
          _
        // Predicated region
        $region37: #{tpu_custom_call.1} parent=11 // pred_check
          %p410 = pneg %p224
        $region38: #{tpu_custom_call.1} parent=11 // pred_check_branch
          %412 = sbr.rel (%p410) target = $region40
        $region39: #{tpu_custom_call.1} parent=11 // pred_region
          %414 = vsyncadd [#allocation7], 0
          %s415 = sshll.u32 %s8, 4
          %s416 = int_to_ptr.hbm [resolvable:$true] %s415
          %s417 = sshll.u32 [#allocation8], 4
          %s418 = int_to_ptr.vmem [resolvable:$true] %s417
          %423 = dma.hbm_to_vmem [thread:$0]  %s416, 256, %s418, [#allocation7], 64, 64, 4
        $region40: #{tpu_custom_call.1} parent=11 // pred_fallthru
          _
        // Predicated region
        $region41: #{tpu_custom_call.1} parent=11 // pred_check
          %p424 = pneg %p245
        $region42: #{tpu_custom_call.1} parent=11 // pred_check_branch
          %426 = sbr.rel (%p424) target = $region44
        $region43: #{tpu_custom_call.1} parent=11 // pred_region
          _
        $region44: #{tpu_custom_call.1} parent=11 // pred_fallthru
          _
        // Predicated region
        $region45: #{tpu_custom_call.1} parent=11 // pred_check
          %p427 = pneg %p266
        $region46: #{tpu_custom_call.1} parent=11 // pred_check_branch
          %429 = sbr.rel (%p427) target = $region48
        $region47: #{tpu_custom_call.1} parent=11 // pred_region
          _
        $region48: #{tpu_custom_call.1} parent=11 // pred_fallthru
          _
        // Predicated region
        $region49: #{tpu_custom_call.1} parent=11 // pred_check
          %p430 = pneg %p287
        $region50: #{tpu_custom_call.1} parent=11 // pred_check_branch
          %432 = sbr.rel (%p430) target = $region52
        $region51: #{tpu_custom_call.1} parent=11 // pred_region
          _
        $region52: #{tpu_custom_call.1} parent=11 // pred_fallthru
          _
        // Predicated region
        $region53: #{tpu_custom_call.1} parent=11 // pred_check
          %p433 = pneg %p308
        $region54: #{tpu_custom_call.1} parent=11 // pred_check_branch
          %435 = sbr.rel (%p433) target = $region56
        $region55: #{tpu_custom_call.1} parent=11 // pred_region
          _
        $region56: #{tpu_custom_call.1} parent=11 // pred_fallthru
          _
        // Predicated region
        $region57: #{tpu_custom_call.1} parent=11 // pred_check
          %p436 = pneg %p329
        $region58: #{tpu_custom_call.1} parent=11 // pred_check_branch
          %438 = sbr.rel (%p436) target = $region60
        $region59: #{tpu_custom_call.1} parent=11 // pred_region
          _
        $region60: #{tpu_custom_call.1} parent=11 // pred_fallthru
          _
      $region12: #{tpu_custom_call.1} parent=5 // pred_fallthru
        _
      %p439 = scmp.lt.s32.totalorder %s25, 2
      // Predicated region
      $region61: #{tpu_custom_call.1} parent=5 // pred_check
        %p440 = pneg %p439
      $region62: #{tpu_custom_call.1} parent=5 // pred_check_branch
        %442 = sbr.rel (%p440) target = $region64
      $region63: #{tpu_custom_call.1} parent=5 // pred_region
        // Predicated region
        $region65: #{tpu_custom_call.1} parent=63 // pred_check
          %p443 = pneg %p45
        $region66: #{tpu_custom_call.1} parent=63 // pred_check_branch
          %445 = sbr.rel (%p443) target = $region68
        $region67: #{tpu_custom_call.1} parent=63 // pred_region
          %p446 = scmp.lt.s32.totalorder %s25, 1
          %s447 = scalar_select %p446, %s25, 1
          %s448 = scalar_lea.vmem %s0, %s447
        $region68: #{tpu_custom_call.1} parent=63 // pred_fallthru
          _
        // Predicated region
        $region69: #{tpu_custom_call.1} parent=63 // pred_check
          %p449 = pneg %p71
        $region70: #{tpu_custom_call.1} parent=63 // pred_check_branch
          %451 = sbr.rel (%p449) target = $region72
        $region71: #{tpu_custom_call.1} parent=63 // pred_region
          %p452 = scmp.lt.s32.totalorder %s25, 1
          %s453 = scalar_select %p452, %s25, 1
          %s454 = smul.addr %s453, 8
          %s455 = scalar_lea.vmem %s1, %s454
        $region72: #{tpu_custom_call.1} parent=63 // pred_fallthru
          _
      $region64: #{tpu_custom_call.1} parent=5 // pred_fallthru
        _
      %p456 = scmp.le.s32.totalorder 1, %s25
      %p457 = scmp.lt.s32.totalorder %s25, 3
      %p458 = pnand %p456, %p457
      %p459 = pneg %p458
      // Predicated region
      $region73: #{tpu_custom_call.1} parent=5 // pred_check
        _
      $region74: #{tpu_custom_call.1} parent=5 // pred_check_branch
        %461 = sbr.rel (%p458) target = $region76
      $region75: #{tpu_custom_call.1} parent=5 // pred_region
        %s462 = ssub.s32 %s25, 1
        // Predicated region
        $region77: #{tpu_custom_call.1} parent=75 // pred_check
          %p463 = pneg %p140
        $region78: #{tpu_custom_call.1} parent=75 // pred_check_branch
          %465 = sbr.rel (%p463) target = $region80
        $region79: #{tpu_custom_call.1} parent=75 // pred_region
          %467 = dma.done [#allocation4], 256
        $region80: #{tpu_custom_call.1} parent=75 // pred_fallthru
          _
        // Predicated region
        $region81: #{tpu_custom_call.1} parent=75 // pred_check
          %p468 = pneg %p161
        $region82: #{tpu_custom_call.1} parent=75 // pred_check_branch
          %470 = sbr.rel (%p468) target = $region84
        $region83: #{tpu_custom_call.1} parent=75 // pred_region
          %472 = dma.done [#allocation7], 256
        $region84: #{tpu_custom_call.1} parent=75 // pred_fallthru
          _
        // Predicated region
        $region85: #{tpu_custom_call.1} parent=75 // pred_check
          %p473 = pneg %p224
        $region86: #{tpu_custom_call.1} parent=75 // pred_check_branch
          %475 = sbr.rel (%p473) target = $region88
        $region87: #{tpu_custom_call.1} parent=75 // pred_region
          %477 = dma.done [#allocation7], 256
        $region88: #{tpu_custom_call.1} parent=75 // pred_fallthru
          _
        %p478 = scmp.lt.s32.totalorder %s30, 1
        %s479 = scalar_select %p478, %s30, 1
        %s480 = scalar_lea.vmem %s0, %s479
        %p481 = pneg %p51
        %p482 = pneg %p48
        %p483 = scmp.lt.s32.totalorder %s30, 1
        %s484 = scalar_select %p483, %s30, 1
        %s485 = smul.addr %s484, 8
        %s486 = scalar_lea.vmem %s1, %s485
        %p487 = pneg %p77
        %p488 = pneg %p74
        %p489 = pneg %p98
        %p490 = pneg %p95
        %p491 = pneg %p119
        %p492 = pneg %p116
        %p493 = pneg %p140
        %p494 = pneg %p137
        %p495 = pneg %p161
        %p496 = pneg %p158
        %p497 = pneg %p182
        %p498 = pneg %p179
        %p499 = pneg %p203
        %p500 = pneg %p200
        %p501 = pneg %p224
        %p502 = pneg %p221
        %p503 = pneg %p245
        %p504 = pneg %p242
        %p505 = pneg %p266
        %p506 = pneg %p263
        %p507 = pneg %p287
        %p508 = pneg %p284
        %p509 = pneg %p308
        %p510 = pneg %p305
        %p511 = pneg %p329
        %p512 = pneg %p326
        %p513 = pneg %p355
        %p514 = pneg %p352
        %s515 = sand.u32 %s342, 1
        %s516 = scalar_lea.sflag [#allocation5], %s515
        %s517 = sand.u32 %s342, 1
        %s518 = smul.addr %s517, 8
        %s519 = scalar_lea.vmem [#allocation9], %s518
        %p520 = scmp.lt.s32.totalorder %s30, 1
        %s521 = scalar_select %p520, %s30, 1
        %s522 = scalar_lea.vmem %s0, %s521
        %p523 = scmp.lt.s32.totalorder %s30, 1
        %s524 = scalar_select %p523, %s30, 1
        %s525 = smul.addr %s524, 8
        %s526 = scalar_lea.vmem %s1, %s525
        %v528 = vld [vmem:[%s526] sm:$0xff]
        %v529 = vpack.c.bf16 %v528, %v528
        %v530 = vld [vmem:[%s2] sm:$0xf]
        %v531 = vld [vmem:[%s2 + $0x4] sm:$0xf]
        %v532 = vld [vmem:[%s2 + $0x8] sm:$0xf]
        %v533 = vld [vmem:[%s2 + $0xc] sm:$0xf]
        %v538 = vunpack.c.l.b16 %v530
        %v539 = vunpack.c.l.b16 %v531
        %v540 = vunpack.c.l.b16 %v532
        %v541 = vunpack.c.l.b16 %v533
        %v542 = vpack.c.b16 %v539, %v538
        %v543 = vpack.c.b16 %v541, %v540
        %vm546 = vcmask 261120
        %v548 = vsel %vm546, %v529, 0
        %550 = vmatpush.bf16.msra.mxu0 0
        %551 = vmatpush.bf16.msra.mxu0 0
        %552 = vmatpush.bf16.msra.mxu0 0
        %553 = vmatpush.bf16.msra.mxu0 0
        %554 = vmatpush.bf16.msra.mxu0 0
        %555 = vmatpush.bf16.msra.mxu0 0
        %556 = vmatpush.bf16.msra.mxu0 %v543
        %557 = vmatpush.bf16.msra.mxu0 %v542
        %558 = vmatmul.bf16.gmra.mxu0 %v548
        %v559 = vpop.f32.mrf.mxu0
        %v560 = vadd.f32 0.0, %v559
        %v561 = vpop.f32.mrf.mxu0
        %562 = vdwg.mxu0
        %v563 = vld [vmem:[%s3] sm:$0xf]
        %v564 = vld [vmem:[%s3 + $0x4] sm:$0xf]
        %v565 = vld [vmem:[%s3 + $0x8] sm:$0xf]
        %v566 = vld [vmem:[%s3 + $0xc] sm:$0xf]
        %v571 = vunpack.c.l.b16 %v563
        %v572 = vunpack.c.l.b16 %v564
        %v573 = vunpack.c.l.b16 %v565
        %v574 = vunpack.c.l.b16 %v566
        %v575 = vpack.c.b16 %v572, %v571
        %v576 = vpack.c.b16 %v574, %v573
        %579 = vmatpush.bf16.msra.mxu0 0
        %580 = vmatpush.bf16.msra.mxu0 0
        %581 = vmatpush.bf16.msra.mxu0 0
        %582 = vmatpush.bf16.msra.mxu0 0
        %583 = vmatpush.bf16.msra.mxu0 0
        %584 = vmatpush.bf16.msra.mxu0 0
        %585 = vmatpush.bf16.msra.mxu0 %v576
        %586 = vmatpush.bf16.msra.mxu0 %v575
        %587 = vmatmul.bf16.gmra.mxu0 %v548
        %v588 = vpop.f32.mrf.mxu0
        %v589 = vadd.f32 0.0, %v588
        %v590 = vpop.f32.mrf.mxu0
        %591 = vdwg.mxu0
        %v592 = vld [vmem:[#allocation3] sm:$0xf]
        %v593 = vld [vmem:[#allocation3 + $0x4] sm:$0xf]
        %v594 = vld [vmem:[#allocation3 + $0x8] sm:$0xf]
        %v595 = vld [vmem:[#allocation3 + $0xc] sm:$0xf]
        %v600 = vunpack.c.l.b16 %v592
        %v601 = vunpack.c.l.b16 %v593
        %v602 = vunpack.c.l.b16 %v594
        %v603 = vunpack.c.l.b16 %v595
        %v604 = vpack.c.b16 %v601, %v600
        %v605 = vpack.c.b16 %v603, %v602
        %608 = vmatpush.bf16.msra.mxu0 0
        %609 = vmatpush.bf16.msra.mxu0 0
        %610 = vmatpush.bf16.msra.mxu0 0
        %611 = vmatpush.bf16.msra.mxu0 0
        %612 = vmatpush.bf16.msra.mxu0 0
        %613 = vmatpush.bf16.msra.mxu0 0
        %614 = vmatpush.bf16.msra.mxu0 %v605
        %615 = vmatpush.bf16.msra.mxu0 %v604
        %616 = vmatmul.bf16.gmra.mxu0 %v548
        %v617 = vpop.f32.mrf.mxu0
        %v618 = vadd.f32 0.0, %v617
        %v619 = vpop.f32.mrf.mxu0
        %620 = vdwg.mxu0
        %v621 = vlaneseq
        %v622 = vand.u32 %v621, 127
        %v623 = vld [vmem:[%s522] sm:$0x1]
        %624 = vset.pattern.permute.xlu0 0
        %625 = vperm.xlu0 %624, %v623
        %v626 = vpop.permute.xlu0 %625
        %v627 = vperm.slane %v626, 0
        %vm628 = vcmp.lt.s32.totalorder %v622, %v627
        %v629 = vsel %vm628, 0.0, -1000000.0
        %v630 = vpack.c.bf16 %v560, %v560
        %v631 = vpack.c.bf16 %v589, %v589
        %v632 = vpack.c.bf16 %v618, %v618
        %vm633 = vcmask 64512
        %v635 = vsel %vm633, %v630, 0
        %v638 = vsel %vm633, %v631, 0
        %640 = vmatpush.bf16.xpose.msra.mxu0 0
        %641 = vmatpush.bf16.xpose.msra.mxu0 0
        %642 = vmatpush.bf16.xpose.msra.mxu0 0
        %643 = vmatpush.bf16.xpose.msra.mxu0 0
        %644 = vmatpush.bf16.xpose.msra.mxu0 0
        %645 = vmatpush.bf16.xpose.msra.mxu0 0
        %646 = vmatpush.bf16.xpose.msra.mxu0 0
        %647 = vmatpush.bf16.xpose.msra.mxu0 %v638
        %648 = vmatmul.bf16.gmra.mxu0 %v635
        %v649 = vpop.f32.mrf.mxu0
        %v650 = vadd.f32 %v629, %v649
        %v651 = vpop.f32.mrf.mxu0
        %652 = vdwg.mxu0
        %v653 = vsel %vm633, %v650, -inf
        %654 = vmax.xlane.f32.xlu0 %v653
        %v655 = vpop.xlane.xlu0 %654
        %v656 = vsub.f32 %v650, %v655
        %v657 = vmul.f32 %v656, 1.442695
        %v658 = vpow.pop %v657
        %v659 = vsel %vm633, %v658, 0.0
        %660 = vadd.xlane.f32.xlu0 %v659
        %v661 = vpop.xlane.xlu0 %660
        %v662 = vrcp.pop %v661
        %v663 = vmul.f32 %v658, %v662
        %v664 = vpack.c.bf16 %v663, %v663
        %v666 = vsel %vm633, %v664, 0
        %vm668 = vcmask 1043456
        %v670 = vsel %vm668, %v632, 0
        %672 = vmatpush.bf16.msra.mxu0 0
        %673 = vmatpush.bf16.msra.mxu0 0
        %674 = vmatpush.bf16.msra.mxu0 0
        %675 = vmatpush.bf16.msra.mxu0 0
        %676 = vmatpush.bf16.msra.mxu0 0
        %677 = vmatpush.bf16.msra.mxu0 0
        %678 = vmatpush.bf16.msra.mxu0 0
        %679 = vmatpush.bf16.msra.mxu0 %v670
        %680 = vmatmul.bf16.gmra.mxu0 %v666
        %v681 = vpop.f32.mrf.mxu0
        %v682 = vadd.f32 0.0, %v681
        %v683 = vpop.f32.mrf.mxu0
        %684 = vdwg.mxu0
        %v685 = vpack.c.bf16 %v682, %v682
        %vm686 = vcmask 60416
        %687 = vst.msk [vmem:[#allocation2] sm:$0xf] %vm686, %v685
        %v689 = vunpack.c.l.b16 %v630
        %v690 = vpack.c.b16 %v689, %v689
        %691 = vrot.lane.b32.xlu0 %v690, 120
        %v692 = vpop.permute.xlu0 %691
        %v694 = vunpack.c.l.b16 %v631
        %v695 = vpack.c.b16 %v694, %v694
        %696 = vrot.lane.b32.xlu0 %v695, 120
        %v697 = vpop.permute.xlu0 %696
        %v699 = vsel %vm633, %v692, 0
        %v702 = vsel %vm633, %v697, 0
        %704 = vmatpush.bf16.xpose.msra.mxu0 0
        %705 = vmatpush.bf16.xpose.msra.mxu0 0
        %706 = vmatpush.bf16.xpose.msra.mxu0 0
        %707 = vmatpush.bf16.xpose.msra.mxu0 0
        %708 = vmatpush.bf16.xpose.msra.mxu0 0
        %709 = vmatpush.bf16.xpose.msra.mxu0 0
        %710 = vmatpush.bf16.xpose.msra.mxu0 0
        %711 = vmatpush.bf16.xpose.msra.mxu0 %v702
        %712 = vmatmul.bf16.gmra.mxu0 %v699
        %v713 = vpop.f32.mrf.mxu0
        %v714 = vadd.f32 %v629, %v713
        %v715 = vpop.f32.mrf.mxu0
        %716 = vdwg.mxu0
        %v717 = vsel %vm633, %v714, -inf
        %718 = vmax.xlane.f32.xlu0 %v717
        %v719 = vpop.xlane.xlu0 %718
        %v720 = vsub.f32 %v714, %v719
        %v721 = vmul.f32 %v720, 1.442695
        %v722 = vpow.pop %v721
        %v723 = vsel %vm633, %v722, 0.0
        %724 = vadd.xlane.f32.xlu0 %v723
        %v725 = vpop.xlane.xlu0 %724
        %v726 = vrcp.pop %v725
        %v727 = vmul.f32 %v722, %v726
        %v728 = vpack.c.bf16 %v727, %v727
        %v730 = vunpack.c.l.b16 %v632
        %v731 = vpack.c.b16 %v730, %v730
        %732 = vrot.lane.b32.xlu0 %v731, 120
        %v733 = vpop.permute.xlu0 %732
        %v735 = vsel %vm633, %v728, 0
        %v738 = vsel %vm668, %v733, 0
        %740 = vmatpush.bf16.msra.mxu0 0
        %741 = vmatpush.bf16.msra.mxu0 0
        %742 = vmatpush.bf16.msra.mxu0 0
        %743 = vmatpush.bf16.msra.mxu0 0
        %744 = vmatpush.bf16.msra.mxu0 0
        %745 = vmatpush.bf16.msra.mxu0 0
        %746 = vmatpush.bf16.msra.mxu0 0
        %747 = vmatpush.bf16.msra.mxu0 %v738
        %748 = vmatmul.bf16.gmra.mxu0 %v735
        %v749 = vpop.f32.mrf.mxu0
        %v750 = vadd.f32 0.0, %v749
        %v751 = vpop.f32.mrf.mxu0
        %752 = vdwg.mxu0
        %v753 = vpack.c.bf16 %v750, %v750
        %755 = vrot.lane.b32.xlu0 %v753, 8
        %v756 = vpop.permute.xlu0 %755
        %vm758 = vcmask 126016
        %759 = vst.msk [vmem:[#allocation2] sm:$0xf] %vm758, %v756
        %760 = vrot.lane.b32.xlu0 %v690, 112
        %v761 = vpop.permute.xlu0 %760
        %762 = vrot.lane.b32.xlu0 %v695, 112
        %v763 = vpop.permute.xlu0 %762
        %v765 = vsel %vm633, %v761, 0
        %v768 = vsel %vm633, %v763, 0
        %770 = vmatpush.bf16.xpose.msra.mxu0 0
        %771 = vmatpush.bf16.xpose.msra.mxu0 0
        %772 = vmatpush.bf16.xpose.msra.mxu0 0
        %773 = vmatpush.bf16.xpose.msra.mxu0 0
        %774 = vmatpush.bf16.xpose.msra.mxu0 0
        %775 = vmatpush.bf16.xpose.msra.mxu0 0
        %776 = vmatpush.bf16.xpose.msra.mxu0 0
        %777 = vmatpush.bf16.xpose.msra.mxu0 %v768
        %778 = vmatmul.bf16.gmra.mxu0 %v765
        %v779 = vpop.f32.mrf.mxu0
        %v780 = vadd.f32 %v629, %v779
        %v781 = vpop.f32.mrf.mxu0
        %782 = vdwg.mxu0
        %v783 = vsel %vm633, %v780, -inf
        %784 = vmax.xlane.f32.xlu0 %v783
        %v785 = vpop.xlane.xlu0 %784
        %v786 = vsub.f32 %v780, %v785
        %v787 = vmul.f32 %v786, 1.442695
        %v788 = vpow.pop %v787
        %v789 = vsel %vm633, %v788, 0.0
        %790 = vadd.xlane.f32.xlu0 %v789
        %v791 = vpop.xlane.xlu0 %790
        %v792 = vrcp.pop %v791
        %v793 = vmul.f32 %v788, %v792
        %v794 = vpack.c.bf16 %v793, %v793
        %795 = vrot.lane.b32.xlu0 %v731, 112
        %v796 = vpop.permute.xlu0 %795
        %v798 = vsel %vm633, %v794, 0
        %v801 = vsel %vm668, %v796, 0
        %803 = vmatpush.bf16.msra.mxu0 0
        %804 = vmatpush.bf16.msra.mxu0 0
        %805 = vmatpush.bf16.msra.mxu0 0
        %806 = vmatpush.bf16.msra.mxu0 0
        %807 = vmatpush.bf16.msra.mxu0 0
        %808 = vmatpush.bf16.msra.mxu0 0
        %809 = vmatpush.bf16.msra.mxu0 0
        %810 = vmatpush.bf16.msra.mxu0 %v801
        %811 = vmatmul.bf16.gmra.mxu0 %v798
        %v812 = vpop.f32.mrf.mxu0
        %v813 = vadd.f32 0.0, %v812
        %v814 = vpop.f32.mrf.mxu0
        %815 = vdwg.mxu0
        %v816 = vpack.c.bf16 %v813, %v813
        %818 = vrot.lane.b32.xlu0 %v816, 16
        %v819 = vpop.permute.xlu0 %818
        %vm821 = vcmask 191616
        %822 = vst.msk [vmem:[#allocation2] sm:$0xf] %vm821, %v819
        %823 = vrot.lane.b32.xlu0 %v690, 104
        %v824 = vpop.permute.xlu0 %823
        %825 = vrot.lane.b32.xlu0 %v695, 104
        %v826 = vpop.permute.xlu0 %825
        %v828 = vsel %vm633, %v824, 0
        %v831 = vsel %vm633, %v826, 0
        %833 = vmatpush.bf16.xpose.msra.mxu0 0
        %834 = vmatpush.bf16.xpose.msra.mxu0 0
        %835 = vmatpush.bf16.xpose.msra.mxu0 0
        %836 = vmatpush.bf16.xpose.msra.mxu0 0
        %837 = vmatpush.bf16.xpose.msra.mxu0 0
        %838 = vmatpush.bf16.xpose.msra.mxu0 0
        %839 = vmatpush.bf16.xpose.msra.mxu0 0
        %840 = vmatpush.bf16.xpose.msra.mxu0 %v831
        %841 = vmatmul.bf16.gmra.mxu0 %v828
        %v842 = vpop.f32.mrf.mxu0
        %v843 = vadd.f32 %v629, %v842
        %v844 = vpop.f32.mrf.mxu0
        %845 = vdwg.mxu0
        %v846 = vsel %vm633, %v843, -inf
        %847 = vmax.xlane.f32.xlu0 %v846
        %v848 = vpop.xlane.xlu0 %847
        %v849 = vsub.f32 %v843, %v848
        %v850 = vmul.f32 %v849, 1.442695
        %v851 = vpow.pop %v850
        %v852 = vsel %vm633, %v851, 0.0
        %853 = vadd.xlane.f32.xlu0 %v852
        %v854 = vpop.xlane.xlu0 %853
        %v855 = vrcp.pop %v854
        %v856 = vmul.f32 %v851, %v855
        %v857 = vpack.c.bf16 %v856, %v856
        %858 = vrot.lane.b32.xlu0 %v731, 104
        %v859 = vpop.permute.xlu0 %858
        %v861 = vsel %vm633, %v857, 0
        %v864 = vsel %vm668, %v859, 0
        %866 = vmatpush.bf16.msra.mxu0 0
        %867 = vmatpush.bf16.msra.mxu0 0
        %868 = vmatpush.bf16.msra.mxu0 0
        %869 = vmatpush.bf16.msra.mxu0 0
        %870 = vmatpush.bf16.msra.mxu0 0
        %871 = vmatpush.bf16.msra.mxu0 0
        %872 = vmatpush.bf16.msra.mxu0 0
        %873 = vmatpush.bf16.msra.mxu0 %v864
        %874 = vmatmul.bf16.gmra.mxu0 %v861
        %v875 = vpop.f32.mrf.mxu0
        %v876 = vadd.f32 0.0, %v875
        %v877 = vpop.f32.mrf.mxu0
        %878 = vdwg.mxu0
        %v879 = vpack.c.bf16 %v876, %v876
        %881 = vrot.lane.b32.xlu0 %v879, 24
        %v882 = vpop.permute.xlu0 %881
        %vm884 = vcmask 257216
        %885 = vst.msk [vmem:[#allocation2] sm:$0xf] %vm884, %v882
        %v886 = vld [vmem:[#allocation2] sm:$0xf]
        %v887 = vld [vmem:[#allocation6] sm:$0xf]
        %v888 = vld [vmem:[#allocation6 + $0x4] sm:$0xf]
        %v889 = vld [vmem:[#allocation6 + $0x8] sm:$0xf]
        %v890 = vld [vmem:[#allocation6 + $0xc] sm:$0xf]
        %v895 = vunpack.c.l.b16 %v887
        %v896 = vunpack.c.l.b16 %v888
        %v897 = vunpack.c.l.b16 %v889
        %v898 = vunpack.c.l.b16 %v890
        %v899 = vpack.c.b16 %v896, %v895
        %v900 = vpack.c.b16 %v898, %v897
        %v904 = vsel %vm546, %v886, 0
        %906 = vmatpush.bf16.msra.mxu0 0
        %907 = vmatpush.bf16.msra.mxu0 0
        %908 = vmatpush.bf16.msra.mxu0 0
        %909 = vmatpush.bf16.msra.mxu0 0
        %910 = vmatpush.bf16.msra.mxu0 0
        %911 = vmatpush.bf16.msra.mxu0 0
        %912 = vmatpush.bf16.msra.mxu0 %v900
        %913 = vmatpush.bf16.msra.mxu0 %v899
        %914 = vmatmul.bf16.gmra.mxu0 %v904
        %v915 = vpop.f32.mrf.mxu0
        %v916 = vadd.f32 %v528, %v915
        %v917 = vpop.f32.mrf.mxu0
        %918 = vdwg.mxu0
        %v919 = vld [vmem:[%s6] sm:$0x1]
        %v920 = vld [vmem:[%s7] sm:$0x1]
        %v921 = vsel %vm546, %v916, 0.0
        %922 = vadd.xlane.f32.xlu0 %v921
        %v923 = vpop.xlane.xlu0 %922
        %v924 = vrcp.pop 32.0
        %v925 = vmul.f32 32.0, %v924
        %v926 = vsub.f32 1.0, %v925
        %v927 = vmul.f32 %v924, %v926
        %v928 = vadd.f32 %v924, %v927
        %vm929 = vweird.f32 %v924
        %v930 = vsel %vm929, %v924, %v928
        %v931 = vmul.f32 %v923, %v930
        %v932 = vsub.f32 %v916, %v931
        %v933 = vmul.f32 %v932, %v932
        %v934 = vsel %vm546, %v933, 0.0
        %935 = vadd.xlane.f32.xlu0 %v934
        %v936 = vpop.xlane.xlu0 %935
        %v937 = vmul.f32 %v936, %v930
        %v938 = vadd.f32 %v937, 1e-05
        %v939 = vrsqrt.pop %v938
        %v940 = vmul.f32 %v939, %v938
        %v941 = vmul.f32 %v940, %v939
        %v942 = vmul.f32 0.5, %v941
        %v943 = vsub.f32 1.5, %v942
        %v944 = vmul.f32 %v939, %v943
        %vm945 = vweird.f32 %v938
        %vm946 = vweird.f32 %v939
        %vm947 = vmor %vm945, %vm946
        %v948 = vsel %vm947, %v939, %v944
        %v949 = vmul.f32 %v932, %v948
        %v951 = vperm.slane %v919, 0
        %v953 = vmul.f32 %v949, %v951
        %v955 = vperm.slane %v920, 0
        %v957 = vadd.f32 %v953, %v955
        %v958 = vpack.c.bf16 %v957, %v957
        %v959 = vld [vmem:[#allocation8] sm:$0xf]
        %v960 = vld [vmem:[#allocation8 + $0x4] sm:$0xf]
        %v961 = vld [vmem:[#allocation8 + $0x8] sm:$0xf]
        %v962 = vld [vmem:[#allocation8 + $0xc] sm:$0xf]
        %v963 = vld [vmem:[%s9] sm:$0x1]
        %v965 = vperm.slane %v963, 0
        %v971 = vunpack.c.l.b16 %v959
        %v972 = vunpack.c.l.b16 %v960
        %v973 = vunpack.c.l.b16 %v961
        %v974 = vunpack.c.l.b16 %v962
        %v975 = vpack.c.b16 %v972, %v971
        %v976 = vpack.c.b16 %v974, %v973
        %v980 = vsel %vm546, %v958, 0
        %982 = vmatpush.bf16.msra.mxu0 0
        %983 = vmatpush.bf16.msra.mxu0 0
        %984 = vmatpush.bf16.msra.mxu0 0
        %985 = vmatpush.bf16.msra.mxu0 0
        %986 = vmatpush.bf16.msra.mxu0 0
        %987 = vmatpush.bf16.msra.mxu0 0
        %988 = vmatpush.bf16.msra.mxu0 %v976
        %989 = vmatpush.bf16.msra.mxu0 %v975
        %990 = vmatmul.bf16.gmra.mxu0 %v980
        %v991 = vpop.f32.mrf.mxu0
        %v992 = vadd.f32 %v965, %v991
        %v993 = vpop.f32.mrf.mxu0
        %994 = vdwg.mxu0
        %v995 = vmax.f32 %v992, 0.0
        %v996 = vpack.c.bf16 %v995, %v995
        %v997 = vld [vmem:[%s10] sm:$0xf]
        %v998 = vld [vmem:[%s10 + $0x4] sm:$0xf]
        %v999 = vld [vmem:[%s10 + $0x8] sm:$0xf]
        %v1000 = vld [vmem:[%s10 + $0xc] sm:$0xf]
        %v1001 = vld [vmem:[%s10 + $0x10] sm:$0xf]
        %v1002 = vld [vmem:[%s10 + $0x14] sm:$0xf]
        %v1003 = vld [vmem:[%s10 + $0x18] sm:$0xf]
        %v1004 = vld [vmem:[%s10 + $0x1c] sm:$0xf]
        %v1005 = vld [vmem:[%s11] sm:$0x1]
        %v1007 = vperm.slane %v1005, 0
        %v1017 = vunpack.c.l.b16 %v997
        %v1018 = vunpack.c.l.b16 %v998
        %v1019 = vunpack.c.l.b16 %v999
        %v1020 = vunpack.c.l.b16 %v1000
        %v1021 = vunpack.c.l.b16 %v1001
        %v1022 = vunpack.c.l.b16 %v1002
        %v1023 = vunpack.c.l.b16 %v1003
        %v1024 = vunpack.c.l.b16 %v1004
        %v1025 = vpack.c.b16 %v1018, %v1017
        %v1026 = vpack.c.b16 %v1020, %v1019
        %v1027 = vpack.c.b16 %v1022, %v1021
        %v1028 = vpack.c.b16 %v1024, %v1023
        %vm1033 = vcmask 523264
        %v1035 = vsel %vm1033, %v996, 0
        %1037 = vmatpush.bf16.msra.mxu0 0
        %1038 = vmatpush.bf16.msra.mxu0 0
        %1039 = vmatpush.bf16.msra.mxu0 0
        %1040 = vmatpush.bf16.msra.mxu0 0
        %1041 = vmatpush.bf16.msra.mxu0 %v1028
        %1042 = vmatpush.bf16.msra.mxu0 %v1027
        %1043 = vmatpush.bf16.msra.mxu0 %v1026
        %1044 = vmatpush.bf16.msra.mxu0 %v1025
        %1045 = vmatmul.bf16.gmra.mxu0 %v1035
        %v1046 = vpop.f32.mrf.mxu0
        %v1047 = vadd.f32 %v1007, %v1046
        %v1048 = vpop.f32.mrf.mxu0
        %1049 = vdwg.mxu0
        %v1050 = vadd.f32 %v1047, %v957
        %v1051 = vld [vmem:[%s12] sm:$0x1]
        %v1052 = vld [vmem:[%s13] sm:$0x1]
        %v1053 = vsel %vm546, %v1050, 0.0
        %1054 = vadd.xlane.f32.xlu0 %v1053
        %v1055 = vpop.xlane.xlu0 %1054
        %v1056 = vmul.f32 %v1055, %v930
        %v1057 = vsub.f32 %v1050, %v1056
        %v1058 = vmul.f32 %v1057, %v1057
        %v1059 = vsel %vm546, %v1058, 0.0
        %1060 = vadd.xlane.f32.xlu0 %v1059
        %v1061 = vpop.xlane.xlu0 %1060
        %v1062 = vmul.f32 %v1061, %v930
        %v1063 = vadd.f32 %v1062, 1e-05
        %v1064 = vrsqrt.pop %v1063
        %v1065 = vmul.f32 %v1064, %v1063
        %v1066 = vmul.f32 %v1065, %v1064
        %v1067 = vmul.f32 0.5, %v1066
        %v1068 = vsub.f32 1.5, %v1067
        %v1069 = vmul.f32 %v1064, %v1068
        %vm1070 = vweird.f32 %v1063
        %vm1071 = vweird.f32 %v1064
        %vm1072 = vmor %vm1070, %vm1071
        %v1073 = vsel %vm1072, %v1064, %v1069
        %v1074 = vmul.f32 %v1057, %v1073
        %v1076 = vperm.slane %v1051, 0
        %v1078 = vmul.f32 %v1074, %v1076
        %v1080 = vperm.slane %v1052, 0
        %v1082 = vadd.f32 %v1078, %v1080
        %1083 = vst.msk [vmem:[%s519] sm:$0xff] %vm546, %v1082
        %s1084 = sand.u32 %s342, 1
        %s1085 = scalar_lea.sflag [#allocation5], %s1084
        %s1086 = sand.u32 %s342, 1
        %s1087 = smul.addr %s1086, 8
        %s1088 = scalar_lea.vmem [#allocation9], %s1087
        // Predicated region
        $region89: #{tpu_custom_call.1} parent=75 // pred_check
          %p1089 = pneg %p352
        $region90: #{tpu_custom_call.1} parent=75 // pred_check_branch
          %1091 = sbr.rel (%p1089) target = $region92
        $region91: #{tpu_custom_call.1} parent=75 // pred_region
          %1093 = vsyncadd %s1085, 0
          %s1094 = smul.addr %s30, 8
          %s1095 = scalar_lea.hbm %s14, %s1094
          %s1097 = sshll.u32 %s1088, 4
          %s1098 = int_to_ptr.vmem [resolvable:$true] %s1097
          %s1099 = sshll.u32 %s1095, 4
          %s1100 = int_to_ptr.hbm [resolvable:$true] %s1099
          %1102 = dma.vmem_to_hbm [thread:$0]  %s1098, 128, %s1100, %s1085
        $region92: #{tpu_custom_call.1} parent=75 // pred_fallthru
          _
      $region76: #{tpu_custom_call.1} parent=5 // pred_fallthru
        _
      %p1103 = scmp.le.s32.totalorder 2, %s25
      // Predicated region
      $region93: #{tpu_custom_call.1} parent=5 // pred_check
        %p1104 = pneg %p1103
      $region94: #{tpu_custom_call.1} parent=5 // pred_check_branch
        %1106 = sbr.rel (%p1104) target = $region96
      $region95: #{tpu_custom_call.1} parent=5 // pred_region
        %s1107 = ssub.s32 %s25, 2
        // Predicated region
        $region97: #{tpu_custom_call.1} parent=95 // pred_check
          %p1108 = pneg %p358
        $region98: #{tpu_custom_call.1} parent=95 // pred_check_branch
          %1110 = sbr.rel (%p1108) target = $region100
        $region99: #{tpu_custom_call.1} parent=95 // pred_region
          %s1111 = sand.u32 %s343, 1
          %s1112 = scalar_lea.sflag [#allocation5], %s1111
          %s1113 = sand.u32 %s343, 1
          %s1114 = smul.addr %s1113, 8
          %s1115 = scalar_lea.vmem [#allocation9], %s1114
          %1117 = dma.done %s1112, 128
        $region100: #{tpu_custom_call.1} parent=95 // pred_fallthru
          _
      $region96: #{tpu_custom_call.1} parent=5 // pred_fallthru
        _
    $region6: #{tpu_custom_call.1} parent=1 // loop_footer
      %s29 = sadd.s32 1, %s25
    $region7: #{tpu_custom_call.1} parent=1 // loop_footer_branch
      %24 = sbr.rel target = $region3
    $region8: #{tpu_custom_call.1} parent=1 // loop_exit
      _
    %1118 = vsyncpa [#allocation4], 1
    %s1119 = scalar_lea.sflag [#allocation4], 1
    %1120 = vsyncpa %s1119, 1
    %1121 = vsyncpa [#allocation7], 1
    %1122 = vsyncpa [#allocation5], 1
    %s1123 = scalar_lea.sflag [#allocation5], 1
    %1124 = vsyncpa %s1123, 1

// kernel: tpu_custom_call.1
$region0: #{tpu_custom_call.1}
  #allocation0 [shape = 'u32[]', space=smem, size = 0x4, offset = 0x4, fixed_abs, tag = 'smem constant byte address 0x4 - core index']
  #allocation1 [shape = 'u32[72,128]{1,0:T(1,128)}', space=vmem, size = 0x9000, scoped, tag = 'internal scratch']
  #allocation2 [shape = 'bf16[8,32]{1,0:T(8,128)(2,1)}', space=vmem, size = 0x800, scoped, tag = 'scratch operand']
  %s0 = inlined_call_operand.vmem [shape: s32[2,1,1], index: 0, kind: input, shape index: {}]
  %s1 = inlined_call_operand.vmem [shape: f32[2,8,32], index: 1, kind: input, shape index: {}]
  %s2 = inlined_call_operand.vmem [shape: bf16[32,32], index: 2, kind: input, shape index: {}]
  %s3 = inlined_call_operand.vmem [shape: bf16[32,32], index: 3, kind: input, shape index: {}]
  %s4 = inlined_call_operand.hbm [shape: bf16[32,32], index: 4, kind: input, shape index: {}]
  %s5 = inlined_call_operand.hbm [shape: bf16[32,32], index: 5, kind: input, shape index: {}]
  %s6 = inlined_call_operand.vmem [shape: f32[1,32], index: 6, kind: input, shape index: {}]
  %s7 = inlined_call_operand.vmem [shape: f32[1,32], index: 7, kind: input, shape index: {}]
  %s8 = inlined_call_operand.hbm [shape: bf16[32,64], index: 8, kind: input, shape index: {}]
  %s9 = inlined_call_operand.vmem [shape: f32[1,64], index: 9, kind: input, shape index: {}]
  %s10 = inlined_call_operand.vmem [shape: bf16[64,32], index: 10, kind: input, shape index: {}]
  %s11 = inlined_call_operand.vmem [shape: f32[1,32], index: 11, kind: input, shape index: {}]
  %s12 = inlined_call_operand.vmem [shape: f32[1,32], index: 12, kind: input, shape index: {}]
  %s13 = inlined_call_operand.vmem [shape: f32[1,32], index: 13, kind: input, shape index: {}]
  %s14 = inlined_call_operand.hbm [shape: f32[2,8,32], index: 14, kind: output, shape index: {}]
  %s15 = sld [smem:[#allocation0]]
  $region101: #{tpu_custom_call.1} parent=0
    _
  %s17 = ssub.s32 1, %s15
  %s18 = scalar_select 0, %s17, %s15
  $region1: #{tpu_custom_call.1} parent=0
    #allocation3 [shape = 'u8[8192]{0}', space=vmem, size = 0x2000, scoped, tag = 'input window, operand 4, single buffered']
    #allocation4 [shape = 's32[2]{0}', space=sflag, size = 0x8, scoped, tag = 'scoped memory for tpu_custom_call.1']
    #allocation5 [shape = 's32[2]{0}', space=sflag, size = 0x8, scoped, tag = 'scoped memory for tpu_custom_call.1']
    #allocation6 [shape = 'u8[8192]{0}', space=vmem, size = 0x2000, scoped, tag = 'input window, operand 5, single buffered']
    #allocation7 [shape = 's32[1]{0}', space=sflag, size = 0x4, scoped, tag = 'scoped memory for tpu_custom_call.1']
    #allocation8 [shape = 'u8[8192]{0}', space=vmem, size = 0x2000, scoped, tag = 'input window, operand 8, single buffered']
    #allocation9 [shape = 'u8[8192]{0}', space=vmem, size = 0x2000, scoped, tag = 'output window, operand 0']
    %19 = vsyncpa [#allocation4], 0
    %20 = vsyncpa [#allocation7], 0
    %21 = vsyncpa [#allocation5], 0
    %s22 = scalar_lea.sflag [#allocation5], 1
    %23 = vsyncpa %s22, 0
    loop: start=0, step=1, limit=4
    $region2: #{tpu_custom_call.1} parent=1 // loop_pre_header
      _
    $region3: #{tpu_custom_call.1} parent=1 // loop_header
      %s25 = sphi 0, %s29
      %p26 = scmp.ge.s32.totalorder %s25, 4
      %s35 = sphi 0, %s37
      %s38 = sphi 0, %s35
      %s39 = sphi 0, %s38
      %s55 = sphi 0, %s39
      %s61 = sphi 0, %s63
      %s64 = sphi 0, %s61
      %s65 = sphi 0, %s64
      %s81 = sphi 0, %s65
      %s85 = sphi 0, %s85
      %s87 = sphi 0, %s85
      %s88 = sphi 0, %s87
      %s102 = sphi 0, %s88
      %s106 = sphi 0, %s106
      %s108 = sphi 0, %s106
      %s109 = sphi 0, %s108
      %s123 = sphi 0, %s109
      %s127 = sphi 0, %s127
      %s129 = sphi 0, %s127
      %s130 = sphi 0, %s129
      %s144 = sphi 0, %s130
      %s148 = sphi 0, %s148
      %s150 = sphi 0, %s148
      %s151 = sphi 0, %s150
      %s165 = sphi 0, %s151
      %s169 = sphi 0, %s169
      %s171 = sphi 0, %s169
      %s172 = sphi 0, %s171
      %s186 = sphi 0, %s172
      %s190 = sphi 0, %s190
      %s192 = sphi 0, %s190
      %s193 = sphi 0, %s192
      %s207 = sphi 0, %s193
      %s211 = sphi 0, %s211
      %s213 = sphi 0, %s211
      %s214 = sphi 0, %s213
      %s228 = sphi 0, %s214
      %s232 = sphi 0, %s232
      %s234 = sphi 0, %s232
      %s235 = sphi 0, %s234
      %s249 = sphi 0, %s235
      %s253 = sphi 0, %s253
      %s255 = sphi 0, %s253
      %s256 = sphi 0, %s255
      %s270 = sphi 0, %s256
      %s274 = sphi 0, %s274
      %s276 = sphi 0, %s274
      %s277 = sphi 0, %s276
      %s291 = sphi 0, %s277
      %s295 = sphi 0, %s295
      %s297 = sphi 0, %s295
      %s298 = sphi 0, %s297
      %s312 = sphi 0, %s298
      %s316 = sphi 0, %s316
      %s318 = sphi 0, %s316
      %s319 = sphi 0, %s318
      %s333 = sphi 0, %s319
      %s339 = sphi 0, %s341
      %s342 = sphi 0, %s339
      %s343 = sphi 0, %s342
      %s359 = sphi 0, %s343
    $region4: #{tpu_custom_call.1} parent=1 // loop_header_branch
      %28 = sbr.rel (%p26) target = $region8
    $region5: #{tpu_custom_call.1} parent=1 // loop_body
      %s30 = ssub.s32 %s25, 1
      %s31 = ssub.s32 %s25, 2
      %s32 = sadd.s32 %s25, 1
      %s33 = ssub.s32 %s25, %s32
      %p34 = scmp.eq.s32.totalorder %s33, 0
      %s36 = sadd.s32 %s35, 1
      %s37 = scalar_select %p34, %s35, %s36
      %p40 = pneg %p34
      %p41 = scmp.eq.s32.totalorder %s25, 1
      %p42 = por %p40, %p41
      %p43 = scmp.ne.s32.totalorder %s35, %s38
      %p44 = scmp.eq.s32.totalorder %s25, 0
      %p45 = por %p43, %p44
      %p46 = scmp.ne.s32.totalorder %s35, %s38
      %p47 = scmp.eq.s32.totalorder %s30, 1
      %p48 = por %p46, %p47
      %p49 = scmp.ne.s32.totalorder %s38, %s39
      %p50 = scmp.eq.s32.totalorder %s30, 0
      %p51 = por %p49, %p50
      %p52 = scmp.ne.s32.totalorder %s38, %s39
      %p53 = scmp.eq.s32.totalorder %s31, 1
      %p54 = por %p52, %p53
      %p56 = scmp.ne.s32.totalorder %s39, %s55
      %p57 = scmp.eq.s32.totalorder %s31, 0
      %p58 = por %p56, %p57
      %s59 = ssub.s32 %s25, %s32
      %p60 = scmp.eq.s32.totalorder %s59, 0
      %s62 = sadd.s32 %s61, 1
      %s63 = scalar_select %p60, %s61, %s62
      %p66 = pneg %p60
      %p67 = scmp.eq.s32.totalorder %s25, 1
      %p68 = por %p66, %p67
      %p69 = scmp.ne.s32.totalorder %s61, %s64
      %p70 = scmp.eq.s32.totalorder %s25, 0
      %p71 = por %p69, %p70
      %p72 = scmp.ne.s32.totalorder %s61, %s64
      %p73 = scmp.eq.s32.totalorder %s30, 1
      %p74 = por %p72, %p73
      %p75 = scmp.ne.s32.totalorder %s64, %s65
      %p76 = scmp.eq.s32.totalorder %s30, 0
      %p77 = por %p75, %p76
      %p78 = scmp.ne.s32.totalorder %s64, %s65
      %p79 = scmp.eq.s32.totalorder %s31, 1
      %p80 = por %p78, %p79
      %p82 = scmp.ne.s32.totalorder %s65, %s81
      %p83 = scmp.eq.s32.totalorder %s31, 0
      %p84 = por %p82, %p83
      %s86 = sadd.s32 %s85, 1
      %p89 = scmp.eq.s32.totalorder %s25, 1
      %p90 = scmp.ne.s32.totalorder %s85, %s87
      %p91 = scmp.eq.s32.totalorder %s25, 0
      %p92 = por %p90, %p91
      %p93 = scmp.ne.s32.totalorder %s85, %s87
      %p94 = scmp.eq.s32.totalorder %s30, 1
      %p95 = por %p93, %p94
      %p96 = scmp.ne.s32.totalorder %s87, %s88
      %p97 = scmp.eq.s32.totalorder %s30, 0
      %p98 = por %p96, %p97
      %p99 = scmp.ne.s32.totalorder %s87, %s88
      %p100 = scmp.eq.s32.totalorder %s31, 1
      %p101 = por %p99, %p100
      %p103 = scmp.ne.s32.totalorder %s88, %s102
      %p104 = scmp.eq.s32.totalorder %s31, 0
      %p105 = por %p103, %p104
      %s107 = sadd.s32 %s106, 1
      %p110 = scmp.eq.s32.totalorder %s25, 1
      %p111 = scmp.ne.s32.totalorder %s106, %s108
      %p112 = scmp.eq.s32.totalorder %s25, 0
      %p113 = por %p111, %p112
      %p114 = scmp.ne.s32.totalorder %s106, %s108
      %p115 = scmp.eq.s32.totalorder %s30, 1
      %p116 = por %p114, %p115
      %p117 = scmp.ne.s32.totalorder %s108, %s109
      %p118 = scmp.eq.s32.totalorder %s30, 0
      %p119 = por %p117, %p118
      %p120 = scmp.ne.s32.totalorder %s108, %s109
      %p121 = scmp.eq.s32.totalorder %s31, 1
      %p122 = por %p120, %p121
      %p124 = scmp.ne.s32.totalorder %s109, %s123
      %p125 = scmp.eq.s32.totalorder %s31, 0
      %p126 = por %p124, %p125
      %s128 = sadd.s32 %s127, 1
      %p131 = scmp.eq.s32.totalorder %s25, 1
      %p132 = scmp.ne.s32.totalorder %s127, %s129
      %p133 = scmp.eq.s32.totalorder %s25, 0
      %p134 = por %p132, %p133
      %p135 = scmp.ne.s32.totalorder %s127, %s129
      %p136 = scmp.eq.s32.totalorder %s30, 1
      %p137 = por %p135, %p136
      %p138 = scmp.ne.s32.totalorder %s129, %s130
      %p139 = scmp.eq.s32.totalorder %s30, 0
      %p140 = por %p138, %p139
      %p141 = scmp.ne.s32.totalorder %s129, %s130
      %p142 = scmp.eq.s32.totalorder %s31, 1
      %p143 = por %p141, %p142
      %p145 = scmp.ne.s32.totalorder %s130, %s144
      %p146 = scmp.eq.s32.totalorder %s31, 0
      %p147 = por %p145, %p146
      %s149 = sadd.s32 %s148, 1
      %p152 = scmp.eq.s32.totalorder %s25, 1
      %p153 = scmp.ne.s32.totalorder %s148, %s150
      %p154 = scmp.eq.s32.totalorder %s25, 0
      %p155 = por %p153, %p154
      %p156 = scmp.ne.s32.totalorder %s148, %s150
      %p157 = scmp.eq.s32.totalorder %s30, 1
      %p158 = por %p156, %p157
      %p159 = scmp.ne.s32.totalorder %s150, %s151
      %p160 = scmp.eq.s32.totalorder %s30, 0
      %p161 = por %p159, %p160
      %p162 = scmp.ne.s32.totalorder %s150, %s151
      %p163 = scmp.eq.s32.totalorder %s31, 1
      %p164 = por %p162, %p163
      %p166 = scmp.ne.s32.totalorder %s151, %s165
      %p167 = scmp.eq.s32.totalorder %s31, 0
      %p168 = por %p166, %p167
      %s170 = sadd.s32 %s169, 1
      %p173 = scmp.eq.s32.totalorder %s25, 1
      %p174 = scmp.ne.s32.totalorder %s169, %s171
      %p175 = scmp.eq.s32.totalorder %s25, 0
      %p176 = por %p174, %p175
      %p177 = scmp.ne.s32.totalorder %s169, %s171
      %p178 = scmp.eq.s32.totalorder %s30, 1
      %p179 = por %p177, %p178
      %p180 = scmp.ne.s32.totalorder %s171, %s172
      %p181 = scmp.eq.s32.totalorder %s30, 0
      %p182 = por %p180, %p181
      %p183 = scmp.ne.s32.totalorder %s171, %s172
      %p184 = scmp.eq.s32.totalorder %s31, 1
      %p185 = por %p183, %p184
      %p187 = scmp.ne.s32.totalorder %s172, %s186
      %p188 = scmp.eq.s32.totalorder %s31, 0
      %p189 = por %p187, %p188
      %s191 = sadd.s32 %s190, 1
      %p194 = scmp.eq.s32.totalorder %s25, 1
      %p195 = scmp.ne.s32.totalorder %s190, %s192
      %p196 = scmp.eq.s32.totalorder %s25, 0
      %p197 = por %p195, %p196
      %p198 = scmp.ne.s32.totalorder %s190, %s192
      %p199 = scmp.eq.s32.totalorder %s30, 1
      %p200 = por %p198, %p199
      %p201 = scmp.ne.s32.totalorder %s192, %s193
      %p202 = scmp.eq.s32.totalorder %s30, 0
      %p203 = por %p201, %p202
      %p204 = scmp.ne.s32.totalorder %s192, %s193
      %p205 = scmp.eq.s32.totalorder %s31, 1
      %p206 = por %p204, %p205
      %p208 = scmp.ne.s32.totalorder %s193, %s207
      %p209 = scmp.eq.s32.totalorder %s31, 0
      %p210 = por %p208, %p209
      %s212 = sadd.s32 %s211, 1
      %p215 = scmp.eq.s32.totalorder %s25, 1
      %p216 = scmp.ne.s32.totalorder %s211, %s213
      %p217 = scmp.eq.s32.totalorder %s25, 0
      %p218 = por %p216, %p217
      %p219 = scmp.ne.s32.totalorder %s211, %s213
      %p220 = scmp.eq.s32.totalorder %s30, 1
      %p221 = por %p219, %p220
      %p222 = scmp.ne.s32.totalorder %s213, %s214
      %p223 = scmp.eq.s32.totalorder %s30, 0
      %p224 = por %p222, %p223
      %p225 = scmp.ne.s32.totalorder %s213, %s214
      %p226 = scmp.eq.s32.totalorder %s31, 1
      %p227 = por %p225, %p226
      %p229 = scmp.ne.s32.totalorder %s214, %s228
      %p230 = scmp.eq.s32.totalorder %s31, 0
      %p231 = por %p229, %p230
      %s233 = sadd.s32 %s232, 1
      %p236 = scmp.eq.s32.totalorder %s25, 1
      %p237 = scmp.ne.s32.totalorder %s232, %s234
      %p238 = scmp.eq.s32.totalorder %s25, 0
      %p239 = por %p237, %p238
      %p240 = scmp.ne.s32.totalorder %s232, %s234
      %p241 = scmp.eq.s32.totalorder %s30, 1
      %p242 = por %p240, %p241
      %p243 = scmp.ne.s32.totalorder %s234, %s235
      %p244 = scmp.eq.s32.totalorder %s30, 0
      %p245 = por %p243, %p244
      %p246 = scmp.ne.s32.totalorder %s234, %s235
      %p247 = scmp.eq.s32.totalorder %s31, 1
      %p248 = por %p246, %p247
      %p250 = scmp.ne.s32.totalorder %s235, %s249
      %p251 = scmp.eq.s32.totalorder %s31, 0
      %p252 = por %p250, %p251
      %s254 = sadd.s32 %s253, 1
      %p257 = scmp.eq.s32.totalorder %s25, 1
      %p258 = scmp.ne.s32.totalorder %s253, %s255
      %p259 = scmp.eq.s32.totalorder %s25, 0
      %p260 = por %p258, %p259
      %p261 = scmp.ne.s32.totalorder %s253, %s255
      %p262 = scmp.eq.s32.totalorder %s30, 1
      %p263 = por %p261, %p262
      %p264 = scmp.ne.s32.totalorder %s255, %s256
      %p265 = scmp.eq.s32.totalorder %s30, 0
      %p266 = por %p264, %p265
      %p267 = scmp.ne.s32.totalorder %s255, %s256
      %p268 = scmp.eq.s32.totalorder %s31, 1
      %p269 = por %p267, %p268
      %p271 = scmp.ne.s32.totalorder %s256, %s270
      %p272 = scmp.eq.s32.totalorder %s31, 0
      %p273 = por %p271, %p272
      %s275 = sadd.s32 %s274, 1
      %p278 = scmp.eq.s32.totalorder %s25, 1
      %p279 = scmp.ne.s32.totalorder %s274, %s276
      %p280 = scmp.eq.s32.totalorder %s25, 0
      %p281 = por %p279, %p280
      %p282 = scmp.ne.s32.totalorder %s274, %s276
      %p283 = scmp.eq.s32.totalorder %s30, 1
      %p284 = por %p282, %p283
      %p285 = scmp.ne.s32.totalorder %s276, %s277
      %p286 = scmp.eq.s32.totalorder %s30, 0
      %p287 = por %p285, %p286
      %p288 = scmp.ne.s32.totalorder %s276, %s277
      %p289 = scmp.eq.s32.totalorder %s31, 1
      %p290 = por %p288, %p289
      %p292 = scmp.ne.s32.totalorder %s277, %s291
      %p293 = scmp.eq.s32.totalorder %s31, 0
      %p294 = por %p292, %p293
      %s296 = sadd.s32 %s295, 1
      %p299 = scmp.eq.s32.totalorder %s25, 1
      %p300 = scmp.ne.s32.totalorder %s295, %s297
      %p301 = scmp.eq.s32.totalorder %s25, 0
      %p302 = por %p300, %p301
      %p303 = scmp.ne.s32.totalorder %s295, %s297
      %p304 = scmp.eq.s32.totalorder %s30, 1
      %p305 = por %p303, %p304
      %p306 = scmp.ne.s32.totalorder %s297, %s298
      %p307 = scmp.eq.s32.totalorder %s30, 0
      %p308 = por %p306, %p307
      %p309 = scmp.ne.s32.totalorder %s297, %s298
      %p310 = scmp.eq.s32.totalorder %s31, 1
      %p311 = por %p309, %p310
      %p313 = scmp.ne.s32.totalorder %s298, %s312
      %p314 = scmp.eq.s32.totalorder %s31, 0
      %p315 = por %p313, %p314
      %s317 = sadd.s32 %s316, 1
      %p320 = scmp.eq.s32.totalorder %s25, 1
      %p321 = scmp.ne.s32.totalorder %s316, %s318
      %p322 = scmp.eq.s32.totalorder %s25, 0
      %p323 = por %p321, %p322
      %p324 = scmp.ne.s32.totalorder %s316, %s318
      %p325 = scmp.eq.s32.totalorder %s30, 1
      %p326 = por %p324, %p325
      %p327 = scmp.ne.s32.totalorder %s318, %s319
      %p328 = scmp.eq.s32.totalorder %s30, 0
      %p329 = por %p327, %p328
      %p330 = scmp.ne.s32.totalorder %s318, %s319
      %p331 = scmp.eq.s32.totalorder %s31, 1
      %p332 = por %p330, %p331
      %p334 = scmp.ne.s32.totalorder %s319, %s333
      %p335 = scmp.eq.s32.totalorder %s31, 0
      %p336 = por %p334, %p335
      %s337 = ssub.s32 %s25, %s32
      %p338 = scmp.eq.s32.totalorder %s337, 0
      %s340 = sadd.s32 %s339, 1
      %s341 = scalar_select %p338, %s339, %s340
      %p344 = pneg %p338
      %p345 = scmp.eq.s32.totalorder %s25, 1
      %p346 = por %p344, %p345
      %p347 = scmp.ne.s32.totalorder %s339, %s342
      %p348 = scmp.eq.s32.totalorder %s25, 0
      %p349 = por %p347, %p348
      %p350 = scmp.ne.s32.totalorder %s339, %s342
      %p351 = scmp.eq.s32.totalorder %s30, 1
      %p352 = por %p350, %p351
      %p353 = scmp.ne.s32.totalorder %s342, %s343
      %p354 = scmp.eq.s32.totalorder %s30, 0
      %p355 = por %p353, %p354
      %p356 = scmp.ne.s32.totalorder %s342, %s343
      %p357 = scmp.eq.s32.totalorder %s31, 1
      %p358 = por %p356, %p357
      %p360 = scmp.ne.s32.totalorder %s343, %s359
      %p361 = scmp.eq.s32.totalorder %s31, 0
      %p362 = por %p360, %p361
      %p363 = scmp.le.s32.totalorder 1, %s25
      %p364 = scmp.lt.s32.totalorder %s25, 3
      %p365 = pnand %p363, %p364
      %p366 = pneg %p365
      // Predicated region
      $region9: #{tpu_custom_call.1} parent=5 // pred_check
        _
      $region10: #{tpu_custom_call.1} parent=5 // pred_check_branch
        %368 = sbr.rel (%p365) target = $region12
      $region11: #{tpu_custom_call.1} parent=5 // pred_region
        %s369 = ssub.s32 %s25, 1
        // Predicated region
        $region13: #{tpu_custom_call.1} parent=11 // pred_check
          %p370 = pneg %p98
        $region14: #{tpu_custom_call.1} parent=11 // pred_check_branch
          %372 = sbr.rel (%p370) target = $region16
        $region15: #{tpu_custom_call.1} parent=11 // pred_region
          _
        $region16: #{tpu_custom_call.1} parent=11 // pred_fallthru
          _
        // Predicated region
        $region17: #{tpu_custom_call.1} parent=11 // pred_check
          %p373 = pneg %p119
        $region18: #{tpu_custom_call.1} parent=11 // pred_check_branch
          %375 = sbr.rel (%p373) target = $region20
        $region19: #{tpu_custom_call.1} parent=11 // pred_region
          _
        $region20: #{tpu_custom_call.1} parent=11 // pred_fallthru
          _
        // Predicated region
        $region21: #{tpu_custom_call.1} parent=11 // pred_check
          %p376 = pneg %p140
        $region22: #{tpu_custom_call.1} parent=11 // pred_check_branch
          %378 = sbr.rel (%p376) target = $region24
        $region23: #{tpu_custom_call.1} parent=11 // pred_region
          %380 = vsyncadd [#allocation4], 0
          %s381 = sshll.u32 %s4, 4
          %s382 = int_to_ptr.hbm [resolvable:$true] %s381
          %s383 = sshll.u32 [#allocation3], 4
          %s384 = int_to_ptr.vmem [resolvable:$true] %s383
          %389 = dma.hbm_to_vmem [thread:$0]  %s382, 256, %s384, [#allocation4], 64, 64, 4
        $region24: #{tpu_custom_call.1} parent=11 // pred_fallthru
          _
        // Predicated region
        $region25: #{tpu_custom_call.1} parent=11 // pred_check
          %p390 = pneg %p161
        $region26: #{tpu_custom_call.1} parent=11 // pred_check_branch
          %392 = sbr.rel (%p390) target = $region28
        $region27: #{tpu_custom_call.1} parent=11 // pred_region
          %394 = vsyncadd [#allocation7], 0
          %s395 = sshll.u32 %s5, 4
          %s396 = int_to_ptr.hbm [resolvable:$true] %s395
          %s397 = sshll.u32 [#allocation6], 4
          %s398 = int_to_ptr.vmem [resolvable:$true] %s397
          %403 = dma.hbm_to_vmem [thread:$0]  %s396, 256, %s398, [#allocation7], 64, 64, 4
        $region28: #{tpu_custom_call.1} parent=11 // pred_fallthru
          _
        // Predicated region
        $region29: #{tpu_custom_call.1} parent=11 // pred_check
          %p404 = pneg %p182
        $region30: #{tpu_custom_call.1} parent=11 // pred_check_branch
          %406 = sbr.rel (%p404) target = $region32
        $region31: #{tpu_custom_call.1} parent=11 // pred_region
          _
        $region32: #{tpu_custom_call.1} parent=11 // pred_fallthru
          _
        // Predicated region
        $region33: #{tpu_custom_call.1} parent=11 // pred_check
          %p407 = pneg %p203
        $region34: #{tpu_custom_call.1} parent=11 // pred_check_branch
          %409 = sbr.rel (%p407) target = $region36
        $region35: #{tpu_custom_call.1} parent=11 // pred_region
          _
        $region36: #{tpu_custom_call.1} parent=11 // pred_fallthru
          _
        // Predicated region
        $region37: #{tpu_custom_call.1} parent=11 // pred_check
          %p410 = pneg %p224
        $region38: #{tpu_custom_call.1} parent=11 // pred_check_branch
          %412 = sbr.rel (%p410) target = $region40
        $region39: #{tpu_custom_call.1} parent=11 // pred_region
          %414 = vsyncadd [#allocation7], 0
          %s415 = sshll.u32 %s8, 4
          %s416 = int_to_ptr.hbm [resolvable:$true] %s415
          %s417 = sshll.u32 [#allocation8], 4
          %s418 = int_to_ptr.vmem [resolvable:$true] %s417
          %423 = dma.hbm_to_vmem [thread:$0]  %s416, 256, %s418, [#allocation7], 64, 64, 4
        $region40: #{tpu_custom_call.1} parent=11 // pred_fallthru
          _
        // Predicated region
        $region41: #{tpu_custom_call.1} parent=11 // pred_check
          %p424 = pneg %p245
        $region42: #{tpu_custom_call.1} parent=11 // pred_check_branch
          %426 = sbr.rel (%p424) target = $region44
        $region43: #{tpu_custom_call.1} parent=11 // pred_region
          _
        $region44: #{tpu_custom_call.1} parent=11 // pred_fallthru
          _
        // Predicated region
        $region45: #{tpu_custom_call.1} parent=11 // pred_check
          %p427 = pneg %p266
        $region46: #{tpu_custom_call.1} parent=11 // pred_check_branch
          %429 = sbr.rel (%p427) target = $region48
        $region47: #{tpu_custom_call.1} parent=11 // pred_region
          _
        $region48: #{tpu_custom_call.1} parent=11 // pred_fallthru
          _
        // Predicated region
        $region49: #{tpu_custom_call.1} parent=11 // pred_check
          %p430 = pneg %p287
        $region50: #{tpu_custom_call.1} parent=11 // pred_check_branch
          %432 = sbr.rel (%p430) target = $region52
        $region51: #{tpu_custom_call.1} parent=11 // pred_region
          _
        $region52: #{tpu_custom_call.1} parent=11 // pred_fallthru
          _
        // Predicated region
        $region53: #{tpu_custom_call.1} parent=11 // pred_check
          %p433 = pneg %p308
        $region54: #{tpu_custom_call.1} parent=11 // pred_check_branch
          %435 = sbr.rel (%p433) target = $region56
        $region55: #{tpu_custom_call.1} parent=11 // pred_region
          _
        $region56: #{tpu_custom_call.1} parent=11 // pred_fallthru
          _
        // Predicated region
        $region57: #{tpu_custom_call.1} parent=11 // pred_check
          %p436 = pneg %p329
        $region58: #{tpu_custom_call.1} parent=11 // pred_check_branch
          %438 = sbr.rel (%p436) target = $region60
        $region59: #{tpu_custom_call.1} parent=11 // pred_region
          _
        $region60: #{tpu_custom_call.1} parent=11 // pred_fallthru
          _
      $region12: #{tpu_custom_call.1} parent=5 // pred_fallthru
        _
      %p439 = scmp.lt.s32.totalorder %s25, 2
      // Predicated region
      $region61: #{tpu_custom_call.1} parent=5 // pred_check
        %p440 = pneg %p439
      $region62: #{tpu_custom_call.1} parent=5 // pred_check_branch
        %442 = sbr.rel (%p440) target = $region64
      $region63: #{tpu_custom_call.1} parent=5 // pred_region
        // Predicated region
        $region65: #{tpu_custom_call.1} parent=63 // pred_check
          %p443 = pneg %p45
        $region66: #{tpu_custom_call.1} parent=63 // pred_check_branch
          %445 = sbr.rel (%p443) target = $region68
        $region67: #{tpu_custom_call.1} parent=63 // pred_region
          %p446 = scmp.lt.s32.totalorder %s25, 1
          %s447 = scalar_select %p446, %s25, 1
          %s448 = scalar_lea.vmem %s0, %s447
        $region68: #{tpu_custom_call.1} parent=63 // pred_fallthru
          _
        // Predicated region
        $region69: #{tpu_custom_call.1} parent=63 // pred_check
          %p449 = pneg %p71
        $region70: #{tpu_custom_call.1} parent=63 // pred_check_branch
          %451 = sbr.rel (%p449) target = $region72
        $region71: #{tpu_custom_call.1} parent=63 // pred_region
          %p452 = scmp.lt.s32.totalorder %s25, 1
          %s453 = scalar_select %p452, %s25, 1
          %s454 = smul.addr %s453, 8
          %s455 = scalar_lea.vmem %s1, %s454
        $region72: #{tpu_custom_call.1} parent=63 // pred_fallthru
          _
      $region64: #{tpu_custom_call.1} parent=5 // pred_fallthru
        _
      %p456 = scmp.le.s32.totalorder 1, %s25
      %p457 = scmp.lt.s32.totalorder %s25, 3
      %p458 = pnand %p456, %p457
      %p459 = pneg %p458
      // Predicated region
      $region73: #{tpu_custom_call.1} parent=5 // pred_check
        _
      $region74: #{tpu_custom_call.1} parent=5 // pred_check_branch
        %461 = sbr.rel (%p458) target = $region76
      $region75: #{tpu_custom_call.1} parent=5 // pred_region
        %s462 = ssub.s32 %s25, 1
        // Predicated region
        $region77: #{tpu_custom_call.1} parent=75 // pred_check
          %p463 = pneg %p140
        $region78: #{tpu_custom_call.1} parent=75 // pred_check_branch
          %465 = sbr.rel (%p463) target = $region80
        $region79: #{tpu_custom_call.1} parent=75 // pred_region
          %467 = dma.done [#allocation4], 256
        $region80: #{tpu_custom_call.1} parent=75 // pred_fallthru
          _
        // Predicated region
        $region81: #{tpu_custom_call.1} parent=75 // pred_check
          %p468 = pneg %p161
        $region82: #{tpu_custom_call.1} parent=75 // pred_check_branch
          %470 = sbr.rel (%p468) target = $region84
        $region83: #{tpu_custom_call.1} parent=75 // pred_region
          %472 = dma.done [#allocation7], 256
        $region84: #{tpu_custom_call.1} parent=75 // pred_fallthru
          _
        // Predicated region
        $region85: #{tpu_custom_call.1} parent=75 // pred_check
          %p473 = pneg %p224
        $region86: #{tpu_custom_call.1} parent=75 // pred_check_branch
          %475 = sbr.rel (%p473) target = $region88
        $region87: #{tpu_custom_call.1} parent=75 // pred_region
          %477 = dma.done [#allocation7], 256
        $region88: #{tpu_custom_call.1} parent=75 // pred_fallthru
          _
        %p478 = scmp.lt.s32.totalorder %s30, 1
        %s479 = scalar_select %p478, %s30, 1
        %s480 = scalar_lea.vmem %s0, %s479
        %p481 = pneg %p51
        %p482 = pneg %p48
        %p483 = scmp.lt.s32.totalorder %s30, 1
        %s484 = scalar_select %p483, %s30, 1
        %s485 = smul.addr %s484, 8
        %s486 = scalar_lea.vmem %s1, %s485
        %p487 = pneg %p77
        %p488 = pneg %p74
        %p489 = pneg %p98
        %p490 = pneg %p95
        %p491 = pneg %p119
        %p492 = pneg %p116
        %p493 = pneg %p140
        %p494 = pneg %p137
        %p495 = pneg %p161
        %p496 = pneg %p158
        %p497 = pneg %p182
        %p498 = pneg %p179
        %p499 = pneg %p203
        %p500 = pneg %p200
        %p501 = pneg %p224
        %p502 = pneg %p221
        %p503 = pneg %p245
        %p504 = pneg %p242
        %p505 = pneg %p266
        %p506 = pneg %p263
        %p507 = pneg %p287
        %p508 = pneg %p284
        %p509 = pneg %p308
        %p510 = pneg %p305
        %p511 = pneg %p329
        %p512 = pneg %p326
        %p513 = pneg %p355
        %p514 = pneg %p352
        %s515 = sand.u32 %s342, 1
        %s516 = scalar_lea.sflag [#allocation5], %s515
        %s517 = sand.u32 %s342, 1
        %s518 = smul.addr %s517, 8
        %s519 = scalar_lea.vmem [#allocation9], %s518
        %p520 = scmp.lt.s32.totalorder %s30, 1
        %s521 = scalar_select %p520, %s30, 1
        %s522 = scalar_lea.vmem %s0, %s521
        %p523 = scmp.lt.s32.totalorder %s30, 1
        %s524 = scalar_select %p523, %s30, 1
        %s525 = smul.addr %s524, 8
        %s526 = scalar_lea.vmem %s1, %s525
        %v528 = vld [vmem:[%s526] sm:$0xff]
        %v529 = vpack.c.bf16 %v528, %v528
        %v530 = vld [vmem:[%s2] sm:$0xf]
        %v531 = vld [vmem:[%s2 + $0x4] sm:$0xf]
        %v532 = vld [vmem:[%s2 + $0x8] sm:$0xf]
        %v533 = vld [vmem:[%s2 + $0xc] sm:$0xf]
        %v538 = vunpack.c.l.b16 %v530
        %v539 = vunpack.c.l.b16 %v531
        %v540 = vunpack.c.l.b16 %v532
        %v541 = vunpack.c.l.b16 %v533
        %v542 = vpack.c.b16 %v539, %v538
        %v543 = vpack.c.b16 %v541, %v540
        %vm546 = vcmask 261120
        %v548 = vsel %vm546, %v529, 0
        %550 = vmatpush.bf16.msra.mxu0 0
        %551 = vmatpush.bf16.msra.mxu0 0
        %552 = vmatpush.bf16.msra.mxu0 0
        %553 = vmatpush.bf16.msra.mxu0 0
        %554 = vmatpush.bf16.msra.mxu0 0
        %555 = vmatpush.bf16.msra.mxu0 0
        %556 = vmatpush.bf16.msra.mxu0 %v543
        %557 = vmatpush.bf16.msra.mxu0 %v542
        %558 = vmatmul.bf16.gmra.mxu0 %v548
        %v559 = vpop.f32.mrf.mxu0
        %v560 = vadd.f32 0.0, %v559
        %v561 = vpop.f32.mrf.mxu0
        %562 = vdwg.mxu0
        %v563 = vld [vmem:[%s3] sm:$0xf]
        %v564 = vld [vmem:[%s3 + $0x4] sm:$0xf]
        %v565 = vld [vmem:[%s3 + $0x8] sm:$0xf]
        %v566 = vld [vmem:[%s3 + $0xc] sm:$0xf]
        %v571 = vunpack.c.l.b16 %v563
        %v572 = vunpack.c.l.b16 %v564
        %v573 = vunpack.c.l.b16 %v565
        %v574 = vunpack.c.l.b16 %v566
        %v575 = vpack.c.b16 %v572, %v571
        %v576 = vpack.c.b16 %v574, %v573
        %579 = vmatpush.bf16.msra.mxu0 0
        %580 = vmatpush.bf16.msra.mxu0 0
        %581 = vmatpush.bf16.msra.mxu0 0
        %582 = vmatpush.bf16.msra.mxu0 0
        %583 = vmatpush.bf16.msra.mxu0 0
        %584 = vmatpush.bf16.msra.mxu0 0
        %585 = vmatpush.bf16.msra.mxu0 %v576
        %586 = vmatpush.bf16.msra.mxu0 %v575
        %587 = vmatmul.bf16.gmra.mxu0 %v548
        %v588 = vpop.f32.mrf.mxu0
        %v589 = vadd.f32 0.0, %v588
        %v590 = vpop.f32.mrf.mxu0
        %591 = vdwg.mxu0
        %v592 = vld [vmem:[#allocation3] sm:$0xf]
        %v593 = vld [vmem:[#allocation3 + $0x4] sm:$0xf]
        %v594 = vld [vmem:[#allocation3 + $0x8] sm:$0xf]
        %v595 = vld [vmem:[#allocation3 + $0xc] sm:$0xf]
        %v600 = vunpack.c.l.b16 %v592
        %v601 = vunpack.c.l.b16 %v593
        %v602 = vunpack.c.l.b16 %v594
        %v603 = vunpack.c.l.b16 %v595
        %v604 = vpack.c.b16 %v601, %v600
        %v605 = vpack.c.b16 %v603, %v602
        %608 = vmatpush.bf16.msra.mxu0 0
        %609 = vmatpush.bf16.msra.mxu0 0
        %610 = vmatpush.bf16.msra.mxu0 0
        %611 = vmatpush.bf16.msra.mxu0 0
        %612 = vmatpush.bf16.msra.mxu0 0
        %613 = vmatpush.bf16.msra.mxu0 0
        %614 = vmatpush.bf16.msra.mxu0 %v605
        %615 = vmatpush.bf16.msra.mxu0 %v604
        %616 = vmatmul.bf16.gmra.mxu0 %v548
        %v617 = vpop.f32.mrf.mxu0
        %v618 = vadd.f32 0.0, %v617
        %v619 = vpop.f32.mrf.mxu0
        %620 = vdwg.mxu0
        %v621 = vlaneseq
        %v622 = vand.u32 %v621, 127
        %v623 = vld [vmem:[%s522] sm:$0x1]
        %624 = vset.pattern.permute.xlu0 0
        %625 = vperm.xlu0 %624, %v623
        %v626 = vpop.permute.xlu0 %625
        %v627 = vperm.slane %v626, 0
        %vm628 = vcmp.lt.s32.totalorder %v622, %v627
        %v629 = vsel %vm628, 0.0, -1000000.0
        %v630 = vpack.c.bf16 %v560, %v560
        %v631 = vpack.c.bf16 %v589, %v589
        %v632 = vpack.c.bf16 %v618, %v618
        %vm633 = vcmask 64512
        %v635 = vsel %vm633, %v630, 0
        %v638 = vsel %vm633, %v631, 0
        %640 = vmatpush.bf16.xpose.msra.mxu0 0
        %641 = vmatpush.bf16.xpose.msra.mxu0 0
        %642 = vmatpush.bf16.xpose.msra.mxu0 0
        %643 = vmatpush.bf16.xpose.msra.mxu0 0
        %644 = vmatpush.bf16.xpose.msra.mxu0 0
        %645 = vmatpush.bf16.xpose.msra.mxu0 0
        %646 = vmatpush.bf16.xpose.msra.mxu0 0
        %647 = vmatpush.bf16.xpose.msra.mxu0 %v638
        %648 = vmatmul.bf16.gmra.mxu0 %v635
        %v649 = vpop.f32.mrf.mxu0
        %v650 = vadd.f32 %v629, %v649
        %v651 = vpop.f32.mrf.mxu0
        %652 = vdwg.mxu0
        %v653 = vsel %vm633, %v650, -inf
        %654 = vmax.xlane.f32.xlu0 %v653
        %v655 = vpop.xlane.xlu0 %654
        %v656 = vsub.f32 %v650, %v655
        %v657 = vmul.f32 %v656, 1.442695
        %v658 = vpow.pop %v657
        %v659 = vsel %vm633, %v658, 0.0
        %660 = vadd.xlane.f32.xlu0 %v659
        %v661 = vpop.xlane.xlu0 %660
        %v662 = vrcp.pop %v661
        %v663 = vmul.f32 %v658, %v662
        %v664 = vpack.c.bf16 %v663, %v663
        %v666 = vsel %vm633, %v664, 0
        %vm668 = vcmask 1043456
        %v670 = vsel %vm668, %v632, 0
        %672 = vmatpush.bf16.msra.mxu0 0
        %673 = vmatpush.bf16.msra.mxu0 0
        %674 = vmatpush.bf16.msra.mxu0 0
        %675 = vmatpush.bf16.msra.mxu0 0
        %676 = vmatpush.bf16.msra.mxu0 0
        %677 = vmatpush.bf16.msra.mxu0 0
        %678 = vmatpush.bf16.msra.mxu0 0
        %679 = vmatpush.bf16.msra.mxu0 %v670
        %680 = vmatmul.bf16.gmra.mxu0 %v666
        %v681 = vpop.f32.mrf.mxu0
        %v682 = vadd.f32 0.0, %v681
        %v683 = vpop.f32.mrf.mxu0
        %684 = vdwg.mxu0
        %v685 = vpack.c.bf16 %v682, %v682
        %vm686 = vcmask 60416
        %687 = vst.msk [vmem:[#allocation2] sm:$0xf] %vm686, %v685
        %v689 = vunpack.c.l.b16 %v630
        %v690 = vpack.c.b16 %v689, %v689
        %691 = vrot.lane.b32.xlu0 %v690, 120
        %v692 = vpop.permute.xlu0 %691
        %v694 = vunpack.c.l.b16 %v631
        %v695 = vpack.c.b16 %v694, %v694
        %696 = vrot.lane.b32.xlu0 %v695, 120
        %v697 = vpop.permute.xlu0 %696
        %v699 = vsel %vm633, %v692, 0
        %v702 = vsel %vm633, %v697, 0
        %704 = vmatpush.bf16.xpose.msra.mxu0 0
        %705 = vmatpush.bf16.xpose.msra.mxu0 0
        %706 = vmatpush.bf16.xpose.msra.mxu0 0
        %707 = vmatpush.bf16.xpose.msra.mxu0 0
        %708 = vmatpush.bf16.xpose.msra.mxu0 0
        %709 = vmatpush.bf16.xpose.msra.mxu0 0
        %710 = vmatpush.bf16.xpose.msra.mxu0 0
        %711 = vmatpush.bf16.xpose.msra.mxu0 %v702
        %712 = vmatmul.bf16.gmra.mxu0 %v699
        %v713 = vpop.f32.mrf.mxu0
        %v714 = vadd.f32 %v629, %v713
        %v715 = vpop.f32.mrf.mxu0
        %716 = vdwg.mxu0
        %v717 = vsel %vm633, %v714, -inf
        %718 = vmax.xlane.f32.xlu0 %v717
        %v719 = vpop.xlane.xlu0 %718
        %v720 = vsub.f32 %v714, %v719
        %v721 = vmul.f32 %v720, 1.442695
        %v722 = vpow.pop %v721
        %v723 = vsel %vm633, %v722, 0.0
        %724 = vadd.xlane.f32.xlu0 %v723
        %v725 = vpop.xlane.xlu0 %724
        %v726 = vrcp.pop %v725
        %v727 = vmul.f32 %v722, %v726
        %v728 = vpack.c.bf16 %v727, %v727
        %v730 = vunpack.c.l.b16 %v632
        %v731 = vpack.c.b16 %v730, %v730
        %732 = vrot.lane.b32.xlu0 %v731, 120
        %v733 = vpop.permute.xlu0 %732
        %v735 = vsel %vm633, %v728, 0
        %v738 = vsel %vm668, %v733, 0
        %740 = vmatpush.bf16.msra.mxu0 0
        %741 = vmatpush.bf16.msra.mxu0 0
        %742 = vmatpush.bf16.msra.mxu0 0
        %743 = vmatpush.bf16.msra.mxu0 0
        %744 = vmatpush.bf16.msra.mxu0 0
        %745 = vmatpush.bf16.msra.mxu0 0
        %746 = vmatpush.bf16.msra.mxu0 0
        %747 = vmatpush.bf16.msra.mxu0 %v738
        %748 = vmatmul.bf16.gmra.mxu0 %v735
        %v749 = vpop.f32.mrf.mxu0
        %v750 = vadd.f32 0.0, %v749
        %v751 = vpop.f32.mrf.mxu0
        %752 = vdwg.mxu0
        %v753 = vpack.c.bf16 %v750, %v750
        %755 = vrot.lane.b32.xlu0 %v753, 8
        %v756 = vpop.permute.xlu0 %755
        %vm758 = vcmask 126016
        %759 = vst.msk [vmem:[#allocation2] sm:$0xf] %vm758, %v756
        %760 = vrot.lane.b32.xlu0 %v690, 112
        %v761 = vpop.permute.xlu0 %760
        %762 = vrot.lane.b32.xlu0 %v695, 112
        %v763 = vpop.permute.xlu0 %762
        %v765 = vsel %vm633, %v761, 0
        %v768 = vsel %vm633, %v763, 0
        %770 = vmatpush.bf16.xpose.msra.mxu0 0
        %771 = vmatpush.bf16.xpose.msra.mxu0 0
        %772 = vmatpush.bf16.xpose.msra.mxu0 0
        %773 = vmatpush.bf16.xpose.msra.mxu0 0
        %774 = vmatpush.bf16.xpose.msra.mxu0 0
        %775 = vmatpush.bf16.xpose.msra.mxu0 0
        %776 = vmatpush.bf16.xpose.msra.mxu0 0
        %777 = vmatpush.bf16.xpose.msra.mxu0 %v768
        %778 = vmatmul.bf16.gmra.mxu0 %v765
        %v779 = vpop.f32.mrf.mxu0
        %v780 = vadd.f32 %v629, %v779
        %v781 = vpop.f32.mrf.mxu0
        %782 = vdwg.mxu0
        %v783 = vsel %vm633, %v780, -inf
        %784 = vmax.xlane.f32.xlu0 %v783
        %v785 = vpop.xlane.xlu0 %784
        %v786 = vsub.f32 %v780, %v785
        %v787 = vmul.f32 %v786, 1.442695
        %v788 = vpow.pop %v787
        %v789 = vsel %vm633, %v788, 0.0
        %790 = vadd.xlane.f32.xlu0 %v789
        %v791 = vpop.xlane.xlu0 %790
        %v792 = vrcp.pop %v791
        %v793 = vmul.f32 %v788, %v792
        %v794 = vpack.c.bf16 %v793, %v793
        %795 = vrot.lane.b32.xlu0 %v731, 112
        %v796 = vpop.permute.xlu0 %795
        %v798 = vsel %vm633, %v794, 0
        %v801 = vsel %vm668, %v796, 0
        %803 = vmatpush.bf16.msra.mxu0 0
        %804 = vmatpush.bf16.msra.mxu0 0
        %805 = vmatpush.bf16.msra.mxu0 0
        %806 = vmatpush.bf16.msra.mxu0 0
        %807 = vmatpush.bf16.msra.mxu0 0
        %808 = vmatpush.bf16.msra.mxu0 0
        %809 = vmatpush.bf16.msra.mxu0 0
        %810 = vmatpush.bf16.msra.mxu0 %v801
        %811 = vmatmul.bf16.gmra.mxu0 %v798
        %v812 = vpop.f32.mrf.mxu0
        %v813 = vadd.f32 0.0, %v812
        %v814 = vpop.f32.mrf.mxu0
        %815 = vdwg.mxu0
        %v816 = vpack.c.bf16 %v813, %v813
        %818 = vrot.lane.b32.xlu0 %v816, 16
        %v819 = vpop.permute.xlu0 %818
        %vm821 = vcmask 191616
        %822 = vst.msk [vmem:[#allocation2] sm:$0xf] %vm821, %v819
        %823 = vrot.lane.b32.xlu0 %v690, 104
        %v824 = vpop.permute.xlu0 %823
        %825 = vrot.lane.b32.xlu0 %v695, 104
        %v826 = vpop.permute.xlu0 %825
        %v828 = vsel %vm633, %v824, 0
        %v831 = vsel %vm633, %v826, 0
        %833 = vmatpush.bf16.xpose.msra.mxu0 0
        %834 = vmatpush.bf16.xpose.msra.mxu0 0
        %835 = vmatpush.bf16.xpose.msra.mxu0 0
        %836 = vmatpush.bf16.xpose.msra.mxu0 0
        %837 = vmatpush.bf16.xpose.msra.mxu0 0
        %838 = vmatpush.bf16.xpose.msra.mxu0 0
        %839 = vmatpush.bf16.xpose.msra.mxu0 0
        %840 = vmatpush.bf16.xpose.msra.mxu0 %v831
        %841 = vmatmul.bf16.gmra.mxu0 %v828
        %v842 = vpop.f32.mrf.mxu0
        %v843 = vadd.f32 %v629, %v842
        %v844 = vpop.f32.mrf.mxu0
        %845 = vdwg.mxu0
        %v846 = vsel %vm633, %v843, -inf
        %847 = vmax.xlane.f32.xlu0 %v846
        %v848 = vpop.xlane.xlu0 %847
        %v849 = vsub.f32 %v843, %v848
        %v850 = vmul.f32 %v849, 1.442695
        %v851 = vpow.pop %v850
        %v852 = vsel %vm633, %v851, 0.0
        %853 = vadd.xlane.f32.xlu0 %v852
        %v854 = vpop.xlane.xlu0 %853
        %v855 = vrcp.pop %v854
        %v856 = vmul.f32 %v851, %v855
        %v857 = vpack.c.bf16 %v856, %v856
        %858 = vrot.lane.b32.xlu0 %v731, 104
        %v859 = vpop.permute.xlu0 %858
        %v861 = vsel %vm633, %v857, 0
        %v864 = vsel %vm668, %v859, 0
        %866 = vmatpush.bf16.msra.mxu0 0
        %867 = vmatpush.bf16.msra.mxu0 0
        %868 = vmatpush.bf16.msra.mxu0 0
        %869 = vmatpush.bf16.msra.mxu0 0
        %870 = vmatpush.bf16.msra.mxu0 0
        %871 = vmatpush.bf16.msra.mxu0 0
        %872 = vmatpush.bf16.msra.mxu0 0
        %873 = vmatpush.bf16.msra.mxu0 %v864
        %874 = vmatmul.bf16.gmra.mxu0 %v861
        %v875 = vpop.f32.mrf.mxu0
        %v876 = vadd.f32 0.0, %v875
        %v877 = vpop.f32.mrf.mxu0
        %878 = vdwg.mxu0
        %v879 = vpack.c.bf16 %v876, %v876
        %881 = vrot.lane.b32.xlu0 %v879, 24
        %v882 = vpop.permute.xlu0 %881
        %vm884 = vcmask 257216
        %885 = vst.msk [vmem:[#allocation2] sm:$0xf] %vm884, %v882
        %v886 = vld [vmem:[#allocation2] sm:$0xf]
        %v887 = vld [vmem:[#allocation6] sm:$0xf]
        %v888 = vld [vmem:[#allocation6 + $0x4] sm:$0xf]
        %v889 = vld [vmem:[#allocation6 + $0x8] sm:$0xf]
        %v890 = vld [vmem:[#allocation6 + $0xc] sm:$0xf]
        %v895 = vunpack.c.l.b16 %v887
        %v896 = vunpack.c.l.b16 %v888
        %v897 = vunpack.c.l.b16 %v889
        %v898 = vunpack.c.l.b16 %v890
        %v899 = vpack.c.b16 %v896, %v895
        %v900 = vpack.c.b16 %v898, %v897
        %v904 = vsel %vm546, %v886, 0
        %906 = vmatpush.bf16.msra.mxu0 0
        %907 = vmatpush.bf16.msra.mxu0 0
        %908 = vmatpush.bf16.msra.mxu0 0
        %909 = vmatpush.bf16.msra.mxu0 0
        %910 = vmatpush.bf16.msra.mxu0 0
        %911 = vmatpush.bf16.msra.mxu0 0
        %912 = vmatpush.bf16.msra.mxu0 %v900
        %913 = vmatpush.bf16.msra.mxu0 %v899
        %914 = vmatmul.bf16.gmra.mxu0 %v904
        %v915 = vpop.f32.mrf.mxu0
        %v916 = vadd.f32 %v528, %v915
        %v917 = vpop.f32.mrf.mxu0
        %918 = vdwg.mxu0
        %v919 = vld [vmem:[%s6] sm:$0x1]
        %v920 = vld [vmem:[%s7] sm:$0x1]
        %v921 = vsel %vm546, %v916, 0.0
        %922 = vadd.xlane.f32.xlu0 %v921
        %v923 = vpop.xlane.xlu0 %922
        %v924 = vrcp.pop 32.0
        %v925 = vmul.f32 32.0, %v924
        %v926 = vsub.f32 1.0, %v925
        %v927 = vmul.f32 %v924, %v926
        %v928 = vadd.f32 %v924, %v927
        %vm929 = vweird.f32 %v924
        %v930 = vsel %vm929, %v924, %v928
        %v931 = vmul.f32 %v923, %v930
        %v932 = vsub.f32 %v916, %v931
        %v933 = vmul.f32 %v932, %v932
        %v934 = vsel %vm546, %v933, 0.0
        %935 = vadd.xlane.f32.xlu0 %v934
        %v936 = vpop.xlane.xlu0 %935
        %v937 = vmul.f32 %v936, %v930
        %v938 = vadd.f32 %v937, 1e-05
        %v939 = vrsqrt.pop %v938
        %v940 = vmul.f32 %v939, %v938
        %v941 = vmul.f32 %v940, %v939
        %v942 = vmul.f32 0.5, %v941
        %v943 = vsub.f32 1.5, %v942
        %v944 = vmul.f32 %v939, %v943
        %vm945 = vweird.f32 %v938
        %vm946 = vweird.f32 %v939
        %vm947 = vmor %vm945, %vm946
        %v948 = vsel %vm947, %v939, %v944
        %v949 = vmul.f32 %v932, %v948
        %v951 = vperm.slane %v919, 0
        %v953 = vmul.f32 %v949, %v951
        %v955 = vperm.slane %v920, 0
        %v957 = vadd.f32 %v953, %v955
        %v958 = vpack.c.bf16 %v957, %v957
        %v959 = vld [vmem:[#allocation8] sm:$0xf]
        %v960 = vld [vmem:[#allocation8 + $0x4] sm:$0xf]
        %v961 = vld [vmem:[#allocation8 + $0x8] sm:$0xf]
        %v962 = vld [vmem:[#allocation8 + $0xc] sm:$0xf]
        %v963 = vld [vmem:[%s9] sm:$0x1]
        %v965 = vperm.slane %v963, 0
        %v971 = vunpack.c.l.b16 %v959
        %v972 = vunpack.c.l.b16 %v960
        %v973 = vunpack.c.l.b16 %v961
        %v974 = vunpack.c.l.b16 %v962
        %v975 = vpack.c.b16 %v972, %v971
        %v976 = vpack.c.b16 %v974, %v973
        %v980 = vsel %vm546, %v958, 0
        %982 = vmatpush.bf16.msra.mxu0 0
        %983 = vmatpush.bf16.msra.mxu0 0
        %984 = vmatpush.bf16.msra.mxu0 0
        %985 = vmatpush.bf16.msra.mxu0 0
        %986 = vmatpush.bf16.msra.mxu0 0
        %987 = vmatpush.bf16.msra.mxu0 0
        %988 = vmatpush.bf16.msra.mxu0 %v976
        %989 = vmatpush.bf16.msra.mxu0 %v975
        %990 = vmatmul.bf16.gmra.mxu0 %v980
        %v991 = vpop.f32.mrf.mxu0
        %v992 = vadd.f32 %v965, %v991
        %v993 = vpop.f32.mrf.mxu0
        %994 = vdwg.mxu0
        %v995 = vmax.f32 %v992, 0.0
        %v996 = vpack.c.bf16 %v995, %v995
        %v997 = vld [vmem:[%s10] sm:$0xf]
        %v998 = vld [vmem:[%s10 + $0x4] sm:$0xf]
        %v999 = vld [vmem:[%s10 + $0x8] sm:$0xf]
        %v1000 = vld [vmem:[%s10 + $0xc] sm:$0xf]
        %v1001 = vld [vmem:[%s10 + $0x10] sm:$0xf]
        %v1002 = vld [vmem:[%s10 + $0x14] sm:$0xf]
        %v1003 = vld [vmem:[%s10 + $0x18] sm:$0xf]
        %v1004 = vld [vmem:[%s10 + $0x1c] sm:$0xf]
        %v1005 = vld [vmem:[%s11] sm:$0x1]
        %v1007 = vperm.slane %v1005, 0
        %v1017 = vunpack.c.l.b16 %v997
        %v1018 = vunpack.c.l.b16 %v998
        %v1019 = vunpack.c.l.b16 %v999
        %v1020 = vunpack.c.l.b16 %v1000
        %v1021 = vunpack.c.l.b16 %v1001
        %v1022 = vunpack.c.l.b16 %v1002
        %v1023 = vunpack.c.l.b16 %v1003
        %v1024 = vunpack.c.l.b16 %v1004
        %v1025 = vpack.c.b16 %v1018, %v1017
        %v1026 = vpack.c.b16 %v1020, %v1019
        %v1027 = vpack.c.b16 %v1022, %v1021
        %v1028 = vpack.c.b16 %v1024, %v1023
        %vm1033 = vcmask 523264
        %v1035 = vsel %vm1033, %v996, 0
        %1037 = vmatpush.bf16.msra.mxu0 0
        %1038 = vmatpush.bf16.msra.mxu0 0
        %1039 = vmatpush.bf16.msra.mxu0 0
        %1040 = vmatpush.bf16.msra.mxu0 0
        %1041 = vmatpush.bf16.msra.mxu0 %v1028
        %1042 = vmatpush.bf16.msra.mxu0 %v1027
        %1043 = vmatpush.bf16.msra.mxu0 %v1026
        %1044 = vmatpush.bf16.msra.mxu0 %v1025
        %1045 = vmatmul.bf16.gmra.mxu0 %v1035
        %v1046 = vpop.f32.mrf.mxu0
        %v1047 = vadd.f32 %v1007, %v1046
        %v1048 = vpop.f32.mrf.mxu0
        %1049 = vdwg.mxu0
        %v1050 = vadd.f32 %v1047, %v957
        %v1051 = vld [vmem:[%s12] sm:$0x1]
        %v1052 = vld [vmem:[%s13] sm:$0x1]
        %v1053 = vsel %vm546, %v1050, 0.0
        %1054 = vadd.xlane.f32.xlu0 %v1053
        %v1055 = vpop.xlane.xlu0 %1054
        %v1056 = vmul.f32 %v1055, %v930
        %v1057 = vsub.f32 %v1050, %v1056
        %v1058 = vmul.f32 %v1057, %v1057
        %v1059 = vsel %vm546, %v1058, 0.0
        %1060 = vadd.xlane.f32.xlu0 %v1059
        %v1061 = vpop.xlane.xlu0 %1060
        %v1062 = vmul.f32 %v1061, %v930
        %v1063 = vadd.f32 %v1062, 1e-05
        %v1064 = vrsqrt.pop %v1063
        %v1065 = vmul.f32 %v1064, %v1063
        %v1066 = vmul.f32 %v1065, %v1064
        %v1067 = vmul.f32 0.5, %v1066
        %v1068 = vsub.f32 1.5, %v1067
        %v1069 = vmul.f32 %v1064, %v1068
        %vm1070 = vweird.f32 %v1063
        %vm1071 = vweird.f32 %v1064
        %vm1072 = vmor %vm1070, %vm1071
        %v1073 = vsel %vm1072, %v1064, %v1069
        %v1074 = vmul.f32 %v1057, %v1073
        %v1076 = vperm.slane %v1051, 0
        %v1078 = vmul.f32 %v1074, %v1076
        %v1080 = vperm.slane %v1052, 0
        %v1082 = vadd.f32 %v1078, %v1080
        %1083 = vst.msk [vmem:[%s519] sm:$0xff] %vm546, %v1082
        %s1084 = sand.u32 %s342, 1
        %s1085 = scalar_lea.sflag [#allocation5], %s1084
        %s1086 = sand.u32 %s342, 1
        %s1087 = smul.addr %s1086, 8
        %s1088 = scalar_lea.vmem [#allocation9], %s1087
        // Predicated region
        $region89: #{tpu_custom_call.1} parent=75 // pred_check
          %p1089 = pneg %p352
        $region90: #{tpu_custom_call.1} parent=75 // pred_check_branch
          %1091 = sbr.rel (%p1089) target = $region92
        $region91: #{tpu_custom_call.1} parent=75 // pred_region
          %1093 = vsyncadd %s1085, 0
          %s1094 = smul.addr %s30, 8
          %s1095 = scalar_lea.hbm %s14, %s1094
          %s1097 = sshll.u32 %s1088, 4
          %s1098 = int_to_ptr.vmem [resolvable:$true] %s1097
          %s1099 = sshll.u32 %s1095, 4
          %s1100 = int_to_ptr.hbm [resolvable:$true] %s1099
          %1102 = dma.vmem_to_hbm [thread:$0]  %s1098, 128, %s1100, %s1085
        $region92: #{tpu_custom_call.1} parent=75 // pred_fallthru
          _
      $region76: #{tpu_custom_call.1} parent=5 // pred_fallthru
        _
      %p1103 = scmp.le.s32.totalorder 2, %s25
      // Predicated region
      $region93: #{tpu_custom_call.1} parent=5 // pred_check
        %p1104 = pneg %p1103
      $region94: #{tpu_custom_call.1} parent=5 // pred_check_branch
        %1106 = sbr.rel (%p1104) target = $region96
      $region95: #{tpu_custom_call.1} parent=5 // pred_region
        %s1107 = ssub.s32 %s25, 2
        // Predicated region
        $region97: #{tpu_custom_call.1} parent=95 // pred_check
          %p1108 = pneg %p358
        $region98: #{tpu_custom_call.1} parent=95 // pred_check_branch
          %1110 = sbr.rel (%p1108) target = $region100
        $region99: #{tpu_custom_call.1} parent=95 // pred_region
          %s1111 = sand.u32 %s343, 1
          %s1112 = scalar_lea.sflag [#allocation5], %s1111
          %s1113 = sand.u32 %s343, 1
          %s1114 = smul.addr %s1113, 8
          %s1115 = scalar_lea.vmem [#allocation9], %s1114
          %1117 = dma.done %s1112, 128
        $region100: #{tpu_custom_call.1} parent=95 // pred_fallthru
          _
      $region96: #{tpu_custom_call.1} parent=5 // pred_fallthru
        _
    $region6: #{tpu_custom_call.1} parent=1 // loop_footer
      %s29 = sadd.s32 1, %s25
    $region7: #{tpu_custom_call.1} parent=1 // loop_footer_branch
      %24 = sbr.rel target = $region3
    $region8: #{tpu_custom_call.1} parent=1 // loop_exit
      _
    %1118 = vsyncpa [#allocation4], 1
    %s1119 = scalar_lea.sflag [#allocation4], 1
    %1120 = vsyncpa %s1119, 1
    %1121 = vsyncpa [#allocation7], 1
    %1122 = vsyncpa [#allocation5], 1
    %s1123 = scalar_lea.sflag [#allocation5], 1
    %1124 = vsyncpa %s1123, 1

</llo_original>
